<compile_context>
chip_gen: v5e
topology: v5e:2x2
jax: 0.10.0
libtpu: 0.0.40
codegen_flags: <defaults>
</compile_context>

<pallas_src>
import functools

import jax
import jax.numpy as jnp
from jax import lax
from jax.experimental import pallas as pl
from jax.experimental.pallas import tpu as pltpu


# Architecture constants from the PyTorch module.
K1, S1 = 8, 8        # conv1 kernel / stride (non-overlapping)
K2, S2 = 4, 2        # conv2 kernel / stride (overlapping, kernel = 2*stride)
N_K1, N_K2 = 16, 32
D_L1 = 256
LANE = 128


def conv_dims(h_in, w_in, k, stride):
    return (h_in - k[0]) // stride[0] + 1, (w_in - k[1]) // stride[1] + 1


# ----------------------------------------------------------------------------
# Fused Pallas kernel: conv1 + conv2 + fc1 + fc2 (biases + ReLUs included).
# ----------------------------------------------------------------------------
def _net_fused_kernel(p1_ref, w1_ref, b1_ref, w2_ref, b2_ref,
                      w3_ref, b3_ref, w4_ref, b4_ref, out_ref,
                      *, n_batch, n_pos):
    f32 = jnp.float32

    # Conv1 (+bias+ReLU) as one superpatch matmul:
    #   (n_pos*n_batch, C*32*32) @ (C*32*32, 4*4*16)
    z = jnp.dot(p1_ref[...], w1_ref[...], preferred_element_type=f32)
    z = jnp.maximum(z + b1_ref[...], 0.0)

    # Conv2 (+bias+ReLU): every row of z is already a full 4x4x16 conv2 patch.
    y2 = jnp.dot(z.astype(w2_ref.dtype), w2_ref[...],
                 preferred_element_type=f32)
    y2 = jnp.maximum(y2 + b2_ref[...], 0.0)        # rows ordered (oh, ow, n)

    # FC1 (+bias+ReLU), decomposed over the n_pos conv2 positions so no
    # in-kernel reshape/transpose is needed (flatten perm folded into w3).
    n_c2 = w2_ref.shape[1]
    acc = jnp.zeros((n_batch, w3_ref.shape[1]), f32)
    for pos in range(n_pos):                        # static unroll (16)
        rows = y2[pos * n_batch:(pos + 1) * n_batch, :]
        wblk = w3_ref[pos * n_c2:(pos + 1) * n_c2, :]
        acc = acc + jnp.dot(rows.astype(w3_ref.dtype), wblk,
                            preferred_element_type=f32)
    y3 = jnp.maximum(acc + b3_ref[...], 0.0)

    # FC2, lane-dense (zero-padded to 128 output columns).
    out = jnp.dot(y3.astype(w4_ref.dtype), w4_ref[...],
                  preferred_element_type=f32) + b4_ref[...]
    out_ref[...] = out.astype(out_ref.dtype)


def _vmem_full(shape):
    assert len(shape) == 2
    return pl.BlockSpec(shape, lambda i: (0, 0))


# ----------------------------------------------------------------------------
# One-time weight packing (outside the per-forward hot path).
# ----------------------------------------------------------------------------
def pack_params(params, H, W, *, use_bf16=False):
    c1_w, c1_b = params["c1_w"], params["c1_b"]   # (16, C, 8, 8), (16,)
    c2_w, c2_b = params["c2_w"], params["c2_b"]   # (32, 16, 4, 4), (32,)
    l1_w, l1_b = params["l1_w"], params["l1_b"]   # (256, flat), (256,)
    l2_w, l2_b = params["l2_w"], params["l2_b"]   # (D_out, 256), (D_out,)
    n_k1, C = c1_w.shape[0], c1_w.shape[1]
    n_k2 = c2_w.shape[0]
    d_l1, d_out = l1_w.shape[0], l2_w.shape[0]
    H1, W1 = conv_dims(H, W, (K1, K1), (S1, S1))
    H2, W2 = conv_dims(H1, W1, (K2, K2), (S2, S2))
    sp_px = K2 * K1                                # 32 px superpatch edge

    # Conv1 -> block-sparse "superpatch" weight.  Rows (ci, lh, lw) over one
    # 32x32 input patch; cols (dh, dw, k) = the 4x4 grid of conv1 outputs
    # inside one conv2 receptive field.
    w1_hwk = jnp.transpose(c1_w, (1, 2, 3, 0))     # (C, 8, 8, 16)
    w1_big = jnp.zeros((C, sp_px, sp_px, K2, K2, n_k1), jnp.float32)
    for dh in range(K2):
        for dw in range(K2):
            w1_big = w1_big.at[:, dh * K1:(dh + 1) * K1,
                               dw * K1:(dw + 1) * K1, dh, dw, :].set(w1_hwk)
    w1_big = w1_big.reshape(C * sp_px * sp_px, K2 * K2 * n_k1)
    b1_big = jnp.tile(c1_b, K2 * K2).reshape(1, K2 * K2 * n_k1)

    # Conv2 weight: rows (kh, kw, c_in) match the (dh, dw, k) columns above.
    w2 = jnp.transpose(c2_w, (2, 3, 1, 0)).reshape(K2 * K2 * n_k1, n_k2)
    b2 = c2_b.reshape(1, n_k2)

    # FC1: fold the NCHW flatten permutation of the conv2 output into the
    # weight rows -> rows ordered (oh, ow, c) == the kernel's y2 row blocks.
    w3 = l1_w.T.reshape(n_k2, H2, W2, d_l1).transpose(1, 2, 0, 3)
    w3 = w3.reshape(H2 * W2 * n_k2, d_l1)
    b3 = l1_b.reshape(1, d_l1)

    # FC2: pre-transpose and zero-pad to a lane-dense 128-wide output.
    d_pad = max(LANE, ((d_out + LANE - 1) // LANE) * LANE)
    w4 = jnp.zeros((d_l1, d_pad), jnp.float32).at[:, :d_out].set(l2_w.T)
    b4 = jnp.zeros((1, d_pad), jnp.float32).at[:, :d_out].set(l2_b)

    wdt = jnp.bfloat16 if use_bf16 else jnp.float32
    return {
        "w1": w1_big.astype(wdt), "b1": b1_big,
        "w2": w2.astype(wdt),     "b2": b2,
        "w3": w3.astype(wdt),     "b3": b3,
        "w4": w4.astype(wdt),     "b4": b4,
    }


# ----------------------------------------------------------------------------
# Forward pass (wrapper = pure data-movement glue + one pallas_call).
# ----------------------------------------------------------------------------
def net_forward(X, packed, d_out):
    """X: (N, C, H, W) float32 NCHW."""
    N, C, H, W = X.shape
    H1, W1 = conv_dims(H, W, (K1, K1), (S1, S1))
    H2, W2 = conv_dims(H1, W1, (K2, K2), (S2, S2))
    sp_px = K2 * K1                   # 32: superpatch edge (input pixels)
    tile = S2 * K1                    # 16: superpatch stride (input pixels)
    th, tw = H2 + 1, W2 + 1           # number of 16px tiles actually used

    # Non-overlapping 16x16 tile view, then assemble one 32x32 superpatch per
    # conv2 output position from 2x2 neighbouring tiles (3 concats, no loops).
    Xc = X[:, :, :tile * th, :tile * tw]
    Xt = Xc.reshape(N, C, th, tile, tw, tile).transpose(2, 4, 0, 1, 3, 5)
    top = jnp.concatenate([Xt[0:H2, 0:W2], Xt[0:H2, 1:W2 + 1]], axis=-1)
    bot = jnp.concatenate([Xt[1:H2 + 1, 0:W2], Xt[1:H2 + 1, 1:W2 + 1]], axis=-1)
    sp = jnp.concatenate([top, bot], axis=-2)       # (H2, W2, N, C, 32, 32)
    p1 = sp.reshape(H2 * W2 * N, C * sp_px * sp_px)
    p1 = p1.astype(packed["w1"].dtype)

    d_pad = packed["w4"].shape[1]
    kernel = functools.partial(_net_fused_kernel, n_batch=N, n_pos=H2 * W2)
    args = (p1, packed["w1"], packed["b1"], packed["w2"], packed["b2"],
            packed["w3"], packed["b3"], packed["w4"], packed["b4"])

    # Everything fits in VMEM -> single grid step, whole-array blocks.
    # (For large batches, tile/grid the row dim of p1/out with "parallel"
    #  semantics instead so v7x's two TensorCores split the rows.)
    out = pl.pallas_call(
        kernel,
        out_shape=jax.ShapeDtypeStruct((N, d_pad), jnp.float32),
        grid=(1,),
        in_specs=[_vmem_full(a.shape) for a in args],
        out_specs=_vmem_full((N, d_pad)),
        compiler_params=pltpu.CompilerParams(
            dimension_semantics=("arbitrary",),
            vmem_limit_bytes=32 * 1024 * 1024),
    )(*args)
    return out[:, :d_out]


# ----------------------------------------------------------------------------
# Pure-JAX reference (for correctness check)
# ----------------------------------------------------------------------------
def reference_forward(X, params):
    dn = ("NCHW", "OIHW", "NCHW")
    y = lax.conv_general_dilated(X, params["c1_w"], (S1, S1), "VALID",
                                 dimension_numbers=dn)
    y = jnp.maximum(y + params["c1_b"][None, :, None, None], 0.0)
    y = lax.conv_general_dilated(y, params["c2_w"], (S2, S2), "VALID",
                                 dimension_numbers=dn)
    y = jnp.maximum(y + params["c2_b"][None, :, None, None], 0.0)
    y = y.reshape(X.shape[0], -1)
    y = jnp.maximum(y @ params["l1_w"].T + params["l1_b"], 0.0)
    y = y @ params["l2_w"].T + params["l2_b"]
    return y


# ----------------------------------------------------------------------------
# Deterministic parameter init (shapes from Net.__init__)
# ----------------------------------------------------------------------------
def init_params(key, H, W, in_channels, d_out):
    H1, W1 = conv_dims(H, W, (K1, K1), (S1, S1))
    H2, W2 = conv_dims(H1, W1, (K2, K2), (S2, S2))
    flat = H2 * W2 * N_K2
    ks = jax.random.split(key, 8)
    s = 0.05
    return {
        "c1_w": s * jax.random.normal(ks[0], (N_K1, in_channels, K1, K1), jnp.float32),
        "c1_b": s * jax.random.normal(ks[1], (N_K1,), jnp.float32),
        "c2_w": s * jax.random.normal(ks[2], (N_K2, N_K1, K2, K2), jnp.float32),
        "c2_b": s * jax.random.normal(ks[3], (N_K2,), jnp.float32),
        "l1_w": s * jax.random.normal(ks[4], (D_L1, flat), jnp.float32),
        "l1_b": s * jax.random.normal(ks[5], (D_L1,), jnp.float32),
        "l2_w": s * jax.random.normal(ks[6], (d_out, D_L1), jnp.float32),
        "l2_b": s * jax.random.normal(ks[7], (d_out,), jnp.float32),
    }


if __name__ == "__main__":
    H, W = 84, 84          # module constants (smallest spatial size the
    in_channels = 4        # conv stack supports without changing semantics)
    D_out = 6              # Pong action space
    batch = 2

    key = jax.random.PRNGKey(0)
    kx, kp = jax.random.split(key)
    X = jax.random.normal(kx, (batch, in_channels, H, W), jnp.float32)
    params = init_params(kp, H, W, in_channels, D_out)

    # One-time weight packing (use_bf16=True for extra MXU speed on v6e/v7x).
    packed = pack_params(params, H, W, use_bf16=False)

    fwd = jax.jit(net_forward, static_argnames=("d_out",))
    out = jax.block_until_ready(fwd(X, packed, d_out=D_out))

    ref = reference_forward(X, params)
    assert out.shape == (batch, D_out), out.shape
    assert jnp.allclose(out, ref, rtol=1e-4, atol=1e-4), (
        float(jnp.max(jnp.abs(out - ref))))

    print("KERNEL_OK")
</pallas_src>

<mosaic_0001>
module attributes {stable_mosaic.version = 11 : i64} {
  func.func @_net_fused_kernel(%arg0: i32, %arg1: memref<32x4096xf32, #tpu.memory_space<vmem>>, %arg2: memref<4096x256xf32, #tpu.memory_space<vmem>>, %arg3: memref<1x256xf32, #tpu.memory_space<vmem>>, %arg4: memref<256x32xf32, #tpu.memory_space<vmem>>, %arg5: memref<1x32xf32, #tpu.memory_space<vmem>>, %arg6: memref<512x256xf32, #tpu.memory_space<vmem>>, %arg7: memref<1x256xf32, #tpu.memory_space<vmem>>, %arg8: memref<256x128xf32, #tpu.memory_space<vmem>>, %arg9: memref<1x128xf32, #tpu.memory_space<vmem>>, %arg10: memref<2x128xf32, #tpu.memory_space<vmem>>) attributes {dimension_semantics = [#tpu.dimension_semantics<arbitrary>], iteration_bounds = array<i64: 1>, scalar_prefetch = 0 : i64, scratch_operands = 0 : i64, tpu.core_type = #tpu.core_type<tc>, window_params = [{pipeline_mode = #tpu.pipeline_mode<synchronous>, transform_indices = @transform_0, window_bounds = array<i64: 32, 4096>}, {pipeline_mode = #tpu.pipeline_mode<synchronous>, transform_indices = @transform_1, window_bounds = array<i64: 4096, 256>}, {pipeline_mode = #tpu.pipeline_mode<synchronous>, transform_indices = @transform_2, window_bounds = array<i64: 1, 256>}, {pipeline_mode = #tpu.pipeline_mode<synchronous>, transform_indices = @transform_3, window_bounds = array<i64: 256, 32>}, {pipeline_mode = #tpu.pipeline_mode<synchronous>, transform_indices = @transform_4, window_bounds = array<i64: 1, 32>}, {pipeline_mode = #tpu.pipeline_mode<synchronous>, transform_indices = @transform_5, window_bounds = array<i64: 512, 256>}, {pipeline_mode = #tpu.pipeline_mode<synchronous>, transform_indices = @transform_6, window_bounds = array<i64: 1, 256>}, {pipeline_mode = #tpu.pipeline_mode<synchronous>, transform_indices = @transform_7, window_bounds = array<i64: 256, 128>}, {pipeline_mode = #tpu.pipeline_mode<synchronous>, transform_indices = @transform_8, window_bounds = array<i64: 1, 128>}, {pipeline_mode = #tpu.pipeline_mode<synchronous>, transform_indices = @transform_9, window_bounds = array<i64: 2, 128>}]} {
    %c0 = arith.constant 0 : index
    %c0_0 = arith.constant 0 : index
    %0 = vector.load %arg1[%c0, %c0_0] : memref<32x4096xf32, #tpu.memory_space<vmem>>, vector<32x4096xf32>
    %c0_1 = arith.constant 0 : index
    %c0_2 = arith.constant 0 : index
    %1 = vector.load %arg2[%c0_1, %c0_2] : memref<4096x256xf32, #tpu.memory_space<vmem>>, vector<4096x256xf32>
    %cst = arith.constant dense<0.000000e+00> : vector<32x256xf32>
    %2 = tpu.matmul %0, %1, %cst {dimension_numbers = #tpu.dot_dimension_numbers<[1], [0], [0], [1], [0, 0, 1, 1], [], []>} : vector<32x4096xf32>, vector<4096x256xf32>, vector<32x256xf32> -> vector<32x256xf32>
    %c0_3 = arith.constant 0 : index
    %c0_4 = arith.constant 0 : index
    %3 = vector.load %arg3[%c0_3, %c0_4] : memref<1x256xf32, #tpu.memory_space<vmem>>, vector<1x256xf32>
    %4 = vector.broadcast %3 : vector<1x256xf32> to vector<32x256xf32>
    %5 = arith.addf %2, %4 : vector<32x256xf32>
    %cst_5 = arith.constant 0.000000e+00 : f32
    %6 = vector.broadcast %cst_5 : f32 to vector<32x256xf32>
    %7 = arith.maximumf %5, %6 : vector<32x256xf32>
    %c0_6 = arith.constant 0 : index
    %c0_7 = arith.constant 0 : index
    %8 = vector.load %arg4[%c0_6, %c0_7] : memref<256x32xf32, #tpu.memory_space<vmem>>, vector<256x32xf32>
    %cst_8 = arith.constant dense<0.000000e+00> : vector<32x32xf32>
    %9 = tpu.matmul %7, %8, %cst_8 {dimension_numbers = #tpu.dot_dimension_numbers<[1], [0], [0], [1], [0, 0, 1, 1], [], []>} : vector<32x256xf32>, vector<256x32xf32>, vector<32x32xf32> -> vector<32x32xf32>
    %c0_9 = arith.constant 0 : index
    %c0_10 = arith.constant 0 : index
    %10 = vector.load %arg5[%c0_9, %c0_10] : memref<1x32xf32, #tpu.memory_space<vmem>>, vector<1x32xf32>
    %11 = vector.broadcast %10 : vector<1x32xf32> to vector<32x32xf32>
    %12 = arith.addf %9, %11 : vector<32x32xf32>
    %cst_11 = arith.constant 0.000000e+00 : f32
    %13 = vector.broadcast %cst_11 : f32 to vector<32x32xf32>
    %14 = arith.maximumf %12, %13 : vector<32x32xf32>
    %cst_12 = arith.constant 0.000000e+00 : f32
    %15 = vector.broadcast %cst_12 : f32 to vector<2x256xf32>
    %16 = vector.extract_strided_slice %14 {offsets = [0, 0], sizes = [2, 32], strides = [1, 1]} : vector<32x32xf32> to vector<2x32xf32>
    %c0_13 = arith.constant 0 : index
    %c0_14 = arith.constant 0 : index
    %17 = vector.load %arg6[%c0_13, %c0_14] : memref<512x256xf32, #tpu.memory_space<vmem>>, vector<32x256xf32>
    %cst_15 = arith.constant dense<0.000000e+00> : vector<2x256xf32>
    %18 = tpu.matmul %16, %17, %cst_15 {dimension_numbers = #tpu.dot_dimension_numbers<[1], [0], [0], [1], [0, 0, 1, 1], [], []>} : vector<2x32xf32>, vector<32x256xf32>, vector<2x256xf32> -> vector<2x256xf32>
    %19 = arith.addf %15, %18 : vector<2x256xf32>
    %20 = vector.extract_strided_slice %14 {offsets = [2, 0], sizes = [2, 32], strides = [1, 1]} : vector<32x32xf32> to vector<2x32xf32>
    %c32 = arith.constant 32 : index
    %c0_16 = arith.constant 0 : index
    %21 = vector.load %arg6[%c32, %c0_16] : memref<512x256xf32, #tpu.memory_space<vmem>>, vector<32x256xf32>
    %cst_17 = arith.constant dense<0.000000e+00> : vector<2x256xf32>
    %22 = tpu.matmul %20, %21, %cst_17 {dimension_numbers = #tpu.dot_dimension_numbers<[1], [0], [0], [1], [0, 0, 1, 1], [], []>} : vector<2x32xf32>, vector<32x256xf32>, vector<2x256xf32> -> vector<2x256xf32>
    %23 = arith.addf %19, %22 : vector<2x256xf32>
    %24 = vector.extract_strided_slice %14 {offsets = [4, 0], sizes = [2, 32], strides = [1, 1]} : vector<32x32xf32> to vector<2x32xf32>
    %c64 = arith.constant 64 : index
    %c0_18 = arith.constant 0 : index
    %25 = vector.load %arg6[%c64, %c0_18] : memref<512x256xf32, #tpu.memory_space<vmem>>, vector<32x256xf32>
    %cst_19 = arith.constant dense<0.000000e+00> : vector<2x256xf32>
    %26 = tpu.matmul %24, %25, %cst_19 {dimension_numbers = #tpu.dot_dimension_numbers<[1], [0], [0], [1], [0, 0, 1, 1], [], []>} : vector<2x32xf32>, vector<32x256xf32>, vector<2x256xf32> -> vector<2x256xf32>
    %27 = arith.addf %23, %26 : vector<2x256xf32>
    %28 = vector.extract_strided_slice %14 {offsets = [6, 0], sizes = [2, 32], strides = [1, 1]} : vector<32x32xf32> to vector<2x32xf32>
    %c96 = arith.constant 96 : index
    %c0_20 = arith.constant 0 : index
    %29 = vector.load %arg6[%c96, %c0_20] : memref<512x256xf32, #tpu.memory_space<vmem>>, vector<32x256xf32>
    %cst_21 = arith.constant dense<0.000000e+00> : vector<2x256xf32>
    %30 = tpu.matmul %28, %29, %cst_21 {dimension_numbers = #tpu.dot_dimension_numbers<[1], [0], [0], [1], [0, 0, 1, 1], [], []>} : vector<2x32xf32>, vector<32x256xf32>, vector<2x256xf32> -> vector<2x256xf32>
    %31 = arith.addf %27, %30 : vector<2x256xf32>
    %32 = vector.extract_strided_slice %14 {offsets = [8, 0], sizes = [2, 32], strides = [1, 1]} : vector<32x32xf32> to vector<2x32xf32>
    %c128 = arith.constant 128 : index
    %c0_22 = arith.constant 0 : index
    %33 = vector.load %arg6[%c128, %c0_22] : memref<512x256xf32, #tpu.memory_space<vmem>>, vector<32x256xf32>
    %cst_23 = arith.constant dense<0.000000e+00> : vector<2x256xf32>
    %34 = tpu.matmul %32, %33, %cst_23 {dimension_numbers = #tpu.dot_dimension_numbers<[1], [0], [0], [1], [0, 0, 1, 1], [], []>} : vector<2x32xf32>, vector<32x256xf32>, vector<2x256xf32> -> vector<2x256xf32>
    %35 = arith.addf %31, %34 : vector<2x256xf32>
    %36 = vector.extract_strided_slice %14 {offsets = [10, 0], sizes = [2, 32], strides = [1, 1]} : vector<32x32xf32> to vector<2x32xf32>
    %c160 = arith.constant 160 : index
    %c0_24 = arith.constant 0 : index
    %37 = vector.load %arg6[%c160, %c0_24] : memref<512x256xf32, #tpu.memory_space<vmem>>, vector<32x256xf32>
    %cst_25 = arith.constant dense<0.000000e+00> : vector<2x256xf32>
    %38 = tpu.matmul %36, %37, %cst_25 {dimension_numbers = #tpu.dot_dimension_numbers<[1], [0], [0], [1], [0, 0, 1, 1], [], []>} : vector<2x32xf32>, vector<32x256xf32>, vector<2x256xf32> -> vector<2x256xf32>
    %39 = arith.addf %35, %38 : vector<2x256xf32>
    %40 = vector.extract_strided_slice %14 {offsets = [12, 0], sizes = [2, 32], strides = [1, 1]} : vector<32x32xf32> to vector<2x32xf32>
    %c192 = arith.constant 192 : index
    %c0_26 = arith.constant 0 : index
    %41 = vector.load %arg6[%c192, %c0_26] : memref<512x256xf32, #tpu.memory_space<vmem>>, vector<32x256xf32>
    %cst_27 = arith.constant dense<0.000000e+00> : vector<2x256xf32>
    %42 = tpu.matmul %40, %41, %cst_27 {dimension_numbers = #tpu.dot_dimension_numbers<[1], [0], [0], [1], [0, 0, 1, 1], [], []>} : vector<2x32xf32>, vector<32x256xf32>, vector<2x256xf32> -> vector<2x256xf32>
    %43 = arith.addf %39, %42 : vector<2x256xf32>
    %44 = vector.extract_strided_slice %14 {offsets = [14, 0], sizes = [2, 32], strides = [1, 1]} : vector<32x32xf32> to vector<2x32xf32>
    %c224 = arith.constant 224 : index
    %c0_28 = arith.constant 0 : index
    %45 = vector.load %arg6[%c224, %c0_28] : memref<512x256xf32, #tpu.memory_space<vmem>>, vector<32x256xf32>
    %cst_29 = arith.constant dense<0.000000e+00> : vector<2x256xf32>
    %46 = tpu.matmul %44, %45, %cst_29 {dimension_numbers = #tpu.dot_dimension_numbers<[1], [0], [0], [1], [0, 0, 1, 1], [], []>} : vector<2x32xf32>, vector<32x256xf32>, vector<2x256xf32> -> vector<2x256xf32>
    %47 = arith.addf %43, %46 : vector<2x256xf32>
    %48 = vector.extract_strided_slice %14 {offsets = [16, 0], sizes = [2, 32], strides = [1, 1]} : vector<32x32xf32> to vector<2x32xf32>
    %c256 = arith.constant 256 : index
    %c0_30 = arith.constant 0 : index
    %49 = vector.load %arg6[%c256, %c0_30] : memref<512x256xf32, #tpu.memory_space<vmem>>, vector<32x256xf32>
    %cst_31 = arith.constant dense<0.000000e+00> : vector<2x256xf32>
    %50 = tpu.matmul %48, %49, %cst_31 {dimension_numbers = #tpu.dot_dimension_numbers<[1], [0], [0], [1], [0, 0, 1, 1], [], []>} : vector<2x32xf32>, vector<32x256xf32>, vector<2x256xf32> -> vector<2x256xf32>
    %51 = arith.addf %47, %50 : vector<2x256xf32>
    %52 = vector.extract_strided_slice %14 {offsets = [18, 0], sizes = [2, 32], strides = [1, 1]} : vector<32x32xf32> to vector<2x32xf32>
    %c288 = arith.constant 288 : index
    %c0_32 = arith.constant 0 : index
    %53 = vector.load %arg6[%c288, %c0_32] : memref<512x256xf32, #tpu.memory_space<vmem>>, vector<32x256xf32>
    %cst_33 = arith.constant dense<0.000000e+00> : vector<2x256xf32>
    %54 = tpu.matmul %52, %53, %cst_33 {dimension_numbers = #tpu.dot_dimension_numbers<[1], [0], [0], [1], [0, 0, 1, 1], [], []>} : vector<2x32xf32>, vector<32x256xf32>, vector<2x256xf32> -> vector<2x256xf32>
    %55 = arith.addf %51, %54 : vector<2x256xf32>
    %56 = vector.extract_strided_slice %14 {offsets = [20, 0], sizes = [2, 32], strides = [1, 1]} : vector<32x32xf32> to vector<2x32xf32>
    %c320 = arith.constant 320 : index
    %c0_34 = arith.constant 0 : index
    %57 = vector.load %arg6[%c320, %c0_34] : memref<512x256xf32, #tpu.memory_space<vmem>>, vector<32x256xf32>
    %cst_35 = arith.constant dense<0.000000e+00> : vector<2x256xf32>
    %58 = tpu.matmul %56, %57, %cst_35 {dimension_numbers = #tpu.dot_dimension_numbers<[1], [0], [0], [1], [0, 0, 1, 1], [], []>} : vector<2x32xf32>, vector<32x256xf32>, vector<2x256xf32> -> vector<2x256xf32>
    %59 = arith.addf %55, %58 : vector<2x256xf32>
    %60 = vector.extract_strided_slice %14 {offsets = [22, 0], sizes = [2, 32], strides = [1, 1]} : vector<32x32xf32> to vector<2x32xf32>
    %c352 = arith.constant 352 : index
    %c0_36 = arith.constant 0 : index
    %61 = vector.load %arg6[%c352, %c0_36] : memref<512x256xf32, #tpu.memory_space<vmem>>, vector<32x256xf32>
    %cst_37 = arith.constant dense<0.000000e+00> : vector<2x256xf32>
    %62 = tpu.matmul %60, %61, %cst_37 {dimension_numbers = #tpu.dot_dimension_numbers<[1], [0], [0], [1], [0, 0, 1, 1], [], []>} : vector<2x32xf32>, vector<32x256xf32>, vector<2x256xf32> -> vector<2x256xf32>
    %63 = arith.addf %59, %62 : vector<2x256xf32>
    %64 = vector.extract_strided_slice %14 {offsets = [24, 0], sizes = [2, 32], strides = [1, 1]} : vector<32x32xf32> to vector<2x32xf32>
    %c384 = arith.constant 384 : index
    %c0_38 = arith.constant 0 : index
    %65 = vector.load %arg6[%c384, %c0_38] : memref<512x256xf32, #tpu.memory_space<vmem>>, vector<32x256xf32>
    %cst_39 = arith.constant dense<0.000000e+00> : vector<2x256xf32>
    %66 = tpu.matmul %64, %65, %cst_39 {dimension_numbers = #tpu.dot_dimension_numbers<[1], [0], [0], [1], [0, 0, 1, 1], [], []>} : vector<2x32xf32>, vector<32x256xf32>, vector<2x256xf32> -> vector<2x256xf32>
    %67 = arith.addf %63, %66 : vector<2x256xf32>
    %68 = vector.extract_strided_slice %14 {offsets = [26, 0], sizes = [2, 32], strides = [1, 1]} : vector<32x32xf32> to vector<2x32xf32>
    %c416 = arith.constant 416 : index
    %c0_40 = arith.constant 0 : index
    %69 = vector.load %arg6[%c416, %c0_40] : memref<512x256xf32, #tpu.memory_space<vmem>>, vector<32x256xf32>
    %cst_41 = arith.constant dense<0.000000e+00> : vector<2x256xf32>
    %70 = tpu.matmul %68, %69, %cst_41 {dimension_numbers = #tpu.dot_dimension_numbers<[1], [0], [0], [1], [0, 0, 1, 1], [], []>} : vector<2x32xf32>, vector<32x256xf32>, vector<2x256xf32> -> vector<2x256xf32>
    %71 = arith.addf %67, %70 : vector<2x256xf32>
    %72 = vector.extract_strided_slice %14 {offsets = [28, 0], sizes = [2, 32], strides = [1, 1]} : vector<32x32xf32> to vector<2x32xf32>
    %c448 = arith.constant 448 : index
    %c0_42 = arith.constant 0 : index
    %73 = vector.load %arg6[%c448, %c0_42] : memref<512x256xf32, #tpu.memory_space<vmem>>, vector<32x256xf32>
    %cst_43 = arith.constant dense<0.000000e+00> : vector<2x256xf32>
    %74 = tpu.matmul %72, %73, %cst_43 {dimension_numbers = #tpu.dot_dimension_numbers<[1], [0], [0], [1], [0, 0, 1, 1], [], []>} : vector<2x32xf32>, vector<32x256xf32>, vector<2x256xf32> -> vector<2x256xf32>
    %75 = arith.addf %71, %74 : vector<2x256xf32>
    %76 = vector.extract_strided_slice %14 {offsets = [30, 0], sizes = [2, 32], strides = [1, 1]} : vector<32x32xf32> to vector<2x32xf32>
    %c480 = arith.constant 480 : index
    %c0_44 = arith.constant 0 : index
    %77 = vector.load %arg6[%c480, %c0_44] : memref<512x256xf32, #tpu.memory_space<vmem>>, vector<32x256xf32>
    %cst_45 = arith.constant dense<0.000000e+00> : vector<2x256xf32>
    %78 = tpu.matmul %76, %77, %cst_45 {dimension_numbers = #tpu.dot_dimension_numbers<[1], [0], [0], [1], [0, 0, 1, 1], [], []>} : vector<2x32xf32>, vector<32x256xf32>, vector<2x256xf32> -> vector<2x256xf32>
    %79 = arith.addf %75, %78 : vector<2x256xf32>
    %c0_46 = arith.constant 0 : index
    %c0_47 = arith.constant 0 : index
    %80 = vector.load %arg7[%c0_46, %c0_47] : memref<1x256xf32, #tpu.memory_space<vmem>>, vector<1x256xf32>
    %81 = vector.broadcast %80 : vector<1x256xf32> to vector<2x256xf32>
    %82 = arith.addf %79, %81 : vector<2x256xf32>
    %cst_48 = arith.constant 0.000000e+00 : f32
    %83 = vector.broadcast %cst_48 : f32 to vector<2x256xf32>
    %84 = arith.maximumf %82, %83 : vector<2x256xf32>
    %c0_49 = arith.constant 0 : index
    %c0_50 = arith.constant 0 : index
    %85 = vector.load %arg8[%c0_49, %c0_50] : memref<256x128xf32, #tpu.memory_space<vmem>>, vector<256x128xf32>
    %cst_51 = arith.constant dense<0.000000e+00> : vector<2x128xf32>
    %86 = tpu.matmul %84, %85, %cst_51 {dimension_numbers = #tpu.dot_dimension_numbers<[1], [0], [0], [1], [0, 0, 1, 1], [], []>} : vector<2x256xf32>, vector<256x128xf32>, vector<2x128xf32> -> vector<2x128xf32>
    %c0_52 = arith.constant 0 : index
    %c0_53 = arith.constant 0 : index
    %87 = vector.load %arg9[%c0_52, %c0_53] : memref<1x128xf32, #tpu.memory_space<vmem>>, vector<1x128xf32>
    %88 = vector.broadcast %87 : vector<1x128xf32> to vector<2x128xf32>
    %89 = arith.addf %86, %88 : vector<2x128xf32>
    %c0_54 = arith.constant 0 : index
    %c0_55 = arith.constant 0 : index
    %90 = vector.load %arg10[%c0_54, %c0_55] : memref<2x128xf32, #tpu.memory_space<vmem>>, vector<2x128xf32>
    tpu.vector_store %arg10[%c0_54, %c0_55], %89 {strides = array<i32>} : memref<2x128xf32, #tpu.memory_space<vmem>>, vector<2x128xf32>,
    return
  }
  func.func @transform_0(%arg0: i32) -> (i32, i32) {
    %c0_i32 = arith.constant 0 : i32
    %c0_i32_0 = arith.constant 0 : i32
    %c0_i32_1 = arith.constant 0 : i32
    return %c0_i32, %c0_i32_0 : i32, i32
  }
  func.func @transform_1(%arg0: i32) -> (i32, i32) {
    %c0_i32 = arith.constant 0 : i32
    %c0_i32_0 = arith.constant 0 : i32
    %c0_i32_1 = arith.constant 0 : i32
    return %c0_i32, %c0_i32_0 : i32, i32
  }
  func.func @transform_2(%arg0: i32) -> (i32, i32) {
    %c0_i32 = arith.constant 0 : i32
    %c0_i32_0 = arith.constant 0 : i32
    %c0_i32_1 = arith.constant 0 : i32
    return %c0_i32, %c0_i32_0 : i32, i32
  }
  func.func @transform_3(%arg0: i32) -> (i32, i32) {
    %c0_i32 = arith.constant 0 : i32
    %c0_i32_0 = arith.constant 0 : i32
    %c0_i32_1 = arith.constant 0 : i32
    return %c0_i32, %c0_i32_0 : i32, i32
  }
  func.func @transform_4(%arg0: i32) -> (i32, i32) {
    %c0_i32 = arith.constant 0 : i32
    %c0_i32_0 = arith.constant 0 : i32
    %c0_i32_1 = arith.constant 0 : i32
    return %c0_i32, %c0_i32_0 : i32, i32
  }
  func.func @transform_5(%arg0: i32) -> (i32, i32) {
    %c0_i32 = arith.constant 0 : i32
    %c0_i32_0 = arith.constant 0 : i32
    %c0_i32_1 = arith.constant 0 : i32
    return %c0_i32, %c0_i32_0 : i32, i32
  }
  func.func @transform_6(%arg0: i32) -> (i32, i32) {
    %c0_i32 = arith.constant 0 : i32
    %c0_i32_0 = arith.constant 0 : i32
    %c0_i32_1 = arith.constant 0 : i32
    return %c0_i32, %c0_i32_0 : i32, i32
  }
  func.func @transform_7(%arg0: i32) -> (i32, i32) {
    %c0_i32 = arith.constant 0 : i32
    %c0_i32_0 = arith.constant 0 : i32
    %c0_i32_1 = arith.constant 0 : i32
    return %c0_i32, %c0_i32_0 : i32, i32
  }
  func.func @transform_8(%arg0: i32) -> (i32, i32) {
    %c0_i32 = arith.constant 0 : i32
    %c0_i32_0 = arith.constant 0 : i32
    %c0_i32_1 = arith.constant 0 : i32
    return %c0_i32, %c0_i32_0 : i32, i32
  }
  func.func @transform_9(%arg0: i32) -> (i32, i32) {
    %c0_i32 = arith.constant 0 : i32
    %c0_i32_0 = arith.constant 0 : i32
    %c0_i32_1 = arith.constant 0 : i32
    return %c0_i32, %c0_i32_0 : i32, i32
  }
}

</mosaic_0001>

<llo_original>
// kernel: net_forward.1
$region0: #{net_forward.1}
  #allocation0 [shape = 'u32[]', space=smem, size = 0x4, offset = 0x4, fixed_abs, tag = 'smem constant byte address 0x4 - core index']
  #allocation1 [shape = 'u32[72,128]{1,0:T(1,128)}', space=vmem, size = 0x9000, scoped, tag = 'internal scratch']
  %s0 = inlined_call_operand.vmem [shape: f32[32,4096], index: 0, kind: input, shape index: {}]
  %s1 = inlined_call_operand.vmem [shape: f32[4096,256], index: 1, kind: input, shape index: {}]
  %s2 = inlined_call_operand.vmem [shape: f32[1,256], index: 2, kind: input, shape index: {}]
  %s3 = inlined_call_operand.vmem [shape: f32[256,32], index: 3, kind: input, shape index: {}]
  %s4 = inlined_call_operand.vmem [shape: f32[1,32], index: 4, kind: input, shape index: {}]
  %s5 = inlined_call_operand.vmem [shape: f32[512,256], index: 5, kind: input, shape index: {}]
  %s6 = inlined_call_operand.vmem [shape: f32[1,256], index: 6, kind: input, shape index: {}]
  %s7 = inlined_call_operand.vmem [shape: f32[256,128], index: 7, kind: input, shape index: {}]
  %s8 = inlined_call_operand.vmem [shape: f32[1,128], index: 8, kind: input, shape index: {}]
  %s9 = inlined_call_operand.hbm [shape: f32[2,128], index: 9, kind: output, shape index: {}]
  %s10 = sld [smem:[#allocation0]]
  $region46: #{net_forward.1} parent=0
    _
  %s12 = ssub.s32 1, %s10
  %s13 = scalar_select 0, %s12, %s10
  $region1: #{net_forward.1} parent=0
    #allocation2 [shape = 'u8[1024]{0}', space=vmem, size = 0x400, scoped, tag = 'output window, operand 0, single buffered']
    #allocation3 [shape = 's32[1]{0}', space=sflag, size = 0x4, scoped, tag = 'scoped memory for net_forward.1']
    %14 = vsyncpa [#allocation3], 0
    // Predicated region
    $region2: #{net_forward.1} parent=1 // pred_check
      _
    $region3: #{net_forward.1} parent=1 // pred_check_branch
      %16 = sbr.rel (0) target = $region5
    $region4: #{net_forward.1} parent=1 // pred_region
      _
    $region5: #{net_forward.1} parent=1 // pred_fallthru
      _
    // Predicated region
    $region6: #{net_forward.1} parent=1 // pred_check
      _
    $region7: #{net_forward.1} parent=1 // pred_check_branch
      %18 = sbr.rel (0) target = $region9
    $region8: #{net_forward.1} parent=1 // pred_region
      _
    $region9: #{net_forward.1} parent=1 // pred_fallthru
      _
    // Predicated region
    $region10: #{net_forward.1} parent=1 // pred_check
      _
    $region11: #{net_forward.1} parent=1 // pred_check_branch
      %20 = sbr.rel (0) target = $region13
    $region12: #{net_forward.1} parent=1 // pred_region
      _
    $region13: #{net_forward.1} parent=1 // pred_fallthru
      _
    // Predicated region
    $region14: #{net_forward.1} parent=1 // pred_check
      _
    $region15: #{net_forward.1} parent=1 // pred_check_branch
      %22 = sbr.rel (0) target = $region17
    $region16: #{net_forward.1} parent=1 // pred_region
      _
    $region17: #{net_forward.1} parent=1 // pred_fallthru
      _
    // Predicated region
    $region18: #{net_forward.1} parent=1 // pred_check
      _
    $region19: #{net_forward.1} parent=1 // pred_check_branch
      %24 = sbr.rel (0) target = $region21
    $region20: #{net_forward.1} parent=1 // pred_region
      _
    $region21: #{net_forward.1} parent=1 // pred_fallthru
      _
    // Predicated region
    $region22: #{net_forward.1} parent=1 // pred_check
      _
    $region23: #{net_forward.1} parent=1 // pred_check_branch
      %26 = sbr.rel (0) target = $region25
    $region24: #{net_forward.1} parent=1 // pred_region
      _
    $region25: #{net_forward.1} parent=1 // pred_fallthru
      _
    // Predicated region
    $region26: #{net_forward.1} parent=1 // pred_check
      _
    $region27: #{net_forward.1} parent=1 // pred_check_branch
      %28 = sbr.rel (0) target = $region29
    $region28: #{net_forward.1} parent=1 // pred_region
      _
    $region29: #{net_forward.1} parent=1 // pred_fallthru
      _
    // Predicated region
    $region30: #{net_forward.1} parent=1 // pred_check
      _
    $region31: #{net_forward.1} parent=1 // pred_check_branch
      %30 = sbr.rel (0) target = $region33
    $region32: #{net_forward.1} parent=1 // pred_region
      _
    $region33: #{net_forward.1} parent=1 // pred_fallthru
      _
    // Predicated region
    $region34: #{net_forward.1} parent=1 // pred_check
      _
    $region35: #{net_forward.1} parent=1 // pred_check_branch
      %32 = sbr.rel (0) target = $region37
    $region36: #{net_forward.1} parent=1 // pred_region
      _
    $region37: #{net_forward.1} parent=1 // pred_fallthru
      _
    %v33 = vld [vmem:[%s0] sm:$0xff]
    %v34 = vld [vmem:[%s0 + $0x8] sm:$0xff]
    %v35 = vld [vmem:[%s0 + $0x10] sm:$0xff]
    %v36 = vld [vmem:[%s0 + $0x18] sm:$0xff]
    %v37 = vld [vmem:[%s0 + $0x20] sm:$0xff]
    %v38 = vld [vmem:[%s0 + $0x28] sm:$0xff]
    %v39 = vld [vmem:[%s0 + $0x30] sm:$0xff]
    %v40 = vld [vmem:[%s0 + $0x38] sm:$0xff]
    %v41 = vld [vmem:[%s0 + $0x40] sm:$0xff]
    %v42 = vld [vmem:[%s0 + $0x48] sm:$0xff]
    %v43 = vld [vmem:[%s0 + $0x50] sm:$0xff]
    %v44 = vld [vmem:[%s0 + $0x58] sm:$0xff]
    %v45 = vld [vmem:[%s0 + $0x60] sm:$0xff]
    %v46 = vld [vmem:[%s0 + $0x68] sm:$0xff]
    %v47 = vld [vmem:[%s0 + $0x70] sm:$0xff]
    %v48 = vld [vmem:[%s0 + $0x78] sm:$0xff]
    %v49 = vld [vmem:[%s0 + $0x80] sm:$0xff]
    %v50 = vld [vmem:[%s0 + $0x88] sm:$0xff]
    %v51 = vld [vmem:[%s0 + $0x90] sm:$0xff]
    %v52 = vld [vmem:[%s0 + $0x98] sm:$0xff]
    %v53 = vld [vmem:[%s0 + $0xa0] sm:$0xff]
    %v54 = vld [vmem:[%s0 + $0xa8] sm:$0xff]
    %v55 = vld [vmem:[%s0 + $0xb0] sm:$0xff]
    %v56 = vld [vmem:[%s0 + $0xb8] sm:$0xff]
    %v57 = vld [vmem:[%s0 + $0xc0] sm:$0xff]
    %v58 = vld [vmem:[%s0 + $0xc8] sm:$0xff]
    %v59 = vld [vmem:[%s0 + $0xd0] sm:$0xff]
    %v60 = vld [vmem:[%s0 + $0xd8] sm:$0xff]
    %v61 = vld [vmem:[%s0 + $0xe0] sm:$0xff]
    %v62 = vld [vmem:[%s0 + $0xe8] sm:$0xff]
    %v63 = vld [vmem:[%s0 + $0xf0] sm:$0xff]
    %v64 = vld [vmem:[%s0 + $0xf8] sm:$0xff]
    %v65 = vld [vmem:[%s0 + $0x100] sm:$0xff]
    %v66 = vld [vmem:[%s0 + $0x108] sm:$0xff]
    %v67 = vld [vmem:[%s0 + $0x110] sm:$0xff]
    %v68 = vld [vmem:[%s0 + $0x118] sm:$0xff]
    %v69 = vld [vmem:[%s0 + $0x120] sm:$0xff]
    %v70 = vld [vmem:[%s0 + $0x128] sm:$0xff]
    %v71 = vld [vmem:[%s0 + $0x130] sm:$0xff]
    %v72 = vld [vmem:[%s0 + $0x138] sm:$0xff]
    %v73 = vld [vmem:[%s0 + $0x140] sm:$0xff]
    %v74 = vld [vmem:[%s0 + $0x148] sm:$0xff]
    %v75 = vld [vmem:[%s0 + $0x150] sm:$0xff]
    %v76 = vld [vmem:[%s0 + $0x158] sm:$0xff]
    %v77 = vld [vmem:[%s0 + $0x160] sm:$0xff]
    %v78 = vld [vmem:[%s0 + $0x168] sm:$0xff]
    %v79 = vld [vmem:[%s0 + $0x170] sm:$0xff]
    %v80 = vld [vmem:[%s0 + $0x178] sm:$0xff]
    %v81 = vld [vmem:[%s0 + $0x180] sm:$0xff]
    %v82 = vld [vmem:[%s0 + $0x188] sm:$0xff]
    %v83 = vld [vmem:[%s0 + $0x190] sm:$0xff]
    %v84 = vld [vmem:[%s0 + $0x198] sm:$0xff]
    %v85 = vld [vmem:[%s0 + $0x1a0] sm:$0xff]
    %v86 = vld [vmem:[%s0 + $0x1a8] sm:$0xff]
    %v87 = vld [vmem:[%s0 + $0x1b0] sm:$0xff]
    %v88 = vld [vmem:[%s0 + $0x1b8] sm:$0xff]
    %v89 = vld [vmem:[%s0 + $0x1c0] sm:$0xff]
    %v90 = vld [vmem:[%s0 + $0x1c8] sm:$0xff]
    %v91 = vld [vmem:[%s0 + $0x1d0] sm:$0xff]
    %v92 = vld [vmem:[%s0 + $0x1d8] sm:$0xff]
    %v93 = vld [vmem:[%s0 + $0x1e0] sm:$0xff]
    %v94 = vld [vmem:[%s0 + $0x1e8] sm:$0xff]
    %v95 = vld [vmem:[%s0 + $0x1f0] sm:$0xff]
    %v96 = vld [vmem:[%s0 + $0x1f8] sm:$0xff]
    %v97 = vld [vmem:[%s0 + $0x200] sm:$0xff]
    %v98 = vld [vmem:[%s0 + $0x208] sm:$0xff]
    %v99 = vld [vmem:[%s0 + $0x210] sm:$0xff]
    %v100 = vld [vmem:[%s0 + $0x218] sm:$0xff]
    %v101 = vld [vmem:[%s0 + $0x220] sm:$0xff]
    %v102 = vld [vmem:[%s0 + $0x228] sm:$0xff]
    %v103 = vld [vmem:[%s0 + $0x230] sm:$0xff]
    %v104 = vld [vmem:[%s0 + $0x238] sm:$0xff]
    %v105 = vld [vmem:[%s0 + $0x240] sm:$0xff]
    %v106 = vld [vmem:[%s0 + $0x248] sm:$0xff]
    %v107 = vld [vmem:[%s0 + $0x250] sm:$0xff]
    %v108 = vld [vmem:[%s0 + $0x258] sm:$0xff]
    %v109 = vld [vmem:[%s0 + $0x260] sm:$0xff]
    %v110 = vld [vmem:[%s0 + $0x268] sm:$0xff]
    %v111 = vld [vmem:[%s0 + $0x270] sm:$0xff]
    %v112 = vld [vmem:[%s0 + $0x278] sm:$0xff]
    %v113 = vld [vmem:[%s0 + $0x280] sm:$0xff]
    %v114 = vld [vmem:[%s0 + $0x288] sm:$0xff]
    %v115 = vld [vmem:[%s0 + $0x290] sm:$0xff]
    %v116 = vld [vmem:[%s0 + $0x298] sm:$0xff]
    %v117 = vld [vmem:[%s0 + $0x2a0] sm:$0xff]
    %v118 = vld [vmem:[%s0 + $0x2a8] sm:$0xff]
    %v119 = vld [vmem:[%s0 + $0x2b0] sm:$0xff]
    %v120 = vld [vmem:[%s0 + $0x2b8] sm:$0xff]
    %v121 = vld [vmem:[%s0 + $0x2c0] sm:$0xff]
    %v122 = vld [vmem:[%s0 + $0x2c8] sm:$0xff]
    %v123 = vld [vmem:[%s0 + $0x2d0] sm:$0xff]
    %v124 = vld [vmem:[%s0 + $0x2d8] sm:$0xff]
    %v125 = vld [vmem:[%s0 + $0x2e0] sm:$0xff]
    %v126 = vld [vmem:[%s0 + $0x2e8] sm:$0xff]
    %v127 = vld [vmem:[%s0 + $0x2f0] sm:$0xff]
    %v128 = vld [vmem:[%s0 + $0x2f8] sm:$0xff]
    %v129 = vld [vmem:[%s0 + $0x300] sm:$0xff]
    %v130 = vld [vmem:[%s0 + $0x308] sm:$0xff]
    %v131 = vld [vmem:[%s0 + $0x310] sm:$0xff]
    %v132 = vld [vmem:[%s0 + $0x318] sm:$0xff]
    %v133 = vld [vmem:[%s0 + $0x320] sm:$0xff]
    %v134 = vld [vmem:[%s0 + $0x328] sm:$0xff]
    %v135 = vld [vmem:[%s0 + $0x330] sm:$0xff]
    %v136 = vld [vmem:[%s0 + $0x338] sm:$0xff]
    %v137 = vld [vmem:[%s0 + $0x340] sm:$0xff]
    %v138 = vld [vmem:[%s0 + $0x348] sm:$0xff]
    %v139 = vld [vmem:[%s0 + $0x350] sm:$0xff]
    %v140 = vld [vmem:[%s0 + $0x358] sm:$0xff]
    %v141 = vld [vmem:[%s0 + $0x360] sm:$0xff]
    %v142 = vld [vmem:[%s0 + $0x368] sm:$0xff]
    %v143 = vld [vmem:[%s0 + $0x370] sm:$0xff]
    %v144 = vld [vmem:[%s0 + $0x378] sm:$0xff]
    %v145 = vld [vmem:[%s0 + $0x380] sm:$0xff]
    %v146 = vld [vmem:[%s0 + $0x388] sm:$0xff]
    %v147 = vld [vmem:[%s0 + $0x390] sm:$0xff]
    %v148 = vld [vmem:[%s0 + $0x398] sm:$0xff]
    %v149 = vld [vmem:[%s0 + $0x3a0] sm:$0xff]
    %v150 = vld [vmem:[%s0 + $0x3a8] sm:$0xff]
    %v151 = vld [vmem:[%s0 + $0x3b0] sm:$0xff]
    %v152 = vld [vmem:[%s0 + $0x3b8] sm:$0xff]
    %v153 = vld [vmem:[%s0 + $0x3c0] sm:$0xff]
    %v154 = vld [vmem:[%s0 + $0x3c8] sm:$0xff]
    %v155 = vld [vmem:[%s0 + $0x3d0] sm:$0xff]
    %v156 = vld [vmem:[%s0 + $0x3d8] sm:$0xff]
    %v157 = vld [vmem:[%s0 + $0x3e0] sm:$0xff]
    %v158 = vld [vmem:[%s0 + $0x3e8] sm:$0xff]
    %v159 = vld [vmem:[%s0 + $0x3f0] sm:$0xff]
    %v160 = vld [vmem:[%s0 + $0x3f8] sm:$0xff]
    %v161 = vld [vmem:[%s1] sm:$0xff]
    %v162 = vld [vmem:[%s1 + $0x8] sm:$0xff]
    %v163 = vld [vmem:[%s1 + $0x10] sm:$0xff]
    %v164 = vld [vmem:[%s1 + $0x18] sm:$0xff]
    %v165 = vld [vmem:[%s1 + $0x20] sm:$0xff]
    %v166 = vld [vmem:[%s1 + $0x28] sm:$0xff]
    %v167 = vld [vmem:[%s1 + $0x30] sm:$0xff]
    %v168 = vld [vmem:[%s1 + $0x38] sm:$0xff]
    %v169 = vld [vmem:[%s1 + $0x40] sm:$0xff]
    %v170 = vld [vmem:[%s1 + $0x48] sm:$0xff]
    %v171 = vld [vmem:[%s1 + $0x50] sm:$0xff]
    %v172 = vld [vmem:[%s1 + $0x58] sm:$0xff]
    %v173 = vld [vmem:[%s1 + $0x60] sm:$0xff]
    %v174 = vld [vmem:[%s1 + $0x68] sm:$0xff]
    %v175 = vld [vmem:[%s1 + $0x70] sm:$0xff]
    %v176 = vld [vmem:[%s1 + $0x78] sm:$0xff]
    %v177 = vld [vmem:[%s1 + $0x80] sm:$0xff]
    %v178 = vld [vmem:[%s1 + $0x88] sm:$0xff]
    %v179 = vld [vmem:[%s1 + $0x90] sm:$0xff]
    %v180 = vld [vmem:[%s1 + $0x98] sm:$0xff]
    %v181 = vld [vmem:[%s1 + $0xa0] sm:$0xff]
    %v182 = vld [vmem:[%s1 + $0xa8] sm:$0xff]
    %v183 = vld [vmem:[%s1 + $0xb0] sm:$0xff]
    %v184 = vld [vmem:[%s1 + $0xb8] sm:$0xff]
    %v185 = vld [vmem:[%s1 + $0xc0] sm:$0xff]
    %v186 = vld [vmem:[%s1 + $0xc8] sm:$0xff]
    %v187 = vld [vmem:[%s1 + $0xd0] sm:$0xff]
    %v188 = vld [vmem:[%s1 + $0xd8] sm:$0xff]
    %v189 = vld [vmem:[%s1 + $0xe0] sm:$0xff]
    %v190 = vld [vmem:[%s1 + $0xe8] sm:$0xff]
    %v191 = vld [vmem:[%s1 + $0xf0] sm:$0xff]
    %v192 = vld [vmem:[%s1 + $0xf8] sm:$0xff]
    %v193 = vld [vmem:[%s1 + $0x100] sm:$0xff]
    %v194 = vld [vmem:[%s1 + $0x108] sm:$0xff]
    %v195 = vld [vmem:[%s1 + $0x110] sm:$0xff]
    %v196 = vld [vmem:[%s1 + $0x118] sm:$0xff]
    %v197 = vld [vmem:[%s1 + $0x120] sm:$0xff]
    %v198 = vld [vmem:[%s1 + $0x128] sm:$0xff]
    %v199 = vld [vmem:[%s1 + $0x130] sm:$0xff]
    %v200 = vld [vmem:[%s1 + $0x138] sm:$0xff]
    %v201 = vld [vmem:[%s1 + $0x140] sm:$0xff]
    %v202 = vld [vmem:[%s1 + $0x148] sm:$0xff]
    %v203 = vld [vmem:[%s1 + $0x150] sm:$0xff]
    %v204 = vld [vmem:[%s1 + $0x158] sm:$0xff]
    %v205 = vld [vmem:[%s1 + $0x160] sm:$0xff]
    %v206 = vld [vmem:[%s1 + $0x168] sm:$0xff]
    %v207 = vld [vmem:[%s1 + $0x170] sm:$0xff]
    %v208 = vld [vmem:[%s1 + $0x178] sm:$0xff]
    %v209 = vld [vmem:[%s1 + $0x180] sm:$0xff]
    %v210 = vld [vmem:[%s1 + $0x188] sm:$0xff]
    %v211 = vld [vmem:[%s1 + $0x190] sm:$0xff]
    %v212 = vld [vmem:[%s1 + $0x198] sm:$0xff]
    %v213 = vld [vmem:[%s1 + $0x1a0] sm:$0xff]
    %v214 = vld [vmem:[%s1 + $0x1a8] sm:$0xff]
    %v215 = vld [vmem:[%s1 + $0x1b0] sm:$0xff]
    %v216 = vld [vmem:[%s1 + $0x1b8] sm:$0xff]
    %v217 = vld [vmem:[%s1 + $0x1c0] sm:$0xff]
    %v218 = vld [vmem:[%s1 + $0x1c8] sm:$0xff]
    %v219 = vld [vmem:[%s1 + $0x1d0] sm:$0xff]
    %v220 = vld [vmem:[%s1 + $0x1d8] sm:$0xff]
    %v221 = vld [vmem:[%s1 + $0x1e0] sm:$0xff]
    %v222 = vld [vmem:[%s1 + $0x1e8] sm:$0xff]
    %v223 = vld [vmem:[%s1 + $0x1f0] sm:$0xff]
    %v224 = vld [vmem:[%s1 + $0x1f8] sm:$0xff]
    %v225 = vld [vmem:[%s1 + $0x200] sm:$0xff]
    %v226 = vld [vmem:[%s1 + $0x208] sm:$0xff]
    %v227 = vld [vmem:[%s1 + $0x210] sm:$0xff]
    %v228 = vld [vmem:[%s1 + $0x218] sm:$0xff]
    %v229 = vld [vmem:[%s1 + $0x220] sm:$0xff]
    %v230 = vld [vmem:[%s1 + $0x228] sm:$0xff]
    %v231 = vld [vmem:[%s1 + $0x230] sm:$0xff]
    %v232 = vld [vmem:[%s1 + $0x238] sm:$0xff]
    %v233 = vld [vmem:[%s1 + $0x240] sm:$0xff]
    %v234 = vld [vmem:[%s1 + $0x248] sm:$0xff]
    %v235 = vld [vmem:[%s1 + $0x250] sm:$0xff]
    %v236 = vld [vmem:[%s1 + $0x258] sm:$0xff]
    %v237 = vld [vmem:[%s1 + $0x260] sm:$0xff]
    %v238 = vld [vmem:[%s1 + $0x268] sm:$0xff]
    %v239 = vld [vmem:[%s1 + $0x270] sm:$0xff]
    %v240 = vld [vmem:[%s1 + $0x278] sm:$0xff]
    %v241 = vld [vmem:[%s1 + $0x280] sm:$0xff]
    %v242 = vld [vmem:[%s1 + $0x288] sm:$0xff]
    %v243 = vld [vmem:[%s1 + $0x290] sm:$0xff]
    %v244 = vld [vmem:[%s1 + $0x298] sm:$0xff]
    %v245 = vld [vmem:[%s1 + $0x2a0] sm:$0xff]
    %v246 = vld [vmem:[%s1 + $0x2a8] sm:$0xff]
    %v247 = vld [vmem:[%s1 + $0x2b0] sm:$0xff]
    %v248 = vld [vmem:[%s1 + $0x2b8] sm:$0xff]
    %v249 = vld [vmem:[%s1 + $0x2c0] sm:$0xff]
    %v250 = vld [vmem:[%s1 + $0x2c8] sm:$0xff]
    %v251 = vld [vmem:[%s1 + $0x2d0] sm:$0xff]
    %v252 = vld [vmem:[%s1 + $0x2d8] sm:$0xff]
    %v253 = vld [vmem:[%s1 + $0x2e0] sm:$0xff]
    %v254 = vld [vmem:[%s1 + $0x2e8] sm:$0xff]
    %v255 = vld [vmem:[%s1 + $0x2f0] sm:$0xff]
    %v256 = vld [vmem:[%s1 + $0x2f8] sm:$0xff]
    %v257 = vld [vmem:[%s1 + $0x300] sm:$0xff]
    %v258 = vld [vmem:[%s1 + $0x308] sm:$0xff]
    %v259 = vld [vmem:[%s1 + $0x310] sm:$0xff]
    %v260 = vld [vmem:[%s1 + $0x318] sm:$0xff]
    %v261 = vld [vmem:[%s1 + $0x320] sm:$0xff]
    %v262 = vld [vmem:[%s1 + $0x328] sm:$0xff]
    %v263 = vld [vmem:[%s1 + $0x330] sm:$0xff]
    %v264 = vld [vmem:[%s1 + $0x338] sm:$0xff]
    %v265 = vld [vmem:[%s1 + $0x340] sm:$0xff]
    %v266 = vld [vmem:[%s1 + $0x348] sm:$0xff]
    %v267 = vld [vmem:[%s1 + $0x350] sm:$0xff]
    %v268 = vld [vmem:[%s1 + $0x358] sm:$0xff]
    %v269 = vld [vmem:[%s1 + $0x360] sm:$0xff]
    %v270 = vld [vmem:[%s1 + $0x368] sm:$0xff]
    %v271 = vld [vmem:[%s1 + $0x370] sm:$0xff]
    %v272 = vld [vmem:[%s1 + $0x378] sm:$0xff]
    %v273 = vld [vmem:[%s1 + $0x380] sm:$0xff]
    %v274 = vld [vmem:[%s1 + $0x388] sm:$0xff]
    %v275 = vld [vmem:[%s1 + $0x390] sm:$0xff]
    %v276 = vld [vmem:[%s1 + $0x398] sm:$0xff]
    %v277 = vld [vmem:[%s1 + $0x3a0] sm:$0xff]
    %v278 = vld [vmem:[%s1 + $0x3a8] sm:$0xff]
    %v279 = vld [vmem:[%s1 + $0x3b0] sm:$0xff]
    %v280 = vld [vmem:[%s1 + $0x3b8] sm:$0xff]
    %v281 = vld [vmem:[%s1 + $0x3c0] sm:$0xff]
    %v282 = vld [vmem:[%s1 + $0x3c8] sm:$0xff]
    %v283 = vld [vmem:[%s1 + $0x3d0] sm:$0xff]
    %v284 = vld [vmem:[%s1 + $0x3d8] sm:$0xff]
    %v285 = vld [vmem:[%s1 + $0x3e0] sm:$0xff]
    %v286 = vld [vmem:[%s1 + $0x3e8] sm:$0xff]
    %v287 = vld [vmem:[%s1 + $0x3f0] sm:$0xff]
    %v288 = vld [vmem:[%s1 + $0x3f8] sm:$0xff]
    %v289 = vld [vmem:[%s1 + $0x400] sm:$0xff]
    %v290 = vld [vmem:[%s1 + $0x408] sm:$0xff]
    %v291 = vld [vmem:[%s1 + $0x410] sm:$0xff]
    %v292 = vld [vmem:[%s1 + $0x418] sm:$0xff]
    %v293 = vld [vmem:[%s1 + $0x420] sm:$0xff]
    %v294 = vld [vmem:[%s1 + $0x428] sm:$0xff]
    %v295 = vld [vmem:[%s1 + $0x430] sm:$0xff]
    %v296 = vld [vmem:[%s1 + $0x438] sm:$0xff]
    %v297 = vld [vmem:[%s1 + $0x440] sm:$0xff]
    %v298 = vld [vmem:[%s1 + $0x448] sm:$0xff]
    %v299 = vld [vmem:[%s1 + $0x450] sm:$0xff]
    %v300 = vld [vmem:[%s1 + $0x458] sm:$0xff]
    %v301 = vld [vmem:[%s1 + $0x460] sm:$0xff]
    %v302 = vld [vmem:[%s1 + $0x468] sm:$0xff]
    %v303 = vld [vmem:[%s1 + $0x470] sm:$0xff]
    %v304 = vld [vmem:[%s1 + $0x478] sm:$0xff]
    %v305 = vld [vmem:[%s1 + $0x480] sm:$0xff]
    %v306 = vld [vmem:[%s1 + $0x488] sm:$0xff]
    %v307 = vld [vmem:[%s1 + $0x490] sm:$0xff]
    %v308 = vld [vmem:[%s1 + $0x498] sm:$0xff]
    %v309 = vld [vmem:[%s1 + $0x4a0] sm:$0xff]
    %v310 = vld [vmem:[%s1 + $0x4a8] sm:$0xff]
    %v311 = vld [vmem:[%s1 + $0x4b0] sm:$0xff]
    %v312 = vld [vmem:[%s1 + $0x4b8] sm:$0xff]
    %v313 = vld [vmem:[%s1 + $0x4c0] sm:$0xff]
    %v314 = vld [vmem:[%s1 + $0x4c8] sm:$0xff]
    %v315 = vld [vmem:[%s1 + $0x4d0] sm:$0xff]
    %v316 = vld [vmem:[%s1 + $0x4d8] sm:$0xff]
    %v317 = vld [vmem:[%s1 + $0x4e0] sm:$0xff]
    %v318 = vld [vmem:[%s1 + $0x4e8] sm:$0xff]
    %v319 = vld [vmem:[%s1 + $0x4f0] sm:$0xff]
    %v320 = vld [vmem:[%s1 + $0x4f8] sm:$0xff]
    %v321 = vld [vmem:[%s1 + $0x500] sm:$0xff]
    %v322 = vld [vmem:[%s1 + $0x508] sm:$0xff]
    %v323 = vld [vmem:[%s1 + $0x510] sm:$0xff]
    %v324 = vld [vmem:[%s1 + $0x518] sm:$0xff]
    %v325 = vld [vmem:[%s1 + $0x520] sm:$0xff]
    %v326 = vld [vmem:[%s1 + $0x528] sm:$0xff]
    %v327 = vld [vmem:[%s1 + $0x530] sm:$0xff]
    %v328 = vld [vmem:[%s1 + $0x538] sm:$0xff]
    %v329 = vld [vmem:[%s1 + $0x540] sm:$0xff]
    %v330 = vld [vmem:[%s1 + $0x548] sm:$0xff]
    %v331 = vld [vmem:[%s1 + $0x550] sm:$0xff]
    %v332 = vld [vmem:[%s1 + $0x558] sm:$0xff]
    %v333 = vld [vmem:[%s1 + $0x560] sm:$0xff]
    %v334 = vld [vmem:[%s1 + $0x568] sm:$0xff]
    %v335 = vld [vmem:[%s1 + $0x570] sm:$0xff]
    %v336 = vld [vmem:[%s1 + $0x578] sm:$0xff]
    %v337 = vld [vmem:[%s1 + $0x580] sm:$0xff]
    %v338 = vld [vmem:[%s1 + $0x588] sm:$0xff]
    %v339 = vld [vmem:[%s1 + $0x590] sm:$0xff]
    %v340 = vld [vmem:[%s1 + $0x598] sm:$0xff]
    %v341 = vld [vmem:[%s1 + $0x5a0] sm:$0xff]
    %v342 = vld [vmem:[%s1 + $0x5a8] sm:$0xff]
    %v343 = vld [vmem:[%s1 + $0x5b0] sm:$0xff]
    %v344 = vld [vmem:[%s1 + $0x5b8] sm:$0xff]
    %v345 = vld [vmem:[%s1 + $0x5c0] sm:$0xff]
    %v346 = vld [vmem:[%s1 + $0x5c8] sm:$0xff]
    %v347 = vld [vmem:[%s1 + $0x5d0] sm:$0xff]
    %v348 = vld [vmem:[%s1 + $0x5d8] sm:$0xff]
    %v349 = vld [vmem:[%s1 + $0x5e0] sm:$0xff]
    %v350 = vld [vmem:[%s1 + $0x5e8] sm:$0xff]
    %v351 = vld [vmem:[%s1 + $0x5f0] sm:$0xff]
    %v352 = vld [vmem:[%s1 + $0x5f8] sm:$0xff]
    %v353 = vld [vmem:[%s1 + $0x600] sm:$0xff]
    %v354 = vld [vmem:[%s1 + $0x608] sm:$0xff]
    %v355 = vld [vmem:[%s1 + $0x610] sm:$0xff]
    %v356 = vld [vmem:[%s1 + $0x618] sm:$0xff]
    %v357 = vld [vmem:[%s1 + $0x620] sm:$0xff]
    %v358 = vld [vmem:[%s1 + $0x628] sm:$0xff]
    %v359 = vld [vmem:[%s1 + $0x630] sm:$0xff]
    %v360 = vld [vmem:[%s1 + $0x638] sm:$0xff]
    %v361 = vld [vmem:[%s1 + $0x640] sm:$0xff]
    %v362 = vld [vmem:[%s1 + $0x648] sm:$0xff]
    %v363 = vld [vmem:[%s1 + $0x650] sm:$0xff]
    %v364 = vld [vmem:[%s1 + $0x658] sm:$0xff]
    %v365 = vld [vmem:[%s1 + $0x660] sm:$0xff]
    %v366 = vld [vmem:[%s1 + $0x668] sm:$0xff]
    %v367 = vld [vmem:[%s1 + $0x670] sm:$0xff]
    %v368 = vld [vmem:[%s1 + $0x678] sm:$0xff]
    %v369 = vld [vmem:[%s1 + $0x680] sm:$0xff]
    %v370 = vld [vmem:[%s1 + $0x688] sm:$0xff]
    %v371 = vld [vmem:[%s1 + $0x690] sm:$0xff]
    %v372 = vld [vmem:[%s1 + $0x698] sm:$0xff]
    %v373 = vld [vmem:[%s1 + $0x6a0] sm:$0xff]
    %v374 = vld [vmem:[%s1 + $0x6a8] sm:$0xff]
    %v375 = vld [vmem:[%s1 + $0x6b0] sm:$0xff]
    %v376 = vld [vmem:[%s1 + $0x6b8] sm:$0xff]
    %v377 = vld [vmem:[%s1 + $0x6c0] sm:$0xff]
    %v378 = vld [vmem:[%s1 + $0x6c8] sm:$0xff]
    %v379 = vld [vmem:[%s1 + $0x6d0] sm:$0xff]
    %v380 = vld [vmem:[%s1 + $0x6d8] sm:$0xff]
    %v381 = vld [vmem:[%s1 + $0x6e0] sm:$0xff]
    %v382 = vld [vmem:[%s1 + $0x6e8] sm:$0xff]
    %v383 = vld [vmem:[%s1 + $0x6f0] sm:$0xff]
    %v384 = vld [vmem:[%s1 + $0x6f8] sm:$0xff]
    %v385 = vld [vmem:[%s1 + $0x700] sm:$0xff]
    %v386 = vld [vmem:[%s1 + $0x708] sm:$0xff]
    %v387 = vld [vmem:[%s1 + $0x710] sm:$0xff]
    %v388 = vld [vmem:[%s1 + $0x718] sm:$0xff]
    %v389 = vld [vmem:[%s1 + $0x720] sm:$0xff]
    %v390 = vld [vmem:[%s1 + $0x728] sm:$0xff]
    %v391 = vld [vmem:[%s1 + $0x730] sm:$0xff]
    %v392 = vld [vmem:[%s1 + $0x738] sm:$0xff]
    %v393 = vld [vmem:[%s1 + $0x740] sm:$0xff]
    %v394 = vld [vmem:[%s1 + $0x748] sm:$0xff]
    %v395 = vld [vmem:[%s1 + $0x750] sm:$0xff]
    %v396 = vld [vmem:[%s1 + $0x758] sm:$0xff]
    %v397 = vld [vmem:[%s1 + $0x760] sm:$0xff]
    %v398 = vld [vmem:[%s1 + $0x768] sm:$0xff]
    %v399 = vld [vmem:[%s1 + $0x770] sm:$0xff]
    %v400 = vld [vmem:[%s1 + $0x778] sm:$0xff]
    %v401 = vld [vmem:[%s1 + $0x780] sm:$0xff]
    %v402 = vld [vmem:[%s1 + $0x788] sm:$0xff]
    %v403 = vld [vmem:[%s1 + $0x790] sm:$0xff]
    %v404 = vld [vmem:[%s1 + $0x798] sm:$0xff]
    %v405 = vld [vmem:[%s1 + $0x7a0] sm:$0xff]
    %v406 = vld [vmem:[%s1 + $0x7a8] sm:$0xff]
    %v407 = vld [vmem:[%s1 + $0x7b0] sm:$0xff]
    %v408 = vld [vmem:[%s1 + $0x7b8] sm:$0xff]
    %v409 = vld [vmem:[%s1 + $0x7c0] sm:$0xff]
    %v410 = vld [vmem:[%s1 + $0x7c8] sm:$0xff]
    %v411 = vld [vmem:[%s1 + $0x7d0] sm:$0xff]
    %v412 = vld [vmem:[%s1 + $0x7d8] sm:$0xff]
    %v413 = vld [vmem:[%s1 + $0x7e0] sm:$0xff]
    %v414 = vld [vmem:[%s1 + $0x7e8] sm:$0xff]
    %v415 = vld [vmem:[%s1 + $0x7f0] sm:$0xff]
    %v416 = vld [vmem:[%s1 + $0x7f8] sm:$0xff]
    %v417 = vld [vmem:[%s1 + $0x800] sm:$0xff]
    %v418 = vld [vmem:[%s1 + $0x808] sm:$0xff]
    %v419 = vld [vmem:[%s1 + $0x810] sm:$0xff]
    %v420 = vld [vmem:[%s1 + $0x818] sm:$0xff]
    %v421 = vld [vmem:[%s1 + $0x820] sm:$0xff]
    %v422 = vld [vmem:[%s1 + $0x828] sm:$0xff]
    %v423 = vld [vmem:[%s1 + $0x830] sm:$0xff]
    %v424 = vld [vmem:[%s1 + $0x838] sm:$0xff]
    %v425 = vld [vmem:[%s1 + $0x840] sm:$0xff]
    %v426 = vld [vmem:[%s1 + $0x848] sm:$0xff]
    %v427 = vld [vmem:[%s1 + $0x850] sm:$0xff]
    %v428 = vld [vmem:[%s1 + $0x858] sm:$0xff]
    %v429 = vld [vmem:[%s1 + $0x860] sm:$0xff]
    %v430 = vld [vmem:[%s1 + $0x868] sm:$0xff]
    %v431 = vld [vmem:[%s1 + $0x870] sm:$0xff]
    %v432 = vld [vmem:[%s1 + $0x878] sm:$0xff]
    %v433 = vld [vmem:[%s1 + $0x880] sm:$0xff]
    %v434 = vld [vmem:[%s1 + $0x888] sm:$0xff]
    %v435 = vld [vmem:[%s1 + $0x890] sm:$0xff]
    %v436 = vld [vmem:[%s1 + $0x898] sm:$0xff]
    %v437 = vld [vmem:[%s1 + $0x8a0] sm:$0xff]
    %v438 = vld [vmem:[%s1 + $0x8a8] sm:$0xff]
    %v439 = vld [vmem:[%s1 + $0x8b0] sm:$0xff]
    %v440 = vld [vmem:[%s1 + $0x8b8] sm:$0xff]
    %v441 = vld [vmem:[%s1 + $0x8c0] sm:$0xff]
    %v442 = vld [vmem:[%s1 + $0x8c8] sm:$0xff]
    %v443 = vld [vmem:[%s1 + $0x8d0] sm:$0xff]
    %v444 = vld [vmem:[%s1 + $0x8d8] sm:$0xff]
    %v445 = vld [vmem:[%s1 + $0x8e0] sm:$0xff]
    %v446 = vld [vmem:[%s1 + $0x8e8] sm:$0xff]
    %v447 = vld [vmem:[%s1 + $0x8f0] sm:$0xff]
    %v448 = vld [vmem:[%s1 + $0x8f8] sm:$0xff]
    %v449 = vld [vmem:[%s1 + $0x900] sm:$0xff]
    %v450 = vld [vmem:[%s1 + $0x908] sm:$0xff]
    %v451 = vld [vmem:[%s1 + $0x910] sm:$0xff]
    %v452 = vld [vmem:[%s1 + $0x918] sm:$0xff]
    %v453 = vld [vmem:[%s1 + $0x920] sm:$0xff]
    %v454 = vld [vmem:[%s1 + $0x928] sm:$0xff]
    %v455 = vld [vmem:[%s1 + $0x930] sm:$0xff]
    %v456 = vld [vmem:[%s1 + $0x938] sm:$0xff]
    %v457 = vld [vmem:[%s1 + $0x940] sm:$0xff]
    %v458 = vld [vmem:[%s1 + $0x948] sm:$0xff]
    %v459 = vld [vmem:[%s1 + $0x950] sm:$0xff]
    %v460 = vld [vmem:[%s1 + $0x958] sm:$0xff]
    %v461 = vld [vmem:[%s1 + $0x960] sm:$0xff]
    %v462 = vld [vmem:[%s1 + $0x968] sm:$0xff]
    %v463 = vld [vmem:[%s1 + $0x970] sm:$0xff]
    %v464 = vld [vmem:[%s1 + $0x978] sm:$0xff]
    %v465 = vld [vmem:[%s1 + $0x980] sm:$0xff]
    %v466 = vld [vmem:[%s1 + $0x988] sm:$0xff]
    %v467 = vld [vmem:[%s1 + $0x990] sm:$0xff]
    %v468 = vld [vmem:[%s1 + $0x998] sm:$0xff]
    %v469 = vld [vmem:[%s1 + $0x9a0] sm:$0xff]
    %v470 = vld [vmem:[%s1 + $0x9a8] sm:$0xff]
    %v471 = vld [vmem:[%s1 + $0x9b0] sm:$0xff]
    %v472 = vld [vmem:[%s1 + $0x9b8] sm:$0xff]
    %v473 = vld [vmem:[%s1 + $0x9c0] sm:$0xff]
    %v474 = vld [vmem:[%s1 + $0x9c8] sm:$0xff]
    %v475 = vld [vmem:[%s1 + $0x9d0] sm:$0xff]
    %v476 = vld [vmem:[%s1 + $0x9d8] sm:$0xff]
    %v477 = vld [vmem:[%s1 + $0x9e0] sm:$0xff]
    %v478 = vld [vmem:[%s1 + $0x9e8] sm:$0xff]
    %v479 = vld [vmem:[%s1 + $0x9f0] sm:$0xff]
    %v480 = vld [vmem:[%s1 + $0x9f8] sm:$0xff]
    %v481 = vld [vmem:[%s1 + $0xa00] sm:$0xff]
    %v482 = vld [vmem:[%s1 + $0xa08] sm:$0xff]
    %v483 = vld [vmem:[%s1 + $0xa10] sm:$0xff]
    %v484 = vld [vmem:[%s1 + $0xa18] sm:$0xff]
    %v485 = vld [vmem:[%s1 + $0xa20] sm:$0xff]
    %v486 = vld [vmem:[%s1 + $0xa28] sm:$0xff]
    %v487 = vld [vmem:[%s1 + $0xa30] sm:$0xff]
    %v488 = vld [vmem:[%s1 + $0xa38] sm:$0xff]
    %v489 = vld [vmem:[%s1 + $0xa40] sm:$0xff]
    %v490 = vld [vmem:[%s1 + $0xa48] sm:$0xff]
    %v491 = vld [vmem:[%s1 + $0xa50] sm:$0xff]
    %v492 = vld [vmem:[%s1 + $0xa58] sm:$0xff]
    %v493 = vld [vmem:[%s1 + $0xa60] sm:$0xff]
    %v494 = vld [vmem:[%s1 + $0xa68] sm:$0xff]
    %v495 = vld [vmem:[%s1 + $0xa70] sm:$0xff]
    %v496 = vld [vmem:[%s1 + $0xa78] sm:$0xff]
    %v497 = vld [vmem:[%s1 + $0xa80] sm:$0xff]
    %v498 = vld [vmem:[%s1 + $0xa88] sm:$0xff]
    %v499 = vld [vmem:[%s1 + $0xa90] sm:$0xff]
    %v500 = vld [vmem:[%s1 + $0xa98] sm:$0xff]
    %v501 = vld [vmem:[%s1 + $0xaa0] sm:$0xff]
    %v502 = vld [vmem:[%s1 + $0xaa8] sm:$0xff]
    %v503 = vld [vmem:[%s1 + $0xab0] sm:$0xff]
    %v504 = vld [vmem:[%s1 + $0xab8] sm:$0xff]
    %v505 = vld [vmem:[%s1 + $0xac0] sm:$0xff]
    %v506 = vld [vmem:[%s1 + $0xac8] sm:$0xff]
    %v507 = vld [vmem:[%s1 + $0xad0] sm:$0xff]
    %v508 = vld [vmem:[%s1 + $0xad8] sm:$0xff]
    %v509 = vld [vmem:[%s1 + $0xae0] sm:$0xff]
    %v510 = vld [vmem:[%s1 + $0xae8] sm:$0xff]
    %v511 = vld [vmem:[%s1 + $0xaf0] sm:$0xff]
    %v512 = vld [vmem:[%s1 + $0xaf8] sm:$0xff]
    %v513 = vld [vmem:[%s1 + $0xb00] sm:$0xff]
    %v514 = vld [vmem:[%s1 + $0xb08] sm:$0xff]
    %v515 = vld [vmem:[%s1 + $0xb10] sm:$0xff]
    %v516 = vld [vmem:[%s1 + $0xb18] sm:$0xff]
    %v517 = vld [vmem:[%s1 + $0xb20] sm:$0xff]
    %v518 = vld [vmem:[%s1 + $0xb28] sm:$0xff]
    %v519 = vld [vmem:[%s1 + $0xb30] sm:$0xff]
    %v520 = vld [vmem:[%s1 + $0xb38] sm:$0xff]
    %v521 = vld [vmem:[%s1 + $0xb40] sm:$0xff]
    %v522 = vld [vmem:[%s1 + $0xb48] sm:$0xff]
    %v523 = vld [vmem:[%s1 + $0xb50] sm:$0xff]
    %v524 = vld [vmem:[%s1 + $0xb58] sm:$0xff]
    %v525 = vld [vmem:[%s1 + $0xb60] sm:$0xff]
    %v526 = vld [vmem:[%s1 + $0xb68] sm:$0xff]
    %v527 = vld [vmem:[%s1 + $0xb70] sm:$0xff]
    %v528 = vld [vmem:[%s1 + $0xb78] sm:$0xff]
    %v529 = vld [vmem:[%s1 + $0xb80] sm:$0xff]
    %v530 = vld [vmem:[%s1 + $0xb88] sm:$0xff]
    %v531 = vld [vmem:[%s1 + $0xb90] sm:$0xff]
    %v532 = vld [vmem:[%s1 + $0xb98] sm:$0xff]
    %v533 = vld [vmem:[%s1 + $0xba0] sm:$0xff]
    %v534 = vld [vmem:[%s1 + $0xba8] sm:$0xff]
    %v535 = vld [vmem:[%s1 + $0xbb0] sm:$0xff]
    %v536 = vld [vmem:[%s1 + $0xbb8] sm:$0xff]
    %v537 = vld [vmem:[%s1 + $0xbc0] sm:$0xff]
    %v538 = vld [vmem:[%s1 + $0xbc8] sm:$0xff]
    %v539 = vld [vmem:[%s1 + $0xbd0] sm:$0xff]
    %v540 = vld [vmem:[%s1 + $0xbd8] sm:$0xff]
    %v541 = vld [vmem:[%s1 + $0xbe0] sm:$0xff]
    %v542 = vld [vmem:[%s1 + $0xbe8] sm:$0xff]
    %v543 = vld [vmem:[%s1 + $0xbf0] sm:$0xff]
    %v544 = vld [vmem:[%s1 + $0xbf8] sm:$0xff]
    %v545 = vld [vmem:[%s1 + $0xc00] sm:$0xff]
    %v546 = vld [vmem:[%s1 + $0xc08] sm:$0xff]
    %v547 = vld [vmem:[%s1 + $0xc10] sm:$0xff]
    %v548 = vld [vmem:[%s1 + $0xc18] sm:$0xff]
    %v549 = vld [vmem:[%s1 + $0xc20] sm:$0xff]
    %v550 = vld [vmem:[%s1 + $0xc28] sm:$0xff]
    %v551 = vld [vmem:[%s1 + $0xc30] sm:$0xff]
    %v552 = vld [vmem:[%s1 + $0xc38] sm:$0xff]
    %v553 = vld [vmem:[%s1 + $0xc40] sm:$0xff]
    %v554 = vld [vmem:[%s1 + $0xc48] sm:$0xff]
    %v555 = vld [vmem:[%s1 + $0xc50] sm:$0xff]
    %v556 = vld [vmem:[%s1 + $0xc58] sm:$0xff]
    %v557 = vld [vmem:[%s1 + $0xc60] sm:$0xff]
    %v558 = vld [vmem:[%s1 + $0xc68] sm:$0xff]
    %v559 = vld [vmem:[%s1 + $0xc70] sm:$0xff]
    %v560 = vld [vmem:[%s1 + $0xc78] sm:$0xff]
    %v561 = vld [vmem:[%s1 + $0xc80] sm:$0xff]
    %v562 = vld [vmem:[%s1 + $0xc88] sm:$0xff]
    %v563 = vld [vmem:[%s1 + $0xc90] sm:$0xff]
    %v564 = vld [vmem:[%s1 + $0xc98] sm:$0xff]
    %v565 = vld [vmem:[%s1 + $0xca0] sm:$0xff]
    %v566 = vld [vmem:[%s1 + $0xca8] sm:$0xff]
    %v567 = vld [vmem:[%s1 + $0xcb0] sm:$0xff]
    %v568 = vld [vmem:[%s1 + $0xcb8] sm:$0xff]
    %v569 = vld [vmem:[%s1 + $0xcc0] sm:$0xff]
    %v570 = vld [vmem:[%s1 + $0xcc8] sm:$0xff]
    %v571 = vld [vmem:[%s1 + $0xcd0] sm:$0xff]
    %v572 = vld [vmem:[%s1 + $0xcd8] sm:$0xff]
    %v573 = vld [vmem:[%s1 + $0xce0] sm:$0xff]
    %v574 = vld [vmem:[%s1 + $0xce8] sm:$0xff]
    %v575 = vld [vmem:[%s1 + $0xcf0] sm:$0xff]
    %v576 = vld [vmem:[%s1 + $0xcf8] sm:$0xff]
    %v577 = vld [vmem:[%s1 + $0xd00] sm:$0xff]
    %v578 = vld [vmem:[%s1 + $0xd08] sm:$0xff]
    %v579 = vld [vmem:[%s1 + $0xd10] sm:$0xff]
    %v580 = vld [vmem:[%s1 + $0xd18] sm:$0xff]
    %v581 = vld [vmem:[%s1 + $0xd20] sm:$0xff]
    %v582 = vld [vmem:[%s1 + $0xd28] sm:$0xff]
    %v583 = vld [vmem:[%s1 + $0xd30] sm:$0xff]
    %v584 = vld [vmem:[%s1 + $0xd38] sm:$0xff]
    %v585 = vld [vmem:[%s1 + $0xd40] sm:$0xff]
    %v586 = vld [vmem:[%s1 + $0xd48] sm:$0xff]
    %v587 = vld [vmem:[%s1 + $0xd50] sm:$0xff]
    %v588 = vld [vmem:[%s1 + $0xd58] sm:$0xff]
    %v589 = vld [vmem:[%s1 + $0xd60] sm:$0xff]
    %v590 = vld [vmem:[%s1 + $0xd68] sm:$0xff]
    %v591 = vld [vmem:[%s1 + $0xd70] sm:$0xff]
    %v592 = vld [vmem:[%s1 + $0xd78] sm:$0xff]
    %v593 = vld [vmem:[%s1 + $0xd80] sm:$0xff]
    %v594 = vld [vmem:[%s1 + $0xd88] sm:$0xff]
    %v595 = vld [vmem:[%s1 + $0xd90] sm:$0xff]
    %v596 = vld [vmem:[%s1 + $0xd98] sm:$0xff]
    %v597 = vld [vmem:[%s1 + $0xda0] sm:$0xff]
    %v598 = vld [vmem:[%s1 + $0xda8] sm:$0xff]
    %v599 = vld [vmem:[%s1 + $0xdb0] sm:$0xff]
    %v600 = vld [vmem:[%s1 + $0xdb8] sm:$0xff]
    %v601 = vld [vmem:[%s1 + $0xdc0] sm:$0xff]
    %v602 = vld [vmem:[%s1 + $0xdc8] sm:$0xff]
    %v603 = vld [vmem:[%s1 + $0xdd0] sm:$0xff]
    %v604 = vld [vmem:[%s1 + $0xdd8] sm:$0xff]
    %v605 = vld [vmem:[%s1 + $0xde0] sm:$0xff]
    %v606 = vld [vmem:[%s1 + $0xde8] sm:$0xff]
    %v607 = vld [vmem:[%s1 + $0xdf0] sm:$0xff]
    %v608 = vld [vmem:[%s1 + $0xdf8] sm:$0xff]
    %v609 = vld [vmem:[%s1 + $0xe00] sm:$0xff]
    %v610 = vld [vmem:[%s1 + $0xe08] sm:$0xff]
    %v611 = vld [vmem:[%s1 + $0xe10] sm:$0xff]
    %v612 = vld [vmem:[%s1 + $0xe18] sm:$0xff]
    %v613 = vld [vmem:[%s1 + $0xe20] sm:$0xff]
    %v614 = vld [vmem:[%s1 + $0xe28] sm:$0xff]
    %v615 = vld [vmem:[%s1 + $0xe30] sm:$0xff]
    %v616 = vld [vmem:[%s1 + $0xe38] sm:$0xff]
    %v617 = vld [vmem:[%s1 + $0xe40] sm:$0xff]
    %v618 = vld [vmem:[%s1 + $0xe48] sm:$0xff]
    %v619 = vld [vmem:[%s1 + $0xe50] sm:$0xff]
    %v620 = vld [vmem:[%s1 + $0xe58] sm:$0xff]
    %v621 = vld [vmem:[%s1 + $0xe60] sm:$0xff]
    %v622 = vld [vmem:[%s1 + $0xe68] sm:$0xff]
    %v623 = vld [vmem:[%s1 + $0xe70] sm:$0xff]
    %v624 = vld [vmem:[%s1 + $0xe78] sm:$0xff]
    %v625 = vld [vmem:[%s1 + $0xe80] sm:$0xff]
    %v626 = vld [vmem:[%s1 + $0xe88] sm:$0xff]
    %v627 = vld [vmem:[%s1 + $0xe90] sm:$0xff]
    %v628 = vld [vmem:[%s1 + $0xe98] sm:$0xff]
    %v629 = vld [vmem:[%s1 + $0xea0] sm:$0xff]
    %v630 = vld [vmem:[%s1 + $0xea8] sm:$0xff]
    %v631 = vld [vmem:[%s1 + $0xeb0] sm:$0xff]
    %v632 = vld [vmem:[%s1 + $0xeb8] sm:$0xff]
    %v633 = vld [vmem:[%s1 + $0xec0] sm:$0xff]
    %v634 = vld [vmem:[%s1 + $0xec8] sm:$0xff]
    %v635 = vld [vmem:[%s1 + $0xed0] sm:$0xff]
    %v636 = vld [vmem:[%s1 + $0xed8] sm:$0xff]
    %v637 = vld [vmem:[%s1 + $0xee0] sm:$0xff]
    %v638 = vld [vmem:[%s1 + $0xee8] sm:$0xff]
    %v639 = vld [vmem:[%s1 + $0xef0] sm:$0xff]
    %v640 = vld [vmem:[%s1 + $0xef8] sm:$0xff]
    %v641 = vld [vmem:[%s1 + $0xf00] sm:$0xff]
    %v642 = vld [vmem:[%s1 + $0xf08] sm:$0xff]
    %v643 = vld [vmem:[%s1 + $0xf10] sm:$0xff]
    %v644 = vld [vmem:[%s1 + $0xf18] sm:$0xff]
    %v645 = vld [vmem:[%s1 + $0xf20] sm:$0xff]
    %v646 = vld [vmem:[%s1 + $0xf28] sm:$0xff]
    %v647 = vld [vmem:[%s1 + $0xf30] sm:$0xff]
    %v648 = vld [vmem:[%s1 + $0xf38] sm:$0xff]
    %v649 = vld [vmem:[%s1 + $0xf40] sm:$0xff]
    %v650 = vld [vmem:[%s1 + $0xf48] sm:$0xff]
    %v651 = vld [vmem:[%s1 + $0xf50] sm:$0xff]
    %v652 = vld [vmem:[%s1 + $0xf58] sm:$0xff]
    %v653 = vld [vmem:[%s1 + $0xf60] sm:$0xff]
    %v654 = vld [vmem:[%s1 + $0xf68] sm:$0xff]
    %v655 = vld [vmem:[%s1 + $0xf70] sm:$0xff]
    %v656 = vld [vmem:[%s1 + $0xf78] sm:$0xff]
    %v657 = vld [vmem:[%s1 + $0xf80] sm:$0xff]
    %v658 = vld [vmem:[%s1 + $0xf88] sm:$0xff]
    %v659 = vld [vmem:[%s1 + $0xf90] sm:$0xff]
    %v660 = vld [vmem:[%s1 + $0xf98] sm:$0xff]
    %v661 = vld [vmem:[%s1 + $0xfa0] sm:$0xff]
    %v662 = vld [vmem:[%s1 + $0xfa8] sm:$0xff]
    %v663 = vld [vmem:[%s1 + $0xfb0] sm:$0xff]
    %v664 = vld [vmem:[%s1 + $0xfb8] sm:$0xff]
    %v665 = vld [vmem:[%s1 + $0xfc0] sm:$0xff]
    %v666 = vld [vmem:[%s1 + $0xfc8] sm:$0xff]
    %v667 = vld [vmem:[%s1 + $0xfd0] sm:$0xff]
    %v668 = vld [vmem:[%s1 + $0xfd8] sm:$0xff]
    %v669 = vld [vmem:[%s1 + $0xfe0] sm:$0xff]
    %v670 = vld [vmem:[%s1 + $0xfe8] sm:$0xff]
    %v671 = vld [vmem:[%s1 + $0xff0] sm:$0xff]
    %v672 = vld [vmem:[%s1 + $0xff8] sm:$0xff]
    %v673 = vld [vmem:[%s1 + $0x1000] sm:$0xff]
    %v674 = vld [vmem:[%s1 + $0x1008] sm:$0xff]
    %v675 = vld [vmem:[%s1 + $0x1010] sm:$0xff]
    %v676 = vld [vmem:[%s1 + $0x1018] sm:$0xff]
    %v677 = vld [vmem:[%s1 + $0x1020] sm:$0xff]
    %v678 = vld [vmem:[%s1 + $0x1028] sm:$0xff]
    %v679 = vld [vmem:[%s1 + $0x1030] sm:$0xff]
    %v680 = vld [vmem:[%s1 + $0x1038] sm:$0xff]
    %v681 = vld [vmem:[%s1 + $0x1040] sm:$0xff]
    %v682 = vld [vmem:[%s1 + $0x1048] sm:$0xff]
    %v683 = vld [vmem:[%s1 + $0x1050] sm:$0xff]
    %v684 = vld [vmem:[%s1 + $0x1058] sm:$0xff]
    %v685 = vld [vmem:[%s1 + $0x1060] sm:$0xff]
    %v686 = vld [vmem:[%s1 + $0x1068] sm:$0xff]
    %v687 = vld [vmem:[%s1 + $0x1070] sm:$0xff]
    %v688 = vld [vmem:[%s1 + $0x1078] sm:$0xff]
    %v689 = vld [vmem:[%s1 + $0x1080] sm:$0xff]
    %v690 = vld [vmem:[%s1 + $0x1088] sm:$0xff]
    %v691 = vld [vmem:[%s1 + $0x1090] sm:$0xff]
    %v692 = vld [vmem:[%s1 + $0x1098] sm:$0xff]
    %v693 = vld [vmem:[%s1 + $0x10a0] sm:$0xff]
    %v694 = vld [vmem:[%s1 + $0x10a8] sm:$0xff]
    %v695 = vld [vmem:[%s1 + $0x10b0] sm:$0xff]
    %v696 = vld [vmem:[%s1 + $0x10b8] sm:$0xff]
    %v697 = vld [vmem:[%s1 + $0x10c0] sm:$0xff]
    %v698 = vld [vmem:[%s1 + $0x10c8] sm:$0xff]
    %v699 = vld [vmem:[%s1 + $0x10d0] sm:$0xff]
    %v700 = vld [vmem:[%s1 + $0x10d8] sm:$0xff]
    %v701 = vld [vmem:[%s1 + $0x10e0] sm:$0xff]
    %v702 = vld [vmem:[%s1 + $0x10e8] sm:$0xff]
    %v703 = vld [vmem:[%s1 + $0x10f0] sm:$0xff]
    %v704 = vld [vmem:[%s1 + $0x10f8] sm:$0xff]
    %v705 = vld [vmem:[%s1 + $0x1100] sm:$0xff]
    %v706 = vld [vmem:[%s1 + $0x1108] sm:$0xff]
    %v707 = vld [vmem:[%s1 + $0x1110] sm:$0xff]
    %v708 = vld [vmem:[%s1 + $0x1118] sm:$0xff]
    %v709 = vld [vmem:[%s1 + $0x1120] sm:$0xff]
    %v710 = vld [vmem:[%s1 + $0x1128] sm:$0xff]
    %v711 = vld [vmem:[%s1 + $0x1130] sm:$0xff]
    %v712 = vld [vmem:[%s1 + $0x1138] sm:$0xff]
    %v713 = vld [vmem:[%s1 + $0x1140] sm:$0xff]
    %v714 = vld [vmem:[%s1 + $0x1148] sm:$0xff]
    %v715 = vld [vmem:[%s1 + $0x1150] sm:$0xff]
    %v716 = vld [vmem:[%s1 + $0x1158] sm:$0xff]
    %v717 = vld [vmem:[%s1 + $0x1160] sm:$0xff]
    %v718 = vld [vmem:[%s1 + $0x1168] sm:$0xff]
    %v719 = vld [vmem:[%s1 + $0x1170] sm:$0xff]
    %v720 = vld [vmem:[%s1 + $0x1178] sm:$0xff]
    %v721 = vld [vmem:[%s1 + $0x1180] sm:$0xff]
    %v722 = vld [vmem:[%s1 + $0x1188] sm:$0xff]
    %v723 = vld [vmem:[%s1 + $0x1190] sm:$0xff]
    %v724 = vld [vmem:[%s1 + $0x1198] sm:$0xff]
    %v725 = vld [vmem:[%s1 + $0x11a0] sm:$0xff]
    %v726 = vld [vmem:[%s1 + $0x11a8] sm:$0xff]
    %v727 = vld [vmem:[%s1 + $0x11b0] sm:$0xff]
    %v728 = vld [vmem:[%s1 + $0x11b8] sm:$0xff]
    %v729 = vld [vmem:[%s1 + $0x11c0] sm:$0xff]
    %v730 = vld [vmem:[%s1 + $0x11c8] sm:$0xff]
    %v731 = vld [vmem:[%s1 + $0x11d0] sm:$0xff]
    %v732 = vld [vmem:[%s1 + $0x11d8] sm:$0xff]
    %v733 = vld [vmem:[%s1 + $0x11e0] sm:$0xff]
    %v734 = vld [vmem:[%s1 + $0x11e8] sm:$0xff]
    %v735 = vld [vmem:[%s1 + $0x11f0] sm:$0xff]
    %v736 = vld [vmem:[%s1 + $0x11f8] sm:$0xff]
    %v737 = vld [vmem:[%s1 + $0x1200] sm:$0xff]
    %v738 = vld [vmem:[%s1 + $0x1208] sm:$0xff]
    %v739 = vld [vmem:[%s1 + $0x1210] sm:$0xff]
    %v740 = vld [vmem:[%s1 + $0x1218] sm:$0xff]
    %v741 = vld [vmem:[%s1 + $0x1220] sm:$0xff]
    %v742 = vld [vmem:[%s1 + $0x1228] sm:$0xff]
    %v743 = vld [vmem:[%s1 + $0x1230] sm:$0xff]
    %v744 = vld [vmem:[%s1 + $0x1238] sm:$0xff]
    %v745 = vld [vmem:[%s1 + $0x1240] sm:$0xff]
    %v746 = vld [vmem:[%s1 + $0x1248] sm:$0xff]
    %v747 = vld [vmem:[%s1 + $0x1250] sm:$0xff]
    %v748 = vld [vmem:[%s1 + $0x1258] sm:$0xff]
    %v749 = vld [vmem:[%s1 + $0x1260] sm:$0xff]
    %v750 = vld [vmem:[%s1 + $0x1268] sm:$0xff]
    %v751 = vld [vmem:[%s1 + $0x1270] sm:$0xff]
    %v752 = vld [vmem:[%s1 + $0x1278] sm:$0xff]
    %v753 = vld [vmem:[%s1 + $0x1280] sm:$0xff]
    %v754 = vld [vmem:[%s1 + $0x1288] sm:$0xff]
    %v755 = vld [vmem:[%s1 + $0x1290] sm:$0xff]
    %v756 = vld [vmem:[%s1 + $0x1298] sm:$0xff]
    %v757 = vld [vmem:[%s1 + $0x12a0] sm:$0xff]
    %v758 = vld [vmem:[%s1 + $0x12a8] sm:$0xff]
    %v759 = vld [vmem:[%s1 + $0x12b0] sm:$0xff]
    %v760 = vld [vmem:[%s1 + $0x12b8] sm:$0xff]
    %v761 = vld [vmem:[%s1 + $0x12c0] sm:$0xff]
    %v762 = vld [vmem:[%s1 + $0x12c8] sm:$0xff]
    %v763 = vld [vmem:[%s1 + $0x12d0] sm:$0xff]
    %v764 = vld [vmem:[%s1 + $0x12d8] sm:$0xff]
    %v765 = vld [vmem:[%s1 + $0x12e0] sm:$0xff]
    %v766 = vld [vmem:[%s1 + $0x12e8] sm:$0xff]
    %v767 = vld [vmem:[%s1 + $0x12f0] sm:$0xff]
    %v768 = vld [vmem:[%s1 + $0x12f8] sm:$0xff]
    %v769 = vld [vmem:[%s1 + $0x1300] sm:$0xff]
    %v770 = vld [vmem:[%s1 + $0x1308] sm:$0xff]
    %v771 = vld [vmem:[%s1 + $0x1310] sm:$0xff]
    %v772 = vld [vmem:[%s1 + $0x1318] sm:$0xff]
    %v773 = vld [vmem:[%s1 + $0x1320] sm:$0xff]
    %v774 = vld [vmem:[%s1 + $0x1328] sm:$0xff]
    %v775 = vld [vmem:[%s1 + $0x1330] sm:$0xff]
    %v776 = vld [vmem:[%s1 + $0x1338] sm:$0xff]
    %v777 = vld [vmem:[%s1 + $0x1340] sm:$0xff]
    %v778 = vld [vmem:[%s1 + $0x1348] sm:$0xff]
    %v779 = vld [vmem:[%s1 + $0x1350] sm:$0xff]
    %v780 = vld [vmem:[%s1 + $0x1358] sm:$0xff]
    %v781 = vld [vmem:[%s1 + $0x1360] sm:$0xff]
    %v782 = vld [vmem:[%s1 + $0x1368] sm:$0xff]
    %v783 = vld [vmem:[%s1 + $0x1370] sm:$0xff]
    %v784 = vld [vmem:[%s1 + $0x1378] sm:$0xff]
    %v785 = vld [vmem:[%s1 + $0x1380] sm:$0xff]
    %v786 = vld [vmem:[%s1 + $0x1388] sm:$0xff]
    %v787 = vld [vmem:[%s1 + $0x1390] sm:$0xff]
    %v788 = vld [vmem:[%s1 + $0x1398] sm:$0xff]
    %v789 = vld [vmem:[%s1 + $0x13a0] sm:$0xff]
    %v790 = vld [vmem:[%s1 + $0x13a8] sm:$0xff]
    %v791 = vld [vmem:[%s1 + $0x13b0] sm:$0xff]
    %v792 = vld [vmem:[%s1 + $0x13b8] sm:$0xff]
    %v793 = vld [vmem:[%s1 + $0x13c0] sm:$0xff]
    %v794 = vld [vmem:[%s1 + $0x13c8] sm:$0xff]
    %v795 = vld [vmem:[%s1 + $0x13d0] sm:$0xff]
    %v796 = vld [vmem:[%s1 + $0x13d8] sm:$0xff]
    %v797 = vld [vmem:[%s1 + $0x13e0] sm:$0xff]
    %v798 = vld [vmem:[%s1 + $0x13e8] sm:$0xff]
    %v799 = vld [vmem:[%s1 + $0x13f0] sm:$0xff]
    %v800 = vld [vmem:[%s1 + $0x13f8] sm:$0xff]
    %v801 = vld [vmem:[%s1 + $0x1400] sm:$0xff]
    %v802 = vld [vmem:[%s1 + $0x1408] sm:$0xff]
    %v803 = vld [vmem:[%s1 + $0x1410] sm:$0xff]
    %v804 = vld [vmem:[%s1 + $0x1418] sm:$0xff]
    %v805 = vld [vmem:[%s1 + $0x1420] sm:$0xff]
    %v806 = vld [vmem:[%s1 + $0x1428] sm:$0xff]
    %v807 = vld [vmem:[%s1 + $0x1430] sm:$0xff]
    %v808 = vld [vmem:[%s1 + $0x1438] sm:$0xff]
    %v809 = vld [vmem:[%s1 + $0x1440] sm:$0xff]
    %v810 = vld [vmem:[%s1 + $0x1448] sm:$0xff]
    %v811 = vld [vmem:[%s1 + $0x1450] sm:$0xff]
    %v812 = vld [vmem:[%s1 + $0x1458] sm:$0xff]
    %v813 = vld [vmem:[%s1 + $0x1460] sm:$0xff]
    %v814 = vld [vmem:[%s1 + $0x1468] sm:$0xff]
    %v815 = vld [vmem:[%s1 + $0x1470] sm:$0xff]
    %v816 = vld [vmem:[%s1 + $0x1478] sm:$0xff]
    %v817 = vld [vmem:[%s1 + $0x1480] sm:$0xff]
    %v818 = vld [vmem:[%s1 + $0x1488] sm:$0xff]
    %v819 = vld [vmem:[%s1 + $0x1490] sm:$0xff]
    %v820 = vld [vmem:[%s1 + $0x1498] sm:$0xff]
    %v821 = vld [vmem:[%s1 + $0x14a0] sm:$0xff]
    %v822 = vld [vmem:[%s1 + $0x14a8] sm:$0xff]
    %v823 = vld [vmem:[%s1 + $0x14b0] sm:$0xff]
    %v824 = vld [vmem:[%s1 + $0x14b8] sm:$0xff]
    %v825 = vld [vmem:[%s1 + $0x14c0] sm:$0xff]
    %v826 = vld [vmem:[%s1 + $0x14c8] sm:$0xff]
    %v827 = vld [vmem:[%s1 + $0x14d0] sm:$0xff]
    %v828 = vld [vmem:[%s1 + $0x14d8] sm:$0xff]
    %v829 = vld [vmem:[%s1 + $0x14e0] sm:$0xff]
    %v830 = vld [vmem:[%s1 + $0x14e8] sm:$0xff]
    %v831 = vld [vmem:[%s1 + $0x14f0] sm:$0xff]
    %v832 = vld [vmem:[%s1 + $0x14f8] sm:$0xff]
    %v833 = vld [vmem:[%s1 + $0x1500] sm:$0xff]
    %v834 = vld [vmem:[%s1 + $0x1508] sm:$0xff]
    %v835 = vld [vmem:[%s1 + $0x1510] sm:$0xff]
    %v836 = vld [vmem:[%s1 + $0x1518] sm:$0xff]
    %v837 = vld [vmem:[%s1 + $0x1520] sm:$0xff]
    %v838 = vld [vmem:[%s1 + $0x1528] sm:$0xff]
    %v839 = vld [vmem:[%s1 + $0x1530] sm:$0xff]
    %v840 = vld [vmem:[%s1 + $0x1538] sm:$0xff]
    %v841 = vld [vmem:[%s1 + $0x1540] sm:$0xff]
    %v842 = vld [vmem:[%s1 + $0x1548] sm:$0xff]
    %v843 = vld [vmem:[%s1 + $0x1550] sm:$0xff]
    %v844 = vld [vmem:[%s1 + $0x1558] sm:$0xff]
    %v845 = vld [vmem:[%s1 + $0x1560] sm:$0xff]
    %v846 = vld [vmem:[%s1 + $0x1568] sm:$0xff]
    %v847 = vld [vmem:[%s1 + $0x1570] sm:$0xff]
    %v848 = vld [vmem:[%s1 + $0x1578] sm:$0xff]
    %v849 = vld [vmem:[%s1 + $0x1580] sm:$0xff]
    %v850 = vld [vmem:[%s1 + $0x1588] sm:$0xff]
    %v851 = vld [vmem:[%s1 + $0x1590] sm:$0xff]
    %v852 = vld [vmem:[%s1 + $0x1598] sm:$0xff]
    %v853 = vld [vmem:[%s1 + $0x15a0] sm:$0xff]
    %v854 = vld [vmem:[%s1 + $0x15a8] sm:$0xff]
    %v855 = vld [vmem:[%s1 + $0x15b0] sm:$0xff]
    %v856 = vld [vmem:[%s1 + $0x15b8] sm:$0xff]
    %v857 = vld [vmem:[%s1 + $0x15c0] sm:$0xff]
    %v858 = vld [vmem:[%s1 + $0x15c8] sm:$0xff]
    %v859 = vld [vmem:[%s1 + $0x15d0] sm:$0xff]
    %v860 = vld [vmem:[%s1 + $0x15d8] sm:$0xff]
    %v861 = vld [vmem:[%s1 + $0x15e0] sm:$0xff]
    %v862 = vld [vmem:[%s1 + $0x15e8] sm:$0xff]
    %v863 = vld [vmem:[%s1 + $0x15f0] sm:$0xff]
    %v864 = vld [vmem:[%s1 + $0x15f8] sm:$0xff]
    %v865 = vld [vmem:[%s1 + $0x1600] sm:$0xff]
    %v866 = vld [vmem:[%s1 + $0x1608] sm:$0xff]
    %v867 = vld [vmem:[%s1 + $0x1610] sm:$0xff]
    %v868 = vld [vmem:[%s1 + $0x1618] sm:$0xff]
    %v869 = vld [vmem:[%s1 + $0x1620] sm:$0xff]
    %v870 = vld [vmem:[%s1 + $0x1628] sm:$0xff]
    %v871 = vld [vmem:[%s1 + $0x1630] sm:$0xff]
    %v872 = vld [vmem:[%s1 + $0x1638] sm:$0xff]
    %v873 = vld [vmem:[%s1 + $0x1640] sm:$0xff]
    %v874 = vld [vmem:[%s1 + $0x1648] sm:$0xff]
    %v875 = vld [vmem:[%s1 + $0x1650] sm:$0xff]
    %v876 = vld [vmem:[%s1 + $0x1658] sm:$0xff]
    %v877 = vld [vmem:[%s1 + $0x1660] sm:$0xff]
    %v878 = vld [vmem:[%s1 + $0x1668] sm:$0xff]
    %v879 = vld [vmem:[%s1 + $0x1670] sm:$0xff]
    %v880 = vld [vmem:[%s1 + $0x1678] sm:$0xff]
    %v881 = vld [vmem:[%s1 + $0x1680] sm:$0xff]
    %v882 = vld [vmem:[%s1 + $0x1688] sm:$0xff]
    %v883 = vld [vmem:[%s1 + $0x1690] sm:$0xff]
    %v884 = vld [vmem:[%s1 + $0x1698] sm:$0xff]
    %v885 = vld [vmem:[%s1 + $0x16a0] sm:$0xff]
    %v886 = vld [vmem:[%s1 + $0x16a8] sm:$0xff]
    %v887 = vld [vmem:[%s1 + $0x16b0] sm:$0xff]
    %v888 = vld [vmem:[%s1 + $0x16b8] sm:$0xff]
    %v889 = vld [vmem:[%s1 + $0x16c0] sm:$0xff]
    %v890 = vld [vmem:[%s1 + $0x16c8] sm:$0xff]
    %v891 = vld [vmem:[%s1 + $0x16d0] sm:$0xff]
    %v892 = vld [vmem:[%s1 + $0x16d8] sm:$0xff]
    %v893 = vld [vmem:[%s1 + $0x16e0] sm:$0xff]
    %v894 = vld [vmem:[%s1 + $0x16e8] sm:$0xff]
    %v895 = vld [vmem:[%s1 + $0x16f0] sm:$0xff]
    %v896 = vld [vmem:[%s1 + $0x16f8] sm:$0xff]
    %v897 = vld [vmem:[%s1 + $0x1700] sm:$0xff]
    %v898 = vld [vmem:[%s1 + $0x1708] sm:$0xff]
    %v899 = vld [vmem:[%s1 + $0x1710] sm:$0xff]
    %v900 = vld [vmem:[%s1 + $0x1718] sm:$0xff]
    %v901 = vld [vmem:[%s1 + $0x1720] sm:$0xff]
    %v902 = vld [vmem:[%s1 + $0x1728] sm:$0xff]
    %v903 = vld [vmem:[%s1 + $0x1730] sm:$0xff]
    %v904 = vld [vmem:[%s1 + $0x1738] sm:$0xff]
    %v905 = vld [vmem:[%s1 + $0x1740] sm:$0xff]
    %v906 = vld [vmem:[%s1 + $0x1748] sm:$0xff]
    %v907 = vld [vmem:[%s1 + $0x1750] sm:$0xff]
    %v908 = vld [vmem:[%s1 + $0x1758] sm:$0xff]
    %v909 = vld [vmem:[%s1 + $0x1760] sm:$0xff]
    %v910 = vld [vmem:[%s1 + $0x1768] sm:$0xff]
    %v911 = vld [vmem:[%s1 + $0x1770] sm:$0xff]
    %v912 = vld [vmem:[%s1 + $0x1778] sm:$0xff]
    %v913 = vld [vmem:[%s1 + $0x1780] sm:$0xff]
    %v914 = vld [vmem:[%s1 + $0x1788] sm:$0xff]
    %v915 = vld [vmem:[%s1 + $0x1790] sm:$0xff]
    %v916 = vld [vmem:[%s1 + $0x1798] sm:$0xff]
    %v917 = vld [vmem:[%s1 + $0x17a0] sm:$0xff]
    %v918 = vld [vmem:[%s1 + $0x17a8] sm:$0xff]
    %v919 = vld [vmem:[%s1 + $0x17b0] sm:$0xff]
    %v920 = vld [vmem:[%s1 + $0x17b8] sm:$0xff]
    %v921 = vld [vmem:[%s1 + $0x17c0] sm:$0xff]
    %v922 = vld [vmem:[%s1 + $0x17c8] sm:$0xff]
    %v923 = vld [vmem:[%s1 + $0x17d0] sm:$0xff]
    %v924 = vld [vmem:[%s1 + $0x17d8] sm:$0xff]
    %v925 = vld [vmem:[%s1 + $0x17e0] sm:$0xff]
    %v926 = vld [vmem:[%s1 + $0x17e8] sm:$0xff]
    %v927 = vld [vmem:[%s1 + $0x17f0] sm:$0xff]
    %v928 = vld [vmem:[%s1 + $0x17f8] sm:$0xff]
    %v929 = vld [vmem:[%s1 + $0x1800] sm:$0xff]
    %v930 = vld [vmem:[%s1 + $0x1808] sm:$0xff]
    %v931 = vld [vmem:[%s1 + $0x1810] sm:$0xff]
    %v932 = vld [vmem:[%s1 + $0x1818] sm:$0xff]
    %v933 = vld [vmem:[%s1 + $0x1820] sm:$0xff]
    %v934 = vld [vmem:[%s1 + $0x1828] sm:$0xff]
    %v935 = vld [vmem:[%s1 + $0x1830] sm:$0xff]
    %v936 = vld [vmem:[%s1 + $0x1838] sm:$0xff]
    %v937 = vld [vmem:[%s1 + $0x1840] sm:$0xff]
    %v938 = vld [vmem:[%s1 + $0x1848] sm:$0xff]
    %v939 = vld [vmem:[%s1 + $0x1850] sm:$0xff]
    %v940 = vld [vmem:[%s1 + $0x1858] sm:$0xff]
    %v941 = vld [vmem:[%s1 + $0x1860] sm:$0xff]
    %v942 = vld [vmem:[%s1 + $0x1868] sm:$0xff]
    %v943 = vld [vmem:[%s1 + $0x1870] sm:$0xff]
    %v944 = vld [vmem:[%s1 + $0x1878] sm:$0xff]
    %v945 = vld [vmem:[%s1 + $0x1880] sm:$0xff]
    %v946 = vld [vmem:[%s1 + $0x1888] sm:$0xff]
    %v947 = vld [vmem:[%s1 + $0x1890] sm:$0xff]
    %v948 = vld [vmem:[%s1 + $0x1898] sm:$0xff]
    %v949 = vld [vmem:[%s1 + $0x18a0] sm:$0xff]
    %v950 = vld [vmem:[%s1 + $0x18a8] sm:$0xff]
    %v951 = vld [vmem:[%s1 + $0x18b0] sm:$0xff]
    %v952 = vld [vmem:[%s1 + $0x18b8] sm:$0xff]
    %v953 = vld [vmem:[%s1 + $0x18c0] sm:$0xff]
    %v954 = vld [vmem:[%s1 + $0x18c8] sm:$0xff]
    %v955 = vld [vmem:[%s1 + $0x18d0] sm:$0xff]
    %v956 = vld [vmem:[%s1 + $0x18d8] sm:$0xff]
    %v957 = vld [vmem:[%s1 + $0x18e0] sm:$0xff]
    %v958 = vld [vmem:[%s1 + $0x18e8] sm:$0xff]
    %v959 = vld [vmem:[%s1 + $0x18f0] sm:$0xff]
    %v960 = vld [vmem:[%s1 + $0x18f8] sm:$0xff]
    %v961 = vld [vmem:[%s1 + $0x1900] sm:$0xff]
    %v962 = vld [vmem:[%s1 + $0x1908] sm:$0xff]
    %v963 = vld [vmem:[%s1 + $0x1910] sm:$0xff]
    %v964 = vld [vmem:[%s1 + $0x1918] sm:$0xff]
    %v965 = vld [vmem:[%s1 + $0x1920] sm:$0xff]
    %v966 = vld [vmem:[%s1 + $0x1928] sm:$0xff]
    %v967 = vld [vmem:[%s1 + $0x1930] sm:$0xff]
    %v968 = vld [vmem:[%s1 + $0x1938] sm:$0xff]
    %v969 = vld [vmem:[%s1 + $0x1940] sm:$0xff]
    %v970 = vld [vmem:[%s1 + $0x1948] sm:$0xff]
    %v971 = vld [vmem:[%s1 + $0x1950] sm:$0xff]
    %v972 = vld [vmem:[%s1 + $0x1958] sm:$0xff]
    %v973 = vld [vmem:[%s1 + $0x1960] sm:$0xff]
    %v974 = vld [vmem:[%s1 + $0x1968] sm:$0xff]
    %v975 = vld [vmem:[%s1 + $0x1970] sm:$0xff]
    %v976 = vld [vmem:[%s1 + $0x1978] sm:$0xff]
    %v977 = vld [vmem:[%s1 + $0x1980] sm:$0xff]
    %v978 = vld [vmem:[%s1 + $0x1988] sm:$0xff]
    %v979 = vld [vmem:[%s1 + $0x1990] sm:$0xff]
    %v980 = vld [vmem:[%s1 + $0x1998] sm:$0xff]
    %v981 = vld [vmem:[%s1 + $0x19a0] sm:$0xff]
    %v982 = vld [vmem:[%s1 + $0x19a8] sm:$0xff]
    %v983 = vld [vmem:[%s1 + $0x19b0] sm:$0xff]
    %v984 = vld [vmem:[%s1 + $0x19b8] sm:$0xff]
    %v985 = vld [vmem:[%s1 + $0x19c0] sm:$0xff]
    %v986 = vld [vmem:[%s1 + $0x19c8] sm:$0xff]
    %v987 = vld [vmem:[%s1 + $0x19d0] sm:$0xff]
    %v988 = vld [vmem:[%s1 + $0x19d8] sm:$0xff]
    %v989 = vld [vmem:[%s1 + $0x19e0] sm:$0xff]
    %v990 = vld [vmem:[%s1 + $0x19e8] sm:$0xff]
    %v991 = vld [vmem:[%s1 + $0x19f0] sm:$0xff]
    %v992 = vld [vmem:[%s1 + $0x19f8] sm:$0xff]
    %v993 = vld [vmem:[%s1 + $0x1a00] sm:$0xff]
    %v994 = vld [vmem:[%s1 + $0x1a08] sm:$0xff]
    %v995 = vld [vmem:[%s1 + $0x1a10] sm:$0xff]
    %v996 = vld [vmem:[%s1 + $0x1a18] sm:$0xff]
    %v997 = vld [vmem:[%s1 + $0x1a20] sm:$0xff]
    %v998 = vld [vmem:[%s1 + $0x1a28] sm:$0xff]
    %v999 = vld [vmem:[%s1 + $0x1a30] sm:$0xff]
    %v1000 = vld [vmem:[%s1 + $0x1a38] sm:$0xff]
    %v1001 = vld [vmem:[%s1 + $0x1a40] sm:$0xff]
    %v1002 = vld [vmem:[%s1 + $0x1a48] sm:$0xff]
    %v1003 = vld [vmem:[%s1 + $0x1a50] sm:$0xff]
    %v1004 = vld [vmem:[%s1 + $0x1a58] sm:$0xff]
    %v1005 = vld [vmem:[%s1 + $0x1a60] sm:$0xff]
    %v1006 = vld [vmem:[%s1 + $0x1a68] sm:$0xff]
    %v1007 = vld [vmem:[%s1 + $0x1a70] sm:$0xff]
    %v1008 = vld [vmem:[%s1 + $0x1a78] sm:$0xff]
    %v1009 = vld [vmem:[%s1 + $0x1a80] sm:$0xff]
    %v1010 = vld [vmem:[%s1 + $0x1a88] sm:$0xff]
    %v1011 = vld [vmem:[%s1 + $0x1a90] sm:$0xff]
    %v1012 = vld [vmem:[%s1 + $0x1a98] sm:$0xff]
    %v1013 = vld [vmem:[%s1 + $0x1aa0] sm:$0xff]
    %v1014 = vld [vmem:[%s1 + $0x1aa8] sm:$0xff]
    %v1015 = vld [vmem:[%s1 + $0x1ab0] sm:$0xff]
    %v1016 = vld [vmem:[%s1 + $0x1ab8] sm:$0xff]
    %v1017 = vld [vmem:[%s1 + $0x1ac0] sm:$0xff]
    %v1018 = vld [vmem:[%s1 + $0x1ac8] sm:$0xff]
    %v1019 = vld [vmem:[%s1 + $0x1ad0] sm:$0xff]
    %v1020 = vld [vmem:[%s1 + $0x1ad8] sm:$0xff]
    %v1021 = vld [vmem:[%s1 + $0x1ae0] sm:$0xff]
    %v1022 = vld [vmem:[%s1 + $0x1ae8] sm:$0xff]
    %v1023 = vld [vmem:[%s1 + $0x1af0] sm:$0xff]
    %v1024 = vld [vmem:[%s1 + $0x1af8] sm:$0xff]
    %v1025 = vld [vmem:[%s1 + $0x1b00] sm:$0xff]
    %v1026 = vld [vmem:[%s1 + $0x1b08] sm:$0xff]
    %v1027 = vld [vmem:[%s1 + $0x1b10] sm:$0xff]
    %v1028 = vld [vmem:[%s1 + $0x1b18] sm:$0xff]
    %v1029 = vld [vmem:[%s1 + $0x1b20] sm:$0xff]
    %v1030 = vld [vmem:[%s1 + $0x1b28] sm:$0xff]
    %v1031 = vld [vmem:[%s1 + $0x1b30] sm:$0xff]
    %v1032 = vld [vmem:[%s1 + $0x1b38] sm:$0xff]
    %v1033 = vld [vmem:[%s1 + $0x1b40] sm:$0xff]
    %v1034 = vld [vmem:[%s1 + $0x1b48] sm:$0xff]
    %v1035 = vld [vmem:[%s1 + $0x1b50] sm:$0xff]
    %v1036 = vld [vmem:[%s1 + $0x1b58] sm:$0xff]
    %v1037 = vld [vmem:[%s1 + $0x1b60] sm:$0xff]
    %v1038 = vld [vmem:[%s1 + $0x1b68] sm:$0xff]
    %v1039 = vld [vmem:[%s1 + $0x1b70] sm:$0xff]
    %v1040 = vld [vmem:[%s1 + $0x1b78] sm:$0xff]
    %v1041 = vld [vmem:[%s1 + $0x1b80] sm:$0xff]
    %v1042 = vld [vmem:[%s1 + $0x1b88] sm:$0xff]
    %v1043 = vld [vmem:[%s1 + $0x1b90] sm:$0xff]
    %v1044 = vld [vmem:[%s1 + $0x1b98] sm:$0xff]
    %v1045 = vld [vmem:[%s1 + $0x1ba0] sm:$0xff]
    %v1046 = vld [vmem:[%s1 + $0x1ba8] sm:$0xff]
    %v1047 = vld [vmem:[%s1 + $0x1bb0] sm:$0xff]
    %v1048 = vld [vmem:[%s1 + $0x1bb8] sm:$0xff]
    %v1049 = vld [vmem:[%s1 + $0x1bc0] sm:$0xff]
    %v1050 = vld [vmem:[%s1 + $0x1bc8] sm:$0xff]
    %v1051 = vld [vmem:[%s1 + $0x1bd0] sm:$0xff]
    %v1052 = vld [vmem:[%s1 + $0x1bd8] sm:$0xff]
    %v1053 = vld [vmem:[%s1 + $0x1be0] sm:$0xff]
    %v1054 = vld [vmem:[%s1 + $0x1be8] sm:$0xff]
    %v1055 = vld [vmem:[%s1 + $0x1bf0] sm:$0xff]
    %v1056 = vld [vmem:[%s1 + $0x1bf8] sm:$0xff]
    %v1057 = vld [vmem:[%s1 + $0x1c00] sm:$0xff]
    %v1058 = vld [vmem:[%s1 + $0x1c08] sm:$0xff]
    %v1059 = vld [vmem:[%s1 + $0x1c10] sm:$0xff]
    %v1060 = vld [vmem:[%s1 + $0x1c18] sm:$0xff]
    %v1061 = vld [vmem:[%s1 + $0x1c20] sm:$0xff]
    %v1062 = vld [vmem:[%s1 + $0x1c28] sm:$0xff]
    %v1063 = vld [vmem:[%s1 + $0x1c30] sm:$0xff]
    %v1064 = vld [vmem:[%s1 + $0x1c38] sm:$0xff]
    %v1065 = vld [vmem:[%s1 + $0x1c40] sm:$0xff]
    %v1066 = vld [vmem:[%s1 + $0x1c48] sm:$0xff]
    %v1067 = vld [vmem:[%s1 + $0x1c50] sm:$0xff]
    %v1068 = vld [vmem:[%s1 + $0x1c58] sm:$0xff]
    %v1069 = vld [vmem:[%s1 + $0x1c60] sm:$0xff]
    %v1070 = vld [vmem:[%s1 + $0x1c68] sm:$0xff]
    %v1071 = vld [vmem:[%s1 + $0x1c70] sm:$0xff]
    %v1072 = vld [vmem:[%s1 + $0x1c78] sm:$0xff]
    %v1073 = vld [vmem:[%s1 + $0x1c80] sm:$0xff]
    %v1074 = vld [vmem:[%s1 + $0x1c88] sm:$0xff]
    %v1075 = vld [vmem:[%s1 + $0x1c90] sm:$0xff]
    %v1076 = vld [vmem:[%s1 + $0x1c98] sm:$0xff]
    %v1077 = vld [vmem:[%s1 + $0x1ca0] sm:$0xff]
    %v1078 = vld [vmem:[%s1 + $0x1ca8] sm:$0xff]
    %v1079 = vld [vmem:[%s1 + $0x1cb0] sm:$0xff]
    %v1080 = vld [vmem:[%s1 + $0x1cb8] sm:$0xff]
    %v1081 = vld [vmem:[%s1 + $0x1cc0] sm:$0xff]
    %v1082 = vld [vmem:[%s1 + $0x1cc8] sm:$0xff]
    %v1083 = vld [vmem:[%s1 + $0x1cd0] sm:$0xff]
    %v1084 = vld [vmem:[%s1 + $0x1cd8] sm:$0xff]
    %v1085 = vld [vmem:[%s1 + $0x1ce0] sm:$0xff]
    %v1086 = vld [vmem:[%s1 + $0x1ce8] sm:$0xff]
    %v1087 = vld [vmem:[%s1 + $0x1cf0] sm:$0xff]
    %v1088 = vld [vmem:[%s1 + $0x1cf8] sm:$0xff]
    %v1089 = vld [vmem:[%s1 + $0x1d00] sm:$0xff]
    %v1090 = vld [vmem:[%s1 + $0x1d08] sm:$0xff]
    %v1091 = vld [vmem:[%s1 + $0x1d10] sm:$0xff]
    %v1092 = vld [vmem:[%s1 + $0x1d18] sm:$0xff]
    %v1093 = vld [vmem:[%s1 + $0x1d20] sm:$0xff]
    %v1094 = vld [vmem:[%s1 + $0x1d28] sm:$0xff]
    %v1095 = vld [vmem:[%s1 + $0x1d30] sm:$0xff]
    %v1096 = vld [vmem:[%s1 + $0x1d38] sm:$0xff]
    %v1097 = vld [vmem:[%s1 + $0x1d40] sm:$0xff]
    %v1098 = vld [vmem:[%s1 + $0x1d48] sm:$0xff]
    %v1099 = vld [vmem:[%s1 + $0x1d50] sm:$0xff]
    %v1100 = vld [vmem:[%s1 + $0x1d58] sm:$0xff]
    %v1101 = vld [vmem:[%s1 + $0x1d60] sm:$0xff]
    %v1102 = vld [vmem:[%s1 + $0x1d68] sm:$0xff]
    %v1103 = vld [vmem:[%s1 + $0x1d70] sm:$0xff]
    %v1104 = vld [vmem:[%s1 + $0x1d78] sm:$0xff]
    %v1105 = vld [vmem:[%s1 + $0x1d80] sm:$0xff]
    %v1106 = vld [vmem:[%s1 + $0x1d88] sm:$0xff]
    %v1107 = vld [vmem:[%s1 + $0x1d90] sm:$0xff]
    %v1108 = vld [vmem:[%s1 + $0x1d98] sm:$0xff]
    %v1109 = vld [vmem:[%s1 + $0x1da0] sm:$0xff]
    %v1110 = vld [vmem:[%s1 + $0x1da8] sm:$0xff]
    %v1111 = vld [vmem:[%s1 + $0x1db0] sm:$0xff]
    %v1112 = vld [vmem:[%s1 + $0x1db8] sm:$0xff]
    %v1113 = vld [vmem:[%s1 + $0x1dc0] sm:$0xff]
    %v1114 = vld [vmem:[%s1 + $0x1dc8] sm:$0xff]
    %v1115 = vld [vmem:[%s1 + $0x1dd0] sm:$0xff]
    %v1116 = vld [vmem:[%s1 + $0x1dd8] sm:$0xff]
    %v1117 = vld [vmem:[%s1 + $0x1de0] sm:$0xff]
    %v1118 = vld [vmem:[%s1 + $0x1de8] sm:$0xff]
    %v1119 = vld [vmem:[%s1 + $0x1df0] sm:$0xff]
    %v1120 = vld [vmem:[%s1 + $0x1df8] sm:$0xff]
    %v1121 = vld [vmem:[%s1 + $0x1e00] sm:$0xff]
    %v1122 = vld [vmem:[%s1 + $0x1e08] sm:$0xff]
    %v1123 = vld [vmem:[%s1 + $0x1e10] sm:$0xff]
    %v1124 = vld [vmem:[%s1 + $0x1e18] sm:$0xff]
    %v1125 = vld [vmem:[%s1 + $0x1e20] sm:$0xff]
    %v1126 = vld [vmem:[%s1 + $0x1e28] sm:$0xff]
    %v1127 = vld [vmem:[%s1 + $0x1e30] sm:$0xff]
    %v1128 = vld [vmem:[%s1 + $0x1e38] sm:$0xff]
    %v1129 = vld [vmem:[%s1 + $0x1e40] sm:$0xff]
    %v1130 = vld [vmem:[%s1 + $0x1e48] sm:$0xff]
    %v1131 = vld [vmem:[%s1 + $0x1e50] sm:$0xff]
    %v1132 = vld [vmem:[%s1 + $0x1e58] sm:$0xff]
    %v1133 = vld [vmem:[%s1 + $0x1e60] sm:$0xff]
    %v1134 = vld [vmem:[%s1 + $0x1e68] sm:$0xff]
    %v1135 = vld [vmem:[%s1 + $0x1e70] sm:$0xff]
    %v1136 = vld [vmem:[%s1 + $0x1e78] sm:$0xff]
    %v1137 = vld [vmem:[%s1 + $0x1e80] sm:$0xff]
    %v1138 = vld [vmem:[%s1 + $0x1e88] sm:$0xff]
    %v1139 = vld [vmem:[%s1 + $0x1e90] sm:$0xff]
    %v1140 = vld [vmem:[%s1 + $0x1e98] sm:$0xff]
    %v1141 = vld [vmem:[%s1 + $0x1ea0] sm:$0xff]
    %v1142 = vld [vmem:[%s1 + $0x1ea8] sm:$0xff]
    %v1143 = vld [vmem:[%s1 + $0x1eb0] sm:$0xff]
    %v1144 = vld [vmem:[%s1 + $0x1eb8] sm:$0xff]
    %v1145 = vld [vmem:[%s1 + $0x1ec0] sm:$0xff]
    %v1146 = vld [vmem:[%s1 + $0x1ec8] sm:$0xff]
    %v1147 = vld [vmem:[%s1 + $0x1ed0] sm:$0xff]
    %v1148 = vld [vmem:[%s1 + $0x1ed8] sm:$0xff]
    %v1149 = vld [vmem:[%s1 + $0x1ee0] sm:$0xff]
    %v1150 = vld [vmem:[%s1 + $0x1ee8] sm:$0xff]
    %v1151 = vld [vmem:[%s1 + $0x1ef0] sm:$0xff]
    %v1152 = vld [vmem:[%s1 + $0x1ef8] sm:$0xff]
    %v1153 = vld [vmem:[%s1 + $0x1f00] sm:$0xff]
    %v1154 = vld [vmem:[%s1 + $0x1f08] sm:$0xff]
    %v1155 = vld [vmem:[%s1 + $0x1f10] sm:$0xff]
    %v1156 = vld [vmem:[%s1 + $0x1f18] sm:$0xff]
    %v1157 = vld [vmem:[%s1 + $0x1f20] sm:$0xff]
    %v1158 = vld [vmem:[%s1 + $0x1f28] sm:$0xff]
    %v1159 = vld [vmem:[%s1 + $0x1f30] sm:$0xff]
    %v1160 = vld [vmem:[%s1 + $0x1f38] sm:$0xff]
    %v1161 = vld [vmem:[%s1 + $0x1f40] sm:$0xff]
    %v1162 = vld [vmem:[%s1 + $0x1f48] sm:$0xff]
    %v1163 = vld [vmem:[%s1 + $0x1f50] sm:$0xff]
    %v1164 = vld [vmem:[%s1 + $0x1f58] sm:$0xff]
    %v1165 = vld [vmem:[%s1 + $0x1f60] sm:$0xff]
    %v1166 = vld [vmem:[%s1 + $0x1f68] sm:$0xff]
    %v1167 = vld [vmem:[%s1 + $0x1f70] sm:$0xff]
    %v1168 = vld [vmem:[%s1 + $0x1f78] sm:$0xff]
    %v1169 = vld [vmem:[%s1 + $0x1f80] sm:$0xff]
    %v1170 = vld [vmem:[%s1 + $0x1f88] sm:$0xff]
    %v1171 = vld [vmem:[%s1 + $0x1f90] sm:$0xff]
    %v1172 = vld [vmem:[%s1 + $0x1f98] sm:$0xff]
    %v1173 = vld [vmem:[%s1 + $0x1fa0] sm:$0xff]
    %v1174 = vld [vmem:[%s1 + $0x1fa8] sm:$0xff]
    %v1175 = vld [vmem:[%s1 + $0x1fb0] sm:$0xff]
    %v1176 = vld [vmem:[%s1 + $0x1fb8] sm:$0xff]
    %v1177 = vld [vmem:[%s1 + $0x1fc0] sm:$0xff]
    %v1178 = vld [vmem:[%s1 + $0x1fc8] sm:$0xff]
    %v1179 = vld [vmem:[%s1 + $0x1fd0] sm:$0xff]
    %v1180 = vld [vmem:[%s1 + $0x1fd8] sm:$0xff]
    %v1181 = vld [vmem:[%s1 + $0x1fe0] sm:$0xff]
    %v1182 = vld [vmem:[%s1 + $0x1fe8] sm:$0xff]
    %v1183 = vld [vmem:[%s1 + $0x1ff0] sm:$0xff]
    %v1184 = vld [vmem:[%s1 + $0x1ff8] sm:$0xff]
    %v1185 = vld [vmem:[%s2] sm:$0x3]
    %v1187 = vperm.slane %v1185, 0
    %v1188 = vperm.slane %v1185, 1
    %1191 = vmatpush.msra.mxu0 %v191
    %1192 = vmatpush.msra.mxu0 %v189
    %1193 = vmatpush.msra.mxu0 %v187
    %1194 = vmatpush.msra.mxu0 %v185
    %1195 = vmatpush.msra.mxu0 %v183
    %1196 = vmatpush.msra.mxu0 %v181
    %1197 = vmatpush.msra.mxu0 %v179
    %1198 = vmatpush.msra.mxu0 %v177
    %1199 = vmatpush.msra.mxu0 %v175
    %1200 = vmatpush.msra.mxu0 %v173
    %1201 = vmatpush.msra.mxu0 %v171
    %1202 = vmatpush.msra.mxu0 %v169
    %1203 = vmatpush.msra.mxu0 %v167
    %1204 = vmatpush.msra.mxu0 %v165
    %1205 = vmatpush.msra.mxu0 %v163
    %1206 = vmatpush.msra.mxu0 %v161
    %1207 = vmatmul.f32.gmra.mxu0 %v33
    %v1208 = vpop.f32.mrf.mxu0
    %v1209 = vadd.f32 %v1187, %v1208
    %1210 = vmatmul.f32.gmra.mxu0 %v65
    %v1211 = vpop.f32.mrf.mxu0
    %v1212 = vadd.f32 %v1187, %v1211
    %1213 = vmatmul.f32.gmra.mxu0 %v97
    %v1214 = vpop.f32.mrf.mxu0
    %v1215 = vadd.f32 %v1187, %v1214
    %1216 = vmatmul.f32.gmra.mxu0 %v129
    %v1217 = vpop.f32.mrf.mxu0
    %v1218 = vadd.f32 %v1187, %v1217
    %1219 = vdwg.mxu0
    %1220 = vmatpush.msra.mxu0 %v223
    %1221 = vmatpush.msra.mxu0 %v221
    %1222 = vmatpush.msra.mxu0 %v219
    %1223 = vmatpush.msra.mxu0 %v217
    %1224 = vmatpush.msra.mxu0 %v215
    %1225 = vmatpush.msra.mxu0 %v213
    %1226 = vmatpush.msra.mxu0 %v211
    %1227 = vmatpush.msra.mxu0 %v209
    %1228 = vmatpush.msra.mxu0 %v207
    %1229 = vmatpush.msra.mxu0 %v205
    %1230 = vmatpush.msra.mxu0 %v203
    %1231 = vmatpush.msra.mxu0 %v201
    %1232 = vmatpush.msra.mxu0 %v199
    %1233 = vmatpush.msra.mxu0 %v197
    %1234 = vmatpush.msra.mxu0 %v195
    %1235 = vmatpush.msra.mxu0 %v193
    %1236 = vmatmul.f32.gmra.mxu0 %v34
    %v1237 = vpop.f32.mrf.mxu0
    %v1238 = vadd.f32 %v1209, %v1237
    %1239 = vmatmul.f32.gmra.mxu0 %v66
    %v1240 = vpop.f32.mrf.mxu0
    %v1241 = vadd.f32 %v1212, %v1240
    %1242 = vmatmul.f32.gmra.mxu0 %v98
    %v1243 = vpop.f32.mrf.mxu0
    %v1244 = vadd.f32 %v1215, %v1243
    %1245 = vmatmul.f32.gmra.mxu0 %v130
    %v1246 = vpop.f32.mrf.mxu0
    %v1247 = vadd.f32 %v1218, %v1246
    %1248 = vdwg.mxu0
    %1249 = vmatpush.msra.mxu0 %v255
    %1250 = vmatpush.msra.mxu0 %v253
    %1251 = vmatpush.msra.mxu0 %v251
    %1252 = vmatpush.msra.mxu0 %v249
    %1253 = vmatpush.msra.mxu0 %v247
    %1254 = vmatpush.msra.mxu0 %v245
    %1255 = vmatpush.msra.mxu0 %v243
    %1256 = vmatpush.msra.mxu0 %v241
    %1257 = vmatpush.msra.mxu0 %v239
    %1258 = vmatpush.msra.mxu0 %v237
    %1259 = vmatpush.msra.mxu0 %v235
    %1260 = vmatpush.msra.mxu0 %v233
    %1261 = vmatpush.msra.mxu0 %v231
    %1262 = vmatpush.msra.mxu0 %v229
    %1263 = vmatpush.msra.mxu0 %v227
    %1264 = vmatpush.msra.mxu0 %v225
    %1265 = vmatmul.f32.gmra.mxu0 %v35
    %v1266 = vpop.f32.mrf.mxu0
    %v1267 = vadd.f32 %v1238, %v1266
    %1268 = vmatmul.f32.gmra.mxu0 %v67
    %v1269 = vpop.f32.mrf.mxu0
    %v1270 = vadd.f32 %v1241, %v1269
    %1271 = vmatmul.f32.gmra.mxu0 %v99
    %v1272 = vpop.f32.mrf.mxu0
    %v1273 = vadd.f32 %v1244, %v1272
    %1274 = vmatmul.f32.gmra.mxu0 %v131
    %v1275 = vpop.f32.mrf.mxu0
    %v1276 = vadd.f32 %v1247, %v1275
    %1277 = vdwg.mxu0
    %1278 = vmatpush.msra.mxu0 %v287
    %1279 = vmatpush.msra.mxu0 %v285
    %1280 = vmatpush.msra.mxu0 %v283
    %1281 = vmatpush.msra.mxu0 %v281
    %1282 = vmatpush.msra.mxu0 %v279
    %1283 = vmatpush.msra.mxu0 %v277
    %1284 = vmatpush.msra.mxu0 %v275
    %1285 = vmatpush.msra.mxu0 %v273
    %1286 = vmatpush.msra.mxu0 %v271
    %1287 = vmatpush.msra.mxu0 %v269
    %1288 = vmatpush.msra.mxu0 %v267
    %1289 = vmatpush.msra.mxu0 %v265
    %1290 = vmatpush.msra.mxu0 %v263
    %1291 = vmatpush.msra.mxu0 %v261
    %1292 = vmatpush.msra.mxu0 %v259
    %1293 = vmatpush.msra.mxu0 %v257
    %1294 = vmatmul.f32.gmra.mxu0 %v36
    %v1295 = vpop.f32.mrf.mxu0
    %v1296 = vadd.f32 %v1267, %v1295
    %1297 = vmatmul.f32.gmra.mxu0 %v68
    %v1298 = vpop.f32.mrf.mxu0
    %v1299 = vadd.f32 %v1270, %v1298
    %1300 = vmatmul.f32.gmra.mxu0 %v100
    %v1301 = vpop.f32.mrf.mxu0
    %v1302 = vadd.f32 %v1273, %v1301
    %1303 = vmatmul.f32.gmra.mxu0 %v132
    %v1304 = vpop.f32.mrf.mxu0
    %v1305 = vadd.f32 %v1276, %v1304
    %1306 = vdwg.mxu0
    %1307 = vmatpush.msra.mxu0 %v319
    %1308 = vmatpush.msra.mxu0 %v317
    %1309 = vmatpush.msra.mxu0 %v315
    %1310 = vmatpush.msra.mxu0 %v313
    %1311 = vmatpush.msra.mxu0 %v311
    %1312 = vmatpush.msra.mxu0 %v309
    %1313 = vmatpush.msra.mxu0 %v307
    %1314 = vmatpush.msra.mxu0 %v305
    %1315 = vmatpush.msra.mxu0 %v303
    %1316 = vmatpush.msra.mxu0 %v301
    %1317 = vmatpush.msra.mxu0 %v299
    %1318 = vmatpush.msra.mxu0 %v297
    %1319 = vmatpush.msra.mxu0 %v295
    %1320 = vmatpush.msra.mxu0 %v293
    %1321 = vmatpush.msra.mxu0 %v291
    %1322 = vmatpush.msra.mxu0 %v289
    %1323 = vmatmul.f32.gmra.mxu0 %v37
    %v1324 = vpop.f32.mrf.mxu0
    %v1325 = vadd.f32 %v1296, %v1324
    %1326 = vmatmul.f32.gmra.mxu0 %v69
    %v1327 = vpop.f32.mrf.mxu0
    %v1328 = vadd.f32 %v1299, %v1327
    %1329 = vmatmul.f32.gmra.mxu0 %v101
    %v1330 = vpop.f32.mrf.mxu0
    %v1331 = vadd.f32 %v1302, %v1330
    %1332 = vmatmul.f32.gmra.mxu0 %v133
    %v1333 = vpop.f32.mrf.mxu0
    %v1334 = vadd.f32 %v1305, %v1333
    %1335 = vdwg.mxu0
    %1336 = vmatpush.msra.mxu0 %v351
    %1337 = vmatpush.msra.mxu0 %v349
    %1338 = vmatpush.msra.mxu0 %v347
    %1339 = vmatpush.msra.mxu0 %v345
    %1340 = vmatpush.msra.mxu0 %v343
    %1341 = vmatpush.msra.mxu0 %v341
    %1342 = vmatpush.msra.mxu0 %v339
    %1343 = vmatpush.msra.mxu0 %v337
    %1344 = vmatpush.msra.mxu0 %v335
    %1345 = vmatpush.msra.mxu0 %v333
    %1346 = vmatpush.msra.mxu0 %v331
    %1347 = vmatpush.msra.mxu0 %v329
    %1348 = vmatpush.msra.mxu0 %v327
    %1349 = vmatpush.msra.mxu0 %v325
    %1350 = vmatpush.msra.mxu0 %v323
    %1351 = vmatpush.msra.mxu0 %v321
    %1352 = vmatmul.f32.gmra.mxu0 %v38
    %v1353 = vpop.f32.mrf.mxu0
    %v1354 = vadd.f32 %v1325, %v1353
    %1355 = vmatmul.f32.gmra.mxu0 %v70
    %v1356 = vpop.f32.mrf.mxu0
    %v1357 = vadd.f32 %v1328, %v1356
    %1358 = vmatmul.f32.gmra.mxu0 %v102
    %v1359 = vpop.f32.mrf.mxu0
    %v1360 = vadd.f32 %v1331, %v1359
    %1361 = vmatmul.f32.gmra.mxu0 %v134
    %v1362 = vpop.f32.mrf.mxu0
    %v1363 = vadd.f32 %v1334, %v1362
    %1364 = vdwg.mxu0
    %1365 = vmatpush.msra.mxu0 %v383
    %1366 = vmatpush.msra.mxu0 %v381
    %1367 = vmatpush.msra.mxu0 %v379
    %1368 = vmatpush.msra.mxu0 %v377
    %1369 = vmatpush.msra.mxu0 %v375
    %1370 = vmatpush.msra.mxu0 %v373
    %1371 = vmatpush.msra.mxu0 %v371
    %1372 = vmatpush.msra.mxu0 %v369
    %1373 = vmatpush.msra.mxu0 %v367
    %1374 = vmatpush.msra.mxu0 %v365
    %1375 = vmatpush.msra.mxu0 %v363
    %1376 = vmatpush.msra.mxu0 %v361
    %1377 = vmatpush.msra.mxu0 %v359
    %1378 = vmatpush.msra.mxu0 %v357
    %1379 = vmatpush.msra.mxu0 %v355
    %1380 = vmatpush.msra.mxu0 %v353
    %1381 = vmatmul.f32.gmra.mxu0 %v39
    %v1382 = vpop.f32.mrf.mxu0
    %v1383 = vadd.f32 %v1354, %v1382
    %1384 = vmatmul.f32.gmra.mxu0 %v71
    %v1385 = vpop.f32.mrf.mxu0
    %v1386 = vadd.f32 %v1357, %v1385
    %1387 = vmatmul.f32.gmra.mxu0 %v103
    %v1388 = vpop.f32.mrf.mxu0
    %v1389 = vadd.f32 %v1360, %v1388
    %1390 = vmatmul.f32.gmra.mxu0 %v135
    %v1391 = vpop.f32.mrf.mxu0
    %v1392 = vadd.f32 %v1363, %v1391
    %1393 = vdwg.mxu0
    %1394 = vmatpush.msra.mxu0 %v415
    %1395 = vmatpush.msra.mxu0 %v413
    %1396 = vmatpush.msra.mxu0 %v411
    %1397 = vmatpush.msra.mxu0 %v409
    %1398 = vmatpush.msra.mxu0 %v407
    %1399 = vmatpush.msra.mxu0 %v405
    %1400 = vmatpush.msra.mxu0 %v403
    %1401 = vmatpush.msra.mxu0 %v401
    %1402 = vmatpush.msra.mxu0 %v399
    %1403 = vmatpush.msra.mxu0 %v397
    %1404 = vmatpush.msra.mxu0 %v395
    %1405 = vmatpush.msra.mxu0 %v393
    %1406 = vmatpush.msra.mxu0 %v391
    %1407 = vmatpush.msra.mxu0 %v389
    %1408 = vmatpush.msra.mxu0 %v387
    %1409 = vmatpush.msra.mxu0 %v385
    %1410 = vmatmul.f32.gmra.mxu0 %v40
    %v1411 = vpop.f32.mrf.mxu0
    %v1412 = vadd.f32 %v1383, %v1411
    %1413 = vmatmul.f32.gmra.mxu0 %v72
    %v1414 = vpop.f32.mrf.mxu0
    %v1415 = vadd.f32 %v1386, %v1414
    %1416 = vmatmul.f32.gmra.mxu0 %v104
    %v1417 = vpop.f32.mrf.mxu0
    %v1418 = vadd.f32 %v1389, %v1417
    %1419 = vmatmul.f32.gmra.mxu0 %v136
    %v1420 = vpop.f32.mrf.mxu0
    %v1421 = vadd.f32 %v1392, %v1420
    %1422 = vdwg.mxu0
    %1423 = vmatpush.msra.mxu0 %v447
    %1424 = vmatpush.msra.mxu0 %v445
    %1425 = vmatpush.msra.mxu0 %v443
    %1426 = vmatpush.msra.mxu0 %v441
    %1427 = vmatpush.msra.mxu0 %v439
    %1428 = vmatpush.msra.mxu0 %v437
    %1429 = vmatpush.msra.mxu0 %v435
    %1430 = vmatpush.msra.mxu0 %v433
    %1431 = vmatpush.msra.mxu0 %v431
    %1432 = vmatpush.msra.mxu0 %v429
    %1433 = vmatpush.msra.mxu0 %v427
    %1434 = vmatpush.msra.mxu0 %v425
    %1435 = vmatpush.msra.mxu0 %v423
    %1436 = vmatpush.msra.mxu0 %v421
    %1437 = vmatpush.msra.mxu0 %v419
    %1438 = vmatpush.msra.mxu0 %v417
    %1439 = vmatmul.f32.gmra.mxu0 %v41
    %v1440 = vpop.f32.mrf.mxu0
    %v1441 = vadd.f32 %v1412, %v1440
    %1442 = vmatmul.f32.gmra.mxu0 %v73
    %v1443 = vpop.f32.mrf.mxu0
    %v1444 = vadd.f32 %v1415, %v1443
    %1445 = vmatmul.f32.gmra.mxu0 %v105
    %v1446 = vpop.f32.mrf.mxu0
    %v1447 = vadd.f32 %v1418, %v1446
    %1448 = vmatmul.f32.gmra.mxu0 %v137
    %v1449 = vpop.f32.mrf.mxu0
    %v1450 = vadd.f32 %v1421, %v1449
    %1451 = vdwg.mxu0
    %1452 = vmatpush.msra.mxu0 %v479
    %1453 = vmatpush.msra.mxu0 %v477
    %1454 = vmatpush.msra.mxu0 %v475
    %1455 = vmatpush.msra.mxu0 %v473
    %1456 = vmatpush.msra.mxu0 %v471
    %1457 = vmatpush.msra.mxu0 %v469
    %1458 = vmatpush.msra.mxu0 %v467
    %1459 = vmatpush.msra.mxu0 %v465
    %1460 = vmatpush.msra.mxu0 %v463
    %1461 = vmatpush.msra.mxu0 %v461
    %1462 = vmatpush.msra.mxu0 %v459
    %1463 = vmatpush.msra.mxu0 %v457
    %1464 = vmatpush.msra.mxu0 %v455
    %1465 = vmatpush.msra.mxu0 %v453
    %1466 = vmatpush.msra.mxu0 %v451
    %1467 = vmatpush.msra.mxu0 %v449
    %1468 = vmatmul.f32.gmra.mxu0 %v42
    %v1469 = vpop.f32.mrf.mxu0
    %v1470 = vadd.f32 %v1441, %v1469
    %1471 = vmatmul.f32.gmra.mxu0 %v74
    %v1472 = vpop.f32.mrf.mxu0
    %v1473 = vadd.f32 %v1444, %v1472
    %1474 = vmatmul.f32.gmra.mxu0 %v106
    %v1475 = vpop.f32.mrf.mxu0
    %v1476 = vadd.f32 %v1447, %v1475
    %1477 = vmatmul.f32.gmra.mxu0 %v138
    %v1478 = vpop.f32.mrf.mxu0
    %v1479 = vadd.f32 %v1450, %v1478
    %1480 = vdwg.mxu0
    %1481 = vmatpush.msra.mxu0 %v511
    %1482 = vmatpush.msra.mxu0 %v509
    %1483 = vmatpush.msra.mxu0 %v507
    %1484 = vmatpush.msra.mxu0 %v505
    %1485 = vmatpush.msra.mxu0 %v503
    %1486 = vmatpush.msra.mxu0 %v501
    %1487 = vmatpush.msra.mxu0 %v499
    %1488 = vmatpush.msra.mxu0 %v497
    %1489 = vmatpush.msra.mxu0 %v495
    %1490 = vmatpush.msra.mxu0 %v493
    %1491 = vmatpush.msra.mxu0 %v491
    %1492 = vmatpush.msra.mxu0 %v489
    %1493 = vmatpush.msra.mxu0 %v487
    %1494 = vmatpush.msra.mxu0 %v485
    %1495 = vmatpush.msra.mxu0 %v483
    %1496 = vmatpush.msra.mxu0 %v481
    %1497 = vmatmul.f32.gmra.mxu0 %v43
    %v1498 = vpop.f32.mrf.mxu0
    %v1499 = vadd.f32 %v1470, %v1498
    %1500 = vmatmul.f32.gmra.mxu0 %v75
    %v1501 = vpop.f32.mrf.mxu0
    %v1502 = vadd.f32 %v1473, %v1501
    %1503 = vmatmul.f32.gmra.mxu0 %v107
    %v1504 = vpop.f32.mrf.mxu0
    %v1505 = vadd.f32 %v1476, %v1504
    %1506 = vmatmul.f32.gmra.mxu0 %v139
    %v1507 = vpop.f32.mrf.mxu0
    %v1508 = vadd.f32 %v1479, %v1507
    %1509 = vdwg.mxu0
    %1510 = vmatpush.msra.mxu0 %v543
    %1511 = vmatpush.msra.mxu0 %v541
    %1512 = vmatpush.msra.mxu0 %v539
    %1513 = vmatpush.msra.mxu0 %v537
    %1514 = vmatpush.msra.mxu0 %v535
    %1515 = vmatpush.msra.mxu0 %v533
    %1516 = vmatpush.msra.mxu0 %v531
    %1517 = vmatpush.msra.mxu0 %v529
    %1518 = vmatpush.msra.mxu0 %v527
    %1519 = vmatpush.msra.mxu0 %v525
    %1520 = vmatpush.msra.mxu0 %v523
    %1521 = vmatpush.msra.mxu0 %v521
    %1522 = vmatpush.msra.mxu0 %v519
    %1523 = vmatpush.msra.mxu0 %v517
    %1524 = vmatpush.msra.mxu0 %v515
    %1525 = vmatpush.msra.mxu0 %v513
    %1526 = vmatmul.f32.gmra.mxu0 %v44
    %v1527 = vpop.f32.mrf.mxu0
    %v1528 = vadd.f32 %v1499, %v1527
    %1529 = vmatmul.f32.gmra.mxu0 %v76
    %v1530 = vpop.f32.mrf.mxu0
    %v1531 = vadd.f32 %v1502, %v1530
    %1532 = vmatmul.f32.gmra.mxu0 %v108
    %v1533 = vpop.f32.mrf.mxu0
    %v1534 = vadd.f32 %v1505, %v1533
    %1535 = vmatmul.f32.gmra.mxu0 %v140
    %v1536 = vpop.f32.mrf.mxu0
    %v1537 = vadd.f32 %v1508, %v1536
    %1538 = vdwg.mxu0
    %1539 = vmatpush.msra.mxu0 %v575
    %1540 = vmatpush.msra.mxu0 %v573
    %1541 = vmatpush.msra.mxu0 %v571
    %1542 = vmatpush.msra.mxu0 %v569
    %1543 = vmatpush.msra.mxu0 %v567
    %1544 = vmatpush.msra.mxu0 %v565
    %1545 = vmatpush.msra.mxu0 %v563
    %1546 = vmatpush.msra.mxu0 %v561
    %1547 = vmatpush.msra.mxu0 %v559
    %1548 = vmatpush.msra.mxu0 %v557
    %1549 = vmatpush.msra.mxu0 %v555
    %1550 = vmatpush.msra.mxu0 %v553
    %1551 = vmatpush.msra.mxu0 %v551
    %1552 = vmatpush.msra.mxu0 %v549
    %1553 = vmatpush.msra.mxu0 %v547
    %1554 = vmatpush.msra.mxu0 %v545
    %1555 = vmatmul.f32.gmra.mxu0 %v45
    %v1556 = vpop.f32.mrf.mxu0
    %v1557 = vadd.f32 %v1528, %v1556
    %1558 = vmatmul.f32.gmra.mxu0 %v77
    %v1559 = vpop.f32.mrf.mxu0
    %v1560 = vadd.f32 %v1531, %v1559
    %1561 = vmatmul.f32.gmra.mxu0 %v109
    %v1562 = vpop.f32.mrf.mxu0
    %v1563 = vadd.f32 %v1534, %v1562
    %1564 = vmatmul.f32.gmra.mxu0 %v141
    %v1565 = vpop.f32.mrf.mxu0
    %v1566 = vadd.f32 %v1537, %v1565
    %1567 = vdwg.mxu0
    %1568 = vmatpush.msra.mxu0 %v607
    %1569 = vmatpush.msra.mxu0 %v605
    %1570 = vmatpush.msra.mxu0 %v603
    %1571 = vmatpush.msra.mxu0 %v601
    %1572 = vmatpush.msra.mxu0 %v599
    %1573 = vmatpush.msra.mxu0 %v597
    %1574 = vmatpush.msra.mxu0 %v595
    %1575 = vmatpush.msra.mxu0 %v593
    %1576 = vmatpush.msra.mxu0 %v591
    %1577 = vmatpush.msra.mxu0 %v589
    %1578 = vmatpush.msra.mxu0 %v587
    %1579 = vmatpush.msra.mxu0 %v585
    %1580 = vmatpush.msra.mxu0 %v583
    %1581 = vmatpush.msra.mxu0 %v581
    %1582 = vmatpush.msra.mxu0 %v579
    %1583 = vmatpush.msra.mxu0 %v577
    %1584 = vmatmul.f32.gmra.mxu0 %v46
    %v1585 = vpop.f32.mrf.mxu0
    %v1586 = vadd.f32 %v1557, %v1585
    %1587 = vmatmul.f32.gmra.mxu0 %v78
    %v1588 = vpop.f32.mrf.mxu0
    %v1589 = vadd.f32 %v1560, %v1588
    %1590 = vmatmul.f32.gmra.mxu0 %v110
    %v1591 = vpop.f32.mrf.mxu0
    %v1592 = vadd.f32 %v1563, %v1591
    %1593 = vmatmul.f32.gmra.mxu0 %v142
    %v1594 = vpop.f32.mrf.mxu0
    %v1595 = vadd.f32 %v1566, %v1594
    %1596 = vdwg.mxu0
    %1597 = vmatpush.msra.mxu0 %v639
    %1598 = vmatpush.msra.mxu0 %v637
    %1599 = vmatpush.msra.mxu0 %v635
    %1600 = vmatpush.msra.mxu0 %v633
    %1601 = vmatpush.msra.mxu0 %v631
    %1602 = vmatpush.msra.mxu0 %v629
    %1603 = vmatpush.msra.mxu0 %v627
    %1604 = vmatpush.msra.mxu0 %v625
    %1605 = vmatpush.msra.mxu0 %v623
    %1606 = vmatpush.msra.mxu0 %v621
    %1607 = vmatpush.msra.mxu0 %v619
    %1608 = vmatpush.msra.mxu0 %v617
    %1609 = vmatpush.msra.mxu0 %v615
    %1610 = vmatpush.msra.mxu0 %v613
    %1611 = vmatpush.msra.mxu0 %v611
    %1612 = vmatpush.msra.mxu0 %v609
    %1613 = vmatmul.f32.gmra.mxu0 %v47
    %v1614 = vpop.f32.mrf.mxu0
    %v1615 = vadd.f32 %v1586, %v1614
    %1616 = vmatmul.f32.gmra.mxu0 %v79
    %v1617 = vpop.f32.mrf.mxu0
    %v1618 = vadd.f32 %v1589, %v1617
    %1619 = vmatmul.f32.gmra.mxu0 %v111
    %v1620 = vpop.f32.mrf.mxu0
    %v1621 = vadd.f32 %v1592, %v1620
    %1622 = vmatmul.f32.gmra.mxu0 %v143
    %v1623 = vpop.f32.mrf.mxu0
    %v1624 = vadd.f32 %v1595, %v1623
    %1625 = vdwg.mxu0
    %1626 = vmatpush.msra.mxu0 %v671
    %1627 = vmatpush.msra.mxu0 %v669
    %1628 = vmatpush.msra.mxu0 %v667
    %1629 = vmatpush.msra.mxu0 %v665
    %1630 = vmatpush.msra.mxu0 %v663
    %1631 = vmatpush.msra.mxu0 %v661
    %1632 = vmatpush.msra.mxu0 %v659
    %1633 = vmatpush.msra.mxu0 %v657
    %1634 = vmatpush.msra.mxu0 %v655
    %1635 = vmatpush.msra.mxu0 %v653
    %1636 = vmatpush.msra.mxu0 %v651
    %1637 = vmatpush.msra.mxu0 %v649
    %1638 = vmatpush.msra.mxu0 %v647
    %1639 = vmatpush.msra.mxu0 %v645
    %1640 = vmatpush.msra.mxu0 %v643
    %1641 = vmatpush.msra.mxu0 %v641
    %1642 = vmatmul.f32.gmra.mxu0 %v48
    %v1643 = vpop.f32.mrf.mxu0
    %v1644 = vadd.f32 %v1615, %v1643
    %1645 = vmatmul.f32.gmra.mxu0 %v80
    %v1646 = vpop.f32.mrf.mxu0
    %v1647 = vadd.f32 %v1618, %v1646
    %1648 = vmatmul.f32.gmra.mxu0 %v112
    %v1649 = vpop.f32.mrf.mxu0
    %v1650 = vadd.f32 %v1621, %v1649
    %1651 = vmatmul.f32.gmra.mxu0 %v144
    %v1652 = vpop.f32.mrf.mxu0
    %v1653 = vadd.f32 %v1624, %v1652
    %1654 = vdwg.mxu0
    %1655 = vmatpush.msra.mxu0 %v703
    %1656 = vmatpush.msra.mxu0 %v701
    %1657 = vmatpush.msra.mxu0 %v699
    %1658 = vmatpush.msra.mxu0 %v697
    %1659 = vmatpush.msra.mxu0 %v695
    %1660 = vmatpush.msra.mxu0 %v693
    %1661 = vmatpush.msra.mxu0 %v691
    %1662 = vmatpush.msra.mxu0 %v689
    %1663 = vmatpush.msra.mxu0 %v687
    %1664 = vmatpush.msra.mxu0 %v685
    %1665 = vmatpush.msra.mxu0 %v683
    %1666 = vmatpush.msra.mxu0 %v681
    %1667 = vmatpush.msra.mxu0 %v679
    %1668 = vmatpush.msra.mxu0 %v677
    %1669 = vmatpush.msra.mxu0 %v675
    %1670 = vmatpush.msra.mxu0 %v673
    %1671 = vmatmul.f32.gmra.mxu0 %v49
    %v1672 = vpop.f32.mrf.mxu0
    %v1673 = vadd.f32 %v1644, %v1672
    %1674 = vmatmul.f32.gmra.mxu0 %v81
    %v1675 = vpop.f32.mrf.mxu0
    %v1676 = vadd.f32 %v1647, %v1675
    %1677 = vmatmul.f32.gmra.mxu0 %v113
    %v1678 = vpop.f32.mrf.mxu0
    %v1679 = vadd.f32 %v1650, %v1678
    %1680 = vmatmul.f32.gmra.mxu0 %v145
    %v1681 = vpop.f32.mrf.mxu0
    %v1682 = vadd.f32 %v1653, %v1681
    %1683 = vdwg.mxu0
    %1684 = vmatpush.msra.mxu0 %v735
    %1685 = vmatpush.msra.mxu0 %v733
    %1686 = vmatpush.msra.mxu0 %v731
    %1687 = vmatpush.msra.mxu0 %v729
    %1688 = vmatpush.msra.mxu0 %v727
    %1689 = vmatpush.msra.mxu0 %v725
    %1690 = vmatpush.msra.mxu0 %v723
    %1691 = vmatpush.msra.mxu0 %v721
    %1692 = vmatpush.msra.mxu0 %v719
    %1693 = vmatpush.msra.mxu0 %v717
    %1694 = vmatpush.msra.mxu0 %v715
    %1695 = vmatpush.msra.mxu0 %v713
    %1696 = vmatpush.msra.mxu0 %v711
    %1697 = vmatpush.msra.mxu0 %v709
    %1698 = vmatpush.msra.mxu0 %v707
    %1699 = vmatpush.msra.mxu0 %v705
    %1700 = vmatmul.f32.gmra.mxu0 %v50
    %v1701 = vpop.f32.mrf.mxu0
    %v1702 = vadd.f32 %v1673, %v1701
    %1703 = vmatmul.f32.gmra.mxu0 %v82
    %v1704 = vpop.f32.mrf.mxu0
    %v1705 = vadd.f32 %v1676, %v1704
    %1706 = vmatmul.f32.gmra.mxu0 %v114
    %v1707 = vpop.f32.mrf.mxu0
    %v1708 = vadd.f32 %v1679, %v1707
    %1709 = vmatmul.f32.gmra.mxu0 %v146
    %v1710 = vpop.f32.mrf.mxu0
    %v1711 = vadd.f32 %v1682, %v1710
    %1712 = vdwg.mxu0
    %1713 = vmatpush.msra.mxu0 %v767
    %1714 = vmatpush.msra.mxu0 %v765
    %1715 = vmatpush.msra.mxu0 %v763
    %1716 = vmatpush.msra.mxu0 %v761
    %1717 = vmatpush.msra.mxu0 %v759
    %1718 = vmatpush.msra.mxu0 %v757
    %1719 = vmatpush.msra.mxu0 %v755
    %1720 = vmatpush.msra.mxu0 %v753
    %1721 = vmatpush.msra.mxu0 %v751
    %1722 = vmatpush.msra.mxu0 %v749
    %1723 = vmatpush.msra.mxu0 %v747
    %1724 = vmatpush.msra.mxu0 %v745
    %1725 = vmatpush.msra.mxu0 %v743
    %1726 = vmatpush.msra.mxu0 %v741
    %1727 = vmatpush.msra.mxu0 %v739
    %1728 = vmatpush.msra.mxu0 %v737
    %1729 = vmatmul.f32.gmra.mxu0 %v51
    %v1730 = vpop.f32.mrf.mxu0
    %v1731 = vadd.f32 %v1702, %v1730
    %1732 = vmatmul.f32.gmra.mxu0 %v83
    %v1733 = vpop.f32.mrf.mxu0
    %v1734 = vadd.f32 %v1705, %v1733
    %1735 = vmatmul.f32.gmra.mxu0 %v115
    %v1736 = vpop.f32.mrf.mxu0
    %v1737 = vadd.f32 %v1708, %v1736
    %1738 = vmatmul.f32.gmra.mxu0 %v147
    %v1739 = vpop.f32.mrf.mxu0
    %v1740 = vadd.f32 %v1711, %v1739
    %1741 = vdwg.mxu0
    %1742 = vmatpush.msra.mxu0 %v799
    %1743 = vmatpush.msra.mxu0 %v797
    %1744 = vmatpush.msra.mxu0 %v795
    %1745 = vmatpush.msra.mxu0 %v793
    %1746 = vmatpush.msra.mxu0 %v791
    %1747 = vmatpush.msra.mxu0 %v789
    %1748 = vmatpush.msra.mxu0 %v787
    %1749 = vmatpush.msra.mxu0 %v785
    %1750 = vmatpush.msra.mxu0 %v783
    %1751 = vmatpush.msra.mxu0 %v781
    %1752 = vmatpush.msra.mxu0 %v779
    %1753 = vmatpush.msra.mxu0 %v777
    %1754 = vmatpush.msra.mxu0 %v775
    %1755 = vmatpush.msra.mxu0 %v773
    %1756 = vmatpush.msra.mxu0 %v771
    %1757 = vmatpush.msra.mxu0 %v769
    %1758 = vmatmul.f32.gmra.mxu0 %v52
    %v1759 = vpop.f32.mrf.mxu0
    %v1760 = vadd.f32 %v1731, %v1759
    %1761 = vmatmul.f32.gmra.mxu0 %v84
    %v1762 = vpop.f32.mrf.mxu0
    %v1763 = vadd.f32 %v1734, %v1762
    %1764 = vmatmul.f32.gmra.mxu0 %v116
    %v1765 = vpop.f32.mrf.mxu0
    %v1766 = vadd.f32 %v1737, %v1765
    %1767 = vmatmul.f32.gmra.mxu0 %v148
    %v1768 = vpop.f32.mrf.mxu0
    %v1769 = vadd.f32 %v1740, %v1768
    %1770 = vdwg.mxu0
    %1771 = vmatpush.msra.mxu0 %v831
    %1772 = vmatpush.msra.mxu0 %v829
    %1773 = vmatpush.msra.mxu0 %v827
    %1774 = vmatpush.msra.mxu0 %v825
    %1775 = vmatpush.msra.mxu0 %v823
    %1776 = vmatpush.msra.mxu0 %v821
    %1777 = vmatpush.msra.mxu0 %v819
    %1778 = vmatpush.msra.mxu0 %v817
    %1779 = vmatpush.msra.mxu0 %v815
    %1780 = vmatpush.msra.mxu0 %v813
    %1781 = vmatpush.msra.mxu0 %v811
    %1782 = vmatpush.msra.mxu0 %v809
    %1783 = vmatpush.msra.mxu0 %v807
    %1784 = vmatpush.msra.mxu0 %v805
    %1785 = vmatpush.msra.mxu0 %v803
    %1786 = vmatpush.msra.mxu0 %v801
    %1787 = vmatmul.f32.gmra.mxu0 %v53
    %v1788 = vpop.f32.mrf.mxu0
    %v1789 = vadd.f32 %v1760, %v1788
    %1790 = vmatmul.f32.gmra.mxu0 %v85
    %v1791 = vpop.f32.mrf.mxu0
    %v1792 = vadd.f32 %v1763, %v1791
    %1793 = vmatmul.f32.gmra.mxu0 %v117
    %v1794 = vpop.f32.mrf.mxu0
    %v1795 = vadd.f32 %v1766, %v1794
    %1796 = vmatmul.f32.gmra.mxu0 %v149
    %v1797 = vpop.f32.mrf.mxu0
    %v1798 = vadd.f32 %v1769, %v1797
    %1799 = vdwg.mxu0
    %1800 = vmatpush.msra.mxu0 %v863
    %1801 = vmatpush.msra.mxu0 %v861
    %1802 = vmatpush.msra.mxu0 %v859
    %1803 = vmatpush.msra.mxu0 %v857
    %1804 = vmatpush.msra.mxu0 %v855
    %1805 = vmatpush.msra.mxu0 %v853
    %1806 = vmatpush.msra.mxu0 %v851
    %1807 = vmatpush.msra.mxu0 %v849
    %1808 = vmatpush.msra.mxu0 %v847
    %1809 = vmatpush.msra.mxu0 %v845
    %1810 = vmatpush.msra.mxu0 %v843
    %1811 = vmatpush.msra.mxu0 %v841
    %1812 = vmatpush.msra.mxu0 %v839
    %1813 = vmatpush.msra.mxu0 %v837
    %1814 = vmatpush.msra.mxu0 %v835
    %1815 = vmatpush.msra.mxu0 %v833
    %1816 = vmatmul.f32.gmra.mxu0 %v54
    %v1817 = vpop.f32.mrf.mxu0
    %v1818 = vadd.f32 %v1789, %v1817
    %1819 = vmatmul.f32.gmra.mxu0 %v86
    %v1820 = vpop.f32.mrf.mxu0
    %v1821 = vadd.f32 %v1792, %v1820
    %1822 = vmatmul.f32.gmra.mxu0 %v118
    %v1823 = vpop.f32.mrf.mxu0
    %v1824 = vadd.f32 %v1795, %v1823
    %1825 = vmatmul.f32.gmra.mxu0 %v150
    %v1826 = vpop.f32.mrf.mxu0
    %v1827 = vadd.f32 %v1798, %v1826
    %1828 = vdwg.mxu0
    %1829 = vmatpush.msra.mxu0 %v895
    %1830 = vmatpush.msra.mxu0 %v893
    %1831 = vmatpush.msra.mxu0 %v891
    %1832 = vmatpush.msra.mxu0 %v889
    %1833 = vmatpush.msra.mxu0 %v887
    %1834 = vmatpush.msra.mxu0 %v885
    %1835 = vmatpush.msra.mxu0 %v883
    %1836 = vmatpush.msra.mxu0 %v881
    %1837 = vmatpush.msra.mxu0 %v879
    %1838 = vmatpush.msra.mxu0 %v877
    %1839 = vmatpush.msra.mxu0 %v875
    %1840 = vmatpush.msra.mxu0 %v873
    %1841 = vmatpush.msra.mxu0 %v871
    %1842 = vmatpush.msra.mxu0 %v869
    %1843 = vmatpush.msra.mxu0 %v867
    %1844 = vmatpush.msra.mxu0 %v865
    %1845 = vmatmul.f32.gmra.mxu0 %v55
    %v1846 = vpop.f32.mrf.mxu0
    %v1847 = vadd.f32 %v1818, %v1846
    %1848 = vmatmul.f32.gmra.mxu0 %v87
    %v1849 = vpop.f32.mrf.mxu0
    %v1850 = vadd.f32 %v1821, %v1849
    %1851 = vmatmul.f32.gmra.mxu0 %v119
    %v1852 = vpop.f32.mrf.mxu0
    %v1853 = vadd.f32 %v1824, %v1852
    %1854 = vmatmul.f32.gmra.mxu0 %v151
    %v1855 = vpop.f32.mrf.mxu0
    %v1856 = vadd.f32 %v1827, %v1855
    %1857 = vdwg.mxu0
    %1858 = vmatpush.msra.mxu0 %v927
    %1859 = vmatpush.msra.mxu0 %v925
    %1860 = vmatpush.msra.mxu0 %v923
    %1861 = vmatpush.msra.mxu0 %v921
    %1862 = vmatpush.msra.mxu0 %v919
    %1863 = vmatpush.msra.mxu0 %v917
    %1864 = vmatpush.msra.mxu0 %v915
    %1865 = vmatpush.msra.mxu0 %v913
    %1866 = vmatpush.msra.mxu0 %v911
    %1867 = vmatpush.msra.mxu0 %v909
    %1868 = vmatpush.msra.mxu0 %v907
    %1869 = vmatpush.msra.mxu0 %v905
    %1870 = vmatpush.msra.mxu0 %v903
    %1871 = vmatpush.msra.mxu0 %v901
    %1872 = vmatpush.msra.mxu0 %v899
    %1873 = vmatpush.msra.mxu0 %v897
    %1874 = vmatmul.f32.gmra.mxu0 %v56
    %v1875 = vpop.f32.mrf.mxu0
    %v1876 = vadd.f32 %v1847, %v1875
    %1877 = vmatmul.f32.gmra.mxu0 %v88
    %v1878 = vpop.f32.mrf.mxu0
    %v1879 = vadd.f32 %v1850, %v1878
    %1880 = vmatmul.f32.gmra.mxu0 %v120
    %v1881 = vpop.f32.mrf.mxu0
    %v1882 = vadd.f32 %v1853, %v1881
    %1883 = vmatmul.f32.gmra.mxu0 %v152
    %v1884 = vpop.f32.mrf.mxu0
    %v1885 = vadd.f32 %v1856, %v1884
    %1886 = vdwg.mxu0
    %1887 = vmatpush.msra.mxu0 %v959
    %1888 = vmatpush.msra.mxu0 %v957
    %1889 = vmatpush.msra.mxu0 %v955
    %1890 = vmatpush.msra.mxu0 %v953
    %1891 = vmatpush.msra.mxu0 %v951
    %1892 = vmatpush.msra.mxu0 %v949
    %1893 = vmatpush.msra.mxu0 %v947
    %1894 = vmatpush.msra.mxu0 %v945
    %1895 = vmatpush.msra.mxu0 %v943
    %1896 = vmatpush.msra.mxu0 %v941
    %1897 = vmatpush.msra.mxu0 %v939
    %1898 = vmatpush.msra.mxu0 %v937
    %1899 = vmatpush.msra.mxu0 %v935
    %1900 = vmatpush.msra.mxu0 %v933
    %1901 = vmatpush.msra.mxu0 %v931
    %1902 = vmatpush.msra.mxu0 %v929
    %1903 = vmatmul.f32.gmra.mxu0 %v57
    %v1904 = vpop.f32.mrf.mxu0
    %v1905 = vadd.f32 %v1876, %v1904
    %1906 = vmatmul.f32.gmra.mxu0 %v89
    %v1907 = vpop.f32.mrf.mxu0
    %v1908 = vadd.f32 %v1879, %v1907
    %1909 = vmatmul.f32.gmra.mxu0 %v121
    %v1910 = vpop.f32.mrf.mxu0
    %v1911 = vadd.f32 %v1882, %v1910
    %1912 = vmatmul.f32.gmra.mxu0 %v153
    %v1913 = vpop.f32.mrf.mxu0
    %v1914 = vadd.f32 %v1885, %v1913
    %1915 = vdwg.mxu0
    %1916 = vmatpush.msra.mxu0 %v991
    %1917 = vmatpush.msra.mxu0 %v989
    %1918 = vmatpush.msra.mxu0 %v987
    %1919 = vmatpush.msra.mxu0 %v985
    %1920 = vmatpush.msra.mxu0 %v983
    %1921 = vmatpush.msra.mxu0 %v981
    %1922 = vmatpush.msra.mxu0 %v979
    %1923 = vmatpush.msra.mxu0 %v977
    %1924 = vmatpush.msra.mxu0 %v975
    %1925 = vmatpush.msra.mxu0 %v973
    %1926 = vmatpush.msra.mxu0 %v971
    %1927 = vmatpush.msra.mxu0 %v969
    %1928 = vmatpush.msra.mxu0 %v967
    %1929 = vmatpush.msra.mxu0 %v965
    %1930 = vmatpush.msra.mxu0 %v963
    %1931 = vmatpush.msra.mxu0 %v961
    %1932 = vmatmul.f32.gmra.mxu0 %v58
    %v1933 = vpop.f32.mrf.mxu0
    %v1934 = vadd.f32 %v1905, %v1933
    %1935 = vmatmul.f32.gmra.mxu0 %v90
    %v1936 = vpop.f32.mrf.mxu0
    %v1937 = vadd.f32 %v1908, %v1936
    %1938 = vmatmul.f32.gmra.mxu0 %v122
    %v1939 = vpop.f32.mrf.mxu0
    %v1940 = vadd.f32 %v1911, %v1939
    %1941 = vmatmul.f32.gmra.mxu0 %v154
    %v1942 = vpop.f32.mrf.mxu0
    %v1943 = vadd.f32 %v1914, %v1942
    %1944 = vdwg.mxu0
    %1945 = vmatpush.msra.mxu0 %v1023
    %1946 = vmatpush.msra.mxu0 %v1021
    %1947 = vmatpush.msra.mxu0 %v1019
    %1948 = vmatpush.msra.mxu0 %v1017
    %1949 = vmatpush.msra.mxu0 %v1015
    %1950 = vmatpush.msra.mxu0 %v1013
    %1951 = vmatpush.msra.mxu0 %v1011
    %1952 = vmatpush.msra.mxu0 %v1009
    %1953 = vmatpush.msra.mxu0 %v1007
    %1954 = vmatpush.msra.mxu0 %v1005
    %1955 = vmatpush.msra.mxu0 %v1003
    %1956 = vmatpush.msra.mxu0 %v1001
    %1957 = vmatpush.msra.mxu0 %v999
    %1958 = vmatpush.msra.mxu0 %v997
    %1959 = vmatpush.msra.mxu0 %v995
    %1960 = vmatpush.msra.mxu0 %v993
    %1961 = vmatmul.f32.gmra.mxu0 %v59
    %v1962 = vpop.f32.mrf.mxu0
    %v1963 = vadd.f32 %v1934, %v1962
    %1964 = vmatmul.f32.gmra.mxu0 %v91
    %v1965 = vpop.f32.mrf.mxu0
    %v1966 = vadd.f32 %v1937, %v1965
    %1967 = vmatmul.f32.gmra.mxu0 %v123
    %v1968 = vpop.f32.mrf.mxu0
    %v1969 = vadd.f32 %v1940, %v1968
    %1970 = vmatmul.f32.gmra.mxu0 %v155
    %v1971 = vpop.f32.mrf.mxu0
    %v1972 = vadd.f32 %v1943, %v1971
    %1973 = vdwg.mxu0
    %1974 = vmatpush.msra.mxu0 %v1055
    %1975 = vmatpush.msra.mxu0 %v1053
    %1976 = vmatpush.msra.mxu0 %v1051
    %1977 = vmatpush.msra.mxu0 %v1049
    %1978 = vmatpush.msra.mxu0 %v1047
    %1979 = vmatpush.msra.mxu0 %v1045
    %1980 = vmatpush.msra.mxu0 %v1043
    %1981 = vmatpush.msra.mxu0 %v1041
    %1982 = vmatpush.msra.mxu0 %v1039
    %1983 = vmatpush.msra.mxu0 %v1037
    %1984 = vmatpush.msra.mxu0 %v1035
    %1985 = vmatpush.msra.mxu0 %v1033
    %1986 = vmatpush.msra.mxu0 %v1031
    %1987 = vmatpush.msra.mxu0 %v1029
    %1988 = vmatpush.msra.mxu0 %v1027
    %1989 = vmatpush.msra.mxu0 %v1025
    %1990 = vmatmul.f32.gmra.mxu0 %v60
    %v1991 = vpop.f32.mrf.mxu0
    %v1992 = vadd.f32 %v1963, %v1991
    %1993 = vmatmul.f32.gmra.mxu0 %v92
    %v1994 = vpop.f32.mrf.mxu0
    %v1995 = vadd.f32 %v1966, %v1994
    %1996 = vmatmul.f32.gmra.mxu0 %v124
    %v1997 = vpop.f32.mrf.mxu0
    %v1998 = vadd.f32 %v1969, %v1997
    %1999 = vmatmul.f32.gmra.mxu0 %v156
    %v2000 = vpop.f32.mrf.mxu0
    %v2001 = vadd.f32 %v1972, %v2000
    %2002 = vdwg.mxu0
    %2003 = vmatpush.msra.mxu0 %v1087
    %2004 = vmatpush.msra.mxu0 %v1085
    %2005 = vmatpush.msra.mxu0 %v1083
    %2006 = vmatpush.msra.mxu0 %v1081
    %2007 = vmatpush.msra.mxu0 %v1079
    %2008 = vmatpush.msra.mxu0 %v1077
    %2009 = vmatpush.msra.mxu0 %v1075
    %2010 = vmatpush.msra.mxu0 %v1073
    %2011 = vmatpush.msra.mxu0 %v1071
    %2012 = vmatpush.msra.mxu0 %v1069
    %2013 = vmatpush.msra.mxu0 %v1067
    %2014 = vmatpush.msra.mxu0 %v1065
    %2015 = vmatpush.msra.mxu0 %v1063
    %2016 = vmatpush.msra.mxu0 %v1061
    %2017 = vmatpush.msra.mxu0 %v1059
    %2018 = vmatpush.msra.mxu0 %v1057
    %2019 = vmatmul.f32.gmra.mxu0 %v61
    %v2020 = vpop.f32.mrf.mxu0
    %v2021 = vadd.f32 %v1992, %v2020
    %2022 = vmatmul.f32.gmra.mxu0 %v93
    %v2023 = vpop.f32.mrf.mxu0
    %v2024 = vadd.f32 %v1995, %v2023
    %2025 = vmatmul.f32.gmra.mxu0 %v125
    %v2026 = vpop.f32.mrf.mxu0
    %v2027 = vadd.f32 %v1998, %v2026
    %2028 = vmatmul.f32.gmra.mxu0 %v157
    %v2029 = vpop.f32.mrf.mxu0
    %v2030 = vadd.f32 %v2001, %v2029
    %2031 = vdwg.mxu0
    %2032 = vmatpush.msra.mxu0 %v1119
    %2033 = vmatpush.msra.mxu0 %v1117
    %2034 = vmatpush.msra.mxu0 %v1115
    %2035 = vmatpush.msra.mxu0 %v1113
    %2036 = vmatpush.msra.mxu0 %v1111
    %2037 = vmatpush.msra.mxu0 %v1109
    %2038 = vmatpush.msra.mxu0 %v1107
    %2039 = vmatpush.msra.mxu0 %v1105
    %2040 = vmatpush.msra.mxu0 %v1103
    %2041 = vmatpush.msra.mxu0 %v1101
    %2042 = vmatpush.msra.mxu0 %v1099
    %2043 = vmatpush.msra.mxu0 %v1097
    %2044 = vmatpush.msra.mxu0 %v1095
    %2045 = vmatpush.msra.mxu0 %v1093
    %2046 = vmatpush.msra.mxu0 %v1091
    %2047 = vmatpush.msra.mxu0 %v1089
    %2048 = vmatmul.f32.gmra.mxu0 %v62
    %v2049 = vpop.f32.mrf.mxu0
    %v2050 = vadd.f32 %v2021, %v2049
    %2051 = vmatmul.f32.gmra.mxu0 %v94
    %v2052 = vpop.f32.mrf.mxu0
    %v2053 = vadd.f32 %v2024, %v2052
    %2054 = vmatmul.f32.gmra.mxu0 %v126
    %v2055 = vpop.f32.mrf.mxu0
    %v2056 = vadd.f32 %v2027, %v2055
    %2057 = vmatmul.f32.gmra.mxu0 %v158
    %v2058 = vpop.f32.mrf.mxu0
    %v2059 = vadd.f32 %v2030, %v2058
    %2060 = vdwg.mxu0
    %2061 = vmatpush.msra.mxu0 %v1151
    %2062 = vmatpush.msra.mxu0 %v1149
    %2063 = vmatpush.msra.mxu0 %v1147
    %2064 = vmatpush.msra.mxu0 %v1145
    %2065 = vmatpush.msra.mxu0 %v1143
    %2066 = vmatpush.msra.mxu0 %v1141
    %2067 = vmatpush.msra.mxu0 %v1139
    %2068 = vmatpush.msra.mxu0 %v1137
    %2069 = vmatpush.msra.mxu0 %v1135
    %2070 = vmatpush.msra.mxu0 %v1133
    %2071 = vmatpush.msra.mxu0 %v1131
    %2072 = vmatpush.msra.mxu0 %v1129
    %2073 = vmatpush.msra.mxu0 %v1127
    %2074 = vmatpush.msra.mxu0 %v1125
    %2075 = vmatpush.msra.mxu0 %v1123
    %2076 = vmatpush.msra.mxu0 %v1121
    %2077 = vmatmul.f32.gmra.mxu0 %v63
    %v2078 = vpop.f32.mrf.mxu0
    %v2079 = vadd.f32 %v2050, %v2078
    %2080 = vmatmul.f32.gmra.mxu0 %v95
    %v2081 = vpop.f32.mrf.mxu0
    %v2082 = vadd.f32 %v2053, %v2081
    %2083 = vmatmul.f32.gmra.mxu0 %v127
    %v2084 = vpop.f32.mrf.mxu0
    %v2085 = vadd.f32 %v2056, %v2084
    %2086 = vmatmul.f32.gmra.mxu0 %v159
    %v2087 = vpop.f32.mrf.mxu0
    %v2088 = vadd.f32 %v2059, %v2087
    %2089 = vdwg.mxu0
    %2090 = vmatpush.msra.mxu0 %v1183
    %2091 = vmatpush.msra.mxu0 %v1181
    %2092 = vmatpush.msra.mxu0 %v1179
    %2093 = vmatpush.msra.mxu0 %v1177
    %2094 = vmatpush.msra.mxu0 %v1175
    %2095 = vmatpush.msra.mxu0 %v1173
    %2096 = vmatpush.msra.mxu0 %v1171
    %2097 = vmatpush.msra.mxu0 %v1169
    %2098 = vmatpush.msra.mxu0 %v1167
    %2099 = vmatpush.msra.mxu0 %v1165
    %2100 = vmatpush.msra.mxu0 %v1163
    %2101 = vmatpush.msra.mxu0 %v1161
    %2102 = vmatpush.msra.mxu0 %v1159
    %2103 = vmatpush.msra.mxu0 %v1157
    %2104 = vmatpush.msra.mxu0 %v1155
    %2105 = vmatpush.msra.mxu0 %v1153
    %2106 = vmatmul.f32.gmra.mxu0 %v64
    %v2107 = vpop.f32.mrf.mxu0
    %v2108 = vadd.f32 %v2079, %v2107
    %2109 = vmatmul.f32.gmra.mxu0 %v96
    %v2110 = vpop.f32.mrf.mxu0
    %v2111 = vadd.f32 %v2082, %v2110
    %2112 = vmatmul.f32.gmra.mxu0 %v128
    %v2113 = vpop.f32.mrf.mxu0
    %v2114 = vadd.f32 %v2085, %v2113
    %2115 = vmatmul.f32.gmra.mxu0 %v160
    %v2116 = vpop.f32.mrf.mxu0
    %v2117 = vadd.f32 %v2088, %v2116
    %2118 = vdwg.mxu0
    %2119 = vmatpush.msra.mxu0 %v192
    %2120 = vmatpush.msra.mxu0 %v190
    %2121 = vmatpush.msra.mxu0 %v188
    %2122 = vmatpush.msra.mxu0 %v186
    %2123 = vmatpush.msra.mxu0 %v184
    %2124 = vmatpush.msra.mxu0 %v182
    %2125 = vmatpush.msra.mxu0 %v180
    %2126 = vmatpush.msra.mxu0 %v178
    %2127 = vmatpush.msra.mxu0 %v176
    %2128 = vmatpush.msra.mxu0 %v174
    %2129 = vmatpush.msra.mxu0 %v172
    %2130 = vmatpush.msra.mxu0 %v170
    %2131 = vmatpush.msra.mxu0 %v168
    %2132 = vmatpush.msra.mxu0 %v166
    %2133 = vmatpush.msra.mxu0 %v164
    %2134 = vmatpush.msra.mxu0 %v162
    %2135 = vmatmul.f32.gmra.mxu0 %v33
    %v2136 = vpop.f32.mrf.mxu0
    %v2137 = vadd.f32 %v1188, %v2136
    %2138 = vmatmul.f32.gmra.mxu0 %v65
    %v2139 = vpop.f32.mrf.mxu0
    %v2140 = vadd.f32 %v1188, %v2139
    %2141 = vmatmul.f32.gmra.mxu0 %v97
    %v2142 = vpop.f32.mrf.mxu0
    %v2143 = vadd.f32 %v1188, %v2142
    %2144 = vmatmul.f32.gmra.mxu0 %v129
    %v2145 = vpop.f32.mrf.mxu0
    %v2146 = vadd.f32 %v1188, %v2145
    %2147 = vdwg.mxu0
    %2148 = vmatpush.msra.mxu0 %v224
    %2149 = vmatpush.msra.mxu0 %v222
    %2150 = vmatpush.msra.mxu0 %v220
    %2151 = vmatpush.msra.mxu0 %v218
    %2152 = vmatpush.msra.mxu0 %v216
    %2153 = vmatpush.msra.mxu0 %v214
    %2154 = vmatpush.msra.mxu0 %v212
    %2155 = vmatpush.msra.mxu0 %v210
    %2156 = vmatpush.msra.mxu0 %v208
    %2157 = vmatpush.msra.mxu0 %v206
    %2158 = vmatpush.msra.mxu0 %v204
    %2159 = vmatpush.msra.mxu0 %v202
    %2160 = vmatpush.msra.mxu0 %v200
    %2161 = vmatpush.msra.mxu0 %v198
    %2162 = vmatpush.msra.mxu0 %v196
    %2163 = vmatpush.msra.mxu0 %v194
    %2164 = vmatmul.f32.gmra.mxu0 %v34
    %v2165 = vpop.f32.mrf.mxu0
    %v2166 = vadd.f32 %v2137, %v2165
    %2167 = vmatmul.f32.gmra.mxu0 %v66
    %v2168 = vpop.f32.mrf.mxu0
    %v2169 = vadd.f32 %v2140, %v2168
    %2170 = vmatmul.f32.gmra.mxu0 %v98
    %v2171 = vpop.f32.mrf.mxu0
    %v2172 = vadd.f32 %v2143, %v2171
    %2173 = vmatmul.f32.gmra.mxu0 %v130
    %v2174 = vpop.f32.mrf.mxu0
    %v2175 = vadd.f32 %v2146, %v2174
    %2176 = vdwg.mxu0
    %2177 = vmatpush.msra.mxu0 %v256
    %2178 = vmatpush.msra.mxu0 %v254
    %2179 = vmatpush.msra.mxu0 %v252
    %2180 = vmatpush.msra.mxu0 %v250
    %2181 = vmatpush.msra.mxu0 %v248
    %2182 = vmatpush.msra.mxu0 %v246
    %2183 = vmatpush.msra.mxu0 %v244
    %2184 = vmatpush.msra.mxu0 %v242
    %2185 = vmatpush.msra.mxu0 %v240
    %2186 = vmatpush.msra.mxu0 %v238
    %2187 = vmatpush.msra.mxu0 %v236
    %2188 = vmatpush.msra.mxu0 %v234
    %2189 = vmatpush.msra.mxu0 %v232
    %2190 = vmatpush.msra.mxu0 %v230
    %2191 = vmatpush.msra.mxu0 %v228
    %2192 = vmatpush.msra.mxu0 %v226
    %2193 = vmatmul.f32.gmra.mxu0 %v35
    %v2194 = vpop.f32.mrf.mxu0
    %v2195 = vadd.f32 %v2166, %v2194
    %2196 = vmatmul.f32.gmra.mxu0 %v67
    %v2197 = vpop.f32.mrf.mxu0
    %v2198 = vadd.f32 %v2169, %v2197
    %2199 = vmatmul.f32.gmra.mxu0 %v99
    %v2200 = vpop.f32.mrf.mxu0
    %v2201 = vadd.f32 %v2172, %v2200
    %2202 = vmatmul.f32.gmra.mxu0 %v131
    %v2203 = vpop.f32.mrf.mxu0
    %v2204 = vadd.f32 %v2175, %v2203
    %2205 = vdwg.mxu0
    %2206 = vmatpush.msra.mxu0 %v288
    %2207 = vmatpush.msra.mxu0 %v286
    %2208 = vmatpush.msra.mxu0 %v284
    %2209 = vmatpush.msra.mxu0 %v282
    %2210 = vmatpush.msra.mxu0 %v280
    %2211 = vmatpush.msra.mxu0 %v278
    %2212 = vmatpush.msra.mxu0 %v276
    %2213 = vmatpush.msra.mxu0 %v274
    %2214 = vmatpush.msra.mxu0 %v272
    %2215 = vmatpush.msra.mxu0 %v270
    %2216 = vmatpush.msra.mxu0 %v268
    %2217 = vmatpush.msra.mxu0 %v266
    %2218 = vmatpush.msra.mxu0 %v264
    %2219 = vmatpush.msra.mxu0 %v262
    %2220 = vmatpush.msra.mxu0 %v260
    %2221 = vmatpush.msra.mxu0 %v258
    %2222 = vmatmul.f32.gmra.mxu0 %v36
    %v2223 = vpop.f32.mrf.mxu0
    %v2224 = vadd.f32 %v2195, %v2223
    %2225 = vmatmul.f32.gmra.mxu0 %v68
    %v2226 = vpop.f32.mrf.mxu0
    %v2227 = vadd.f32 %v2198, %v2226
    %2228 = vmatmul.f32.gmra.mxu0 %v100
    %v2229 = vpop.f32.mrf.mxu0
    %v2230 = vadd.f32 %v2201, %v2229
    %2231 = vmatmul.f32.gmra.mxu0 %v132
    %v2232 = vpop.f32.mrf.mxu0
    %v2233 = vadd.f32 %v2204, %v2232
    %2234 = vdwg.mxu0
    %2235 = vmatpush.msra.mxu0 %v320
    %2236 = vmatpush.msra.mxu0 %v318
    %2237 = vmatpush.msra.mxu0 %v316
    %2238 = vmatpush.msra.mxu0 %v314
    %2239 = vmatpush.msra.mxu0 %v312
    %2240 = vmatpush.msra.mxu0 %v310
    %2241 = vmatpush.msra.mxu0 %v308
    %2242 = vmatpush.msra.mxu0 %v306
    %2243 = vmatpush.msra.mxu0 %v304
    %2244 = vmatpush.msra.mxu0 %v302
    %2245 = vmatpush.msra.mxu0 %v300
    %2246 = vmatpush.msra.mxu0 %v298
    %2247 = vmatpush.msra.mxu0 %v296
    %2248 = vmatpush.msra.mxu0 %v294
    %2249 = vmatpush.msra.mxu0 %v292
    %2250 = vmatpush.msra.mxu0 %v290
    %2251 = vmatmul.f32.gmra.mxu0 %v37
    %v2252 = vpop.f32.mrf.mxu0
    %v2253 = vadd.f32 %v2224, %v2252
    %2254 = vmatmul.f32.gmra.mxu0 %v69
    %v2255 = vpop.f32.mrf.mxu0
    %v2256 = vadd.f32 %v2227, %v2255
    %2257 = vmatmul.f32.gmra.mxu0 %v101
    %v2258 = vpop.f32.mrf.mxu0
    %v2259 = vadd.f32 %v2230, %v2258
    %2260 = vmatmul.f32.gmra.mxu0 %v133
    %v2261 = vpop.f32.mrf.mxu0
    %v2262 = vadd.f32 %v2233, %v2261
    %2263 = vdwg.mxu0
    %2264 = vmatpush.msra.mxu0 %v352
    %2265 = vmatpush.msra.mxu0 %v350
    %2266 = vmatpush.msra.mxu0 %v348
    %2267 = vmatpush.msra.mxu0 %v346
    %2268 = vmatpush.msra.mxu0 %v344
    %2269 = vmatpush.msra.mxu0 %v342
    %2270 = vmatpush.msra.mxu0 %v340
    %2271 = vmatpush.msra.mxu0 %v338
    %2272 = vmatpush.msra.mxu0 %v336
    %2273 = vmatpush.msra.mxu0 %v334
    %2274 = vmatpush.msra.mxu0 %v332
    %2275 = vmatpush.msra.mxu0 %v330
    %2276 = vmatpush.msra.mxu0 %v328
    %2277 = vmatpush.msra.mxu0 %v326
    %2278 = vmatpush.msra.mxu0 %v324
    %2279 = vmatpush.msra.mxu0 %v322
    %2280 = vmatmul.f32.gmra.mxu0 %v38
    %v2281 = vpop.f32.mrf.mxu0
    %v2282 = vadd.f32 %v2253, %v2281
    %2283 = vmatmul.f32.gmra.mxu0 %v70
    %v2284 = vpop.f32.mrf.mxu0
    %v2285 = vadd.f32 %v2256, %v2284
    %2286 = vmatmul.f32.gmra.mxu0 %v102
    %v2287 = vpop.f32.mrf.mxu0
    %v2288 = vadd.f32 %v2259, %v2287
    %2289 = vmatmul.f32.gmra.mxu0 %v134
    %v2290 = vpop.f32.mrf.mxu0
    %v2291 = vadd.f32 %v2262, %v2290
    %2292 = vdwg.mxu0
    %2293 = vmatpush.msra.mxu0 %v384
    %2294 = vmatpush.msra.mxu0 %v382
    %2295 = vmatpush.msra.mxu0 %v380
    %2296 = vmatpush.msra.mxu0 %v378
    %2297 = vmatpush.msra.mxu0 %v376
    %2298 = vmatpush.msra.mxu0 %v374
    %2299 = vmatpush.msra.mxu0 %v372
    %2300 = vmatpush.msra.mxu0 %v370
    %2301 = vmatpush.msra.mxu0 %v368
    %2302 = vmatpush.msra.mxu0 %v366
    %2303 = vmatpush.msra.mxu0 %v364
    %2304 = vmatpush.msra.mxu0 %v362
    %2305 = vmatpush.msra.mxu0 %v360
    %2306 = vmatpush.msra.mxu0 %v358
    %2307 = vmatpush.msra.mxu0 %v356
    %2308 = vmatpush.msra.mxu0 %v354
    %2309 = vmatmul.f32.gmra.mxu0 %v39
    %v2310 = vpop.f32.mrf.mxu0
    %v2311 = vadd.f32 %v2282, %v2310
    %2312 = vmatmul.f32.gmra.mxu0 %v71
    %v2313 = vpop.f32.mrf.mxu0
    %v2314 = vadd.f32 %v2285, %v2313
    %2315 = vmatmul.f32.gmra.mxu0 %v103
    %v2316 = vpop.f32.mrf.mxu0
    %v2317 = vadd.f32 %v2288, %v2316
    %2318 = vmatmul.f32.gmra.mxu0 %v135
    %v2319 = vpop.f32.mrf.mxu0
    %v2320 = vadd.f32 %v2291, %v2319
    %2321 = vdwg.mxu0
    %2322 = vmatpush.msra.mxu0 %v416
    %2323 = vmatpush.msra.mxu0 %v414
    %2324 = vmatpush.msra.mxu0 %v412
    %2325 = vmatpush.msra.mxu0 %v410
    %2326 = vmatpush.msra.mxu0 %v408
    %2327 = vmatpush.msra.mxu0 %v406
    %2328 = vmatpush.msra.mxu0 %v404
    %2329 = vmatpush.msra.mxu0 %v402
    %2330 = vmatpush.msra.mxu0 %v400
    %2331 = vmatpush.msra.mxu0 %v398
    %2332 = vmatpush.msra.mxu0 %v396
    %2333 = vmatpush.msra.mxu0 %v394
    %2334 = vmatpush.msra.mxu0 %v392
    %2335 = vmatpush.msra.mxu0 %v390
    %2336 = vmatpush.msra.mxu0 %v388
    %2337 = vmatpush.msra.mxu0 %v386
    %2338 = vmatmul.f32.gmra.mxu0 %v40
    %v2339 = vpop.f32.mrf.mxu0
    %v2340 = vadd.f32 %v2311, %v2339
    %2341 = vmatmul.f32.gmra.mxu0 %v72
    %v2342 = vpop.f32.mrf.mxu0
    %v2343 = vadd.f32 %v2314, %v2342
    %2344 = vmatmul.f32.gmra.mxu0 %v104
    %v2345 = vpop.f32.mrf.mxu0
    %v2346 = vadd.f32 %v2317, %v2345
    %2347 = vmatmul.f32.gmra.mxu0 %v136
    %v2348 = vpop.f32.mrf.mxu0
    %v2349 = vadd.f32 %v2320, %v2348
    %2350 = vdwg.mxu0
    %2351 = vmatpush.msra.mxu0 %v448
    %2352 = vmatpush.msra.mxu0 %v446
    %2353 = vmatpush.msra.mxu0 %v444
    %2354 = vmatpush.msra.mxu0 %v442
    %2355 = vmatpush.msra.mxu0 %v440
    %2356 = vmatpush.msra.mxu0 %v438
    %2357 = vmatpush.msra.mxu0 %v436
    %2358 = vmatpush.msra.mxu0 %v434
    %2359 = vmatpush.msra.mxu0 %v432
    %2360 = vmatpush.msra.mxu0 %v430
    %2361 = vmatpush.msra.mxu0 %v428
    %2362 = vmatpush.msra.mxu0 %v426
    %2363 = vmatpush.msra.mxu0 %v424
    %2364 = vmatpush.msra.mxu0 %v422
    %2365 = vmatpush.msra.mxu0 %v420
    %2366 = vmatpush.msra.mxu0 %v418
    %2367 = vmatmul.f32.gmra.mxu0 %v41
    %v2368 = vpop.f32.mrf.mxu0
    %v2369 = vadd.f32 %v2340, %v2368
    %2370 = vmatmul.f32.gmra.mxu0 %v73
    %v2371 = vpop.f32.mrf.mxu0
    %v2372 = vadd.f32 %v2343, %v2371
    %2373 = vmatmul.f32.gmra.mxu0 %v105
    %v2374 = vpop.f32.mrf.mxu0
    %v2375 = vadd.f32 %v2346, %v2374
    %2376 = vmatmul.f32.gmra.mxu0 %v137
    %v2377 = vpop.f32.mrf.mxu0
    %v2378 = vadd.f32 %v2349, %v2377
    %2379 = vdwg.mxu0
    %2380 = vmatpush.msra.mxu0 %v480
    %2381 = vmatpush.msra.mxu0 %v478
    %2382 = vmatpush.msra.mxu0 %v476
    %2383 = vmatpush.msra.mxu0 %v474
    %2384 = vmatpush.msra.mxu0 %v472
    %2385 = vmatpush.msra.mxu0 %v470
    %2386 = vmatpush.msra.mxu0 %v468
    %2387 = vmatpush.msra.mxu0 %v466
    %2388 = vmatpush.msra.mxu0 %v464
    %2389 = vmatpush.msra.mxu0 %v462
    %2390 = vmatpush.msra.mxu0 %v460
    %2391 = vmatpush.msra.mxu0 %v458
    %2392 = vmatpush.msra.mxu0 %v456
    %2393 = vmatpush.msra.mxu0 %v454
    %2394 = vmatpush.msra.mxu0 %v452
    %2395 = vmatpush.msra.mxu0 %v450
    %2396 = vmatmul.f32.gmra.mxu0 %v42
    %v2397 = vpop.f32.mrf.mxu0
    %v2398 = vadd.f32 %v2369, %v2397
    %2399 = vmatmul.f32.gmra.mxu0 %v74
    %v2400 = vpop.f32.mrf.mxu0
    %v2401 = vadd.f32 %v2372, %v2400
    %2402 = vmatmul.f32.gmra.mxu0 %v106
    %v2403 = vpop.f32.mrf.mxu0
    %v2404 = vadd.f32 %v2375, %v2403
    %2405 = vmatmul.f32.gmra.mxu0 %v138
    %v2406 = vpop.f32.mrf.mxu0
    %v2407 = vadd.f32 %v2378, %v2406
    %2408 = vdwg.mxu0
    %2409 = vmatpush.msra.mxu0 %v512
    %2410 = vmatpush.msra.mxu0 %v510
    %2411 = vmatpush.msra.mxu0 %v508
    %2412 = vmatpush.msra.mxu0 %v506
    %2413 = vmatpush.msra.mxu0 %v504
    %2414 = vmatpush.msra.mxu0 %v502
    %2415 = vmatpush.msra.mxu0 %v500
    %2416 = vmatpush.msra.mxu0 %v498
    %2417 = vmatpush.msra.mxu0 %v496
    %2418 = vmatpush.msra.mxu0 %v494
    %2419 = vmatpush.msra.mxu0 %v492
    %2420 = vmatpush.msra.mxu0 %v490
    %2421 = vmatpush.msra.mxu0 %v488
    %2422 = vmatpush.msra.mxu0 %v486
    %2423 = vmatpush.msra.mxu0 %v484
    %2424 = vmatpush.msra.mxu0 %v482
    %2425 = vmatmul.f32.gmra.mxu0 %v43
    %v2426 = vpop.f32.mrf.mxu0
    %v2427 = vadd.f32 %v2398, %v2426
    %2428 = vmatmul.f32.gmra.mxu0 %v75
    %v2429 = vpop.f32.mrf.mxu0
    %v2430 = vadd.f32 %v2401, %v2429
    %2431 = vmatmul.f32.gmra.mxu0 %v107
    %v2432 = vpop.f32.mrf.mxu0
    %v2433 = vadd.f32 %v2404, %v2432
    %2434 = vmatmul.f32.gmra.mxu0 %v139
    %v2435 = vpop.f32.mrf.mxu0
    %v2436 = vadd.f32 %v2407, %v2435
    %2437 = vdwg.mxu0
    %2438 = vmatpush.msra.mxu0 %v544
    %2439 = vmatpush.msra.mxu0 %v542
    %2440 = vmatpush.msra.mxu0 %v540
    %2441 = vmatpush.msra.mxu0 %v538
    %2442 = vmatpush.msra.mxu0 %v536
    %2443 = vmatpush.msra.mxu0 %v534
    %2444 = vmatpush.msra.mxu0 %v532
    %2445 = vmatpush.msra.mxu0 %v530
    %2446 = vmatpush.msra.mxu0 %v528
    %2447 = vmatpush.msra.mxu0 %v526
    %2448 = vmatpush.msra.mxu0 %v524
    %2449 = vmatpush.msra.mxu0 %v522
    %2450 = vmatpush.msra.mxu0 %v520
    %2451 = vmatpush.msra.mxu0 %v518
    %2452 = vmatpush.msra.mxu0 %v516
    %2453 = vmatpush.msra.mxu0 %v514
    %2454 = vmatmul.f32.gmra.mxu0 %v44
    %v2455 = vpop.f32.mrf.mxu0
    %v2456 = vadd.f32 %v2427, %v2455
    %2457 = vmatmul.f32.gmra.mxu0 %v76
    %v2458 = vpop.f32.mrf.mxu0
    %v2459 = vadd.f32 %v2430, %v2458
    %2460 = vmatmul.f32.gmra.mxu0 %v108
    %v2461 = vpop.f32.mrf.mxu0
    %v2462 = vadd.f32 %v2433, %v2461
    %2463 = vmatmul.f32.gmra.mxu0 %v140
    %v2464 = vpop.f32.mrf.mxu0
    %v2465 = vadd.f32 %v2436, %v2464
    %2466 = vdwg.mxu0
    %2467 = vmatpush.msra.mxu0 %v576
    %2468 = vmatpush.msra.mxu0 %v574
    %2469 = vmatpush.msra.mxu0 %v572
    %2470 = vmatpush.msra.mxu0 %v570
    %2471 = vmatpush.msra.mxu0 %v568
    %2472 = vmatpush.msra.mxu0 %v566
    %2473 = vmatpush.msra.mxu0 %v564
    %2474 = vmatpush.msra.mxu0 %v562
    %2475 = vmatpush.msra.mxu0 %v560
    %2476 = vmatpush.msra.mxu0 %v558
    %2477 = vmatpush.msra.mxu0 %v556
    %2478 = vmatpush.msra.mxu0 %v554
    %2479 = vmatpush.msra.mxu0 %v552
    %2480 = vmatpush.msra.mxu0 %v550
    %2481 = vmatpush.msra.mxu0 %v548
    %2482 = vmatpush.msra.mxu0 %v546
    %2483 = vmatmul.f32.gmra.mxu0 %v45
    %v2484 = vpop.f32.mrf.mxu0
    %v2485 = vadd.f32 %v2456, %v2484
    %2486 = vmatmul.f32.gmra.mxu0 %v77
    %v2487 = vpop.f32.mrf.mxu0
    %v2488 = vadd.f32 %v2459, %v2487
    %2489 = vmatmul.f32.gmra.mxu0 %v109
    %v2490 = vpop.f32.mrf.mxu0
    %v2491 = vadd.f32 %v2462, %v2490
    %2492 = vmatmul.f32.gmra.mxu0 %v141
    %v2493 = vpop.f32.mrf.mxu0
    %v2494 = vadd.f32 %v2465, %v2493
    %2495 = vdwg.mxu0
    %2496 = vmatpush.msra.mxu0 %v608
    %2497 = vmatpush.msra.mxu0 %v606
    %2498 = vmatpush.msra.mxu0 %v604
    %2499 = vmatpush.msra.mxu0 %v602
    %2500 = vmatpush.msra.mxu0 %v600
    %2501 = vmatpush.msra.mxu0 %v598
    %2502 = vmatpush.msra.mxu0 %v596
    %2503 = vmatpush.msra.mxu0 %v594
    %2504 = vmatpush.msra.mxu0 %v592
    %2505 = vmatpush.msra.mxu0 %v590
    %2506 = vmatpush.msra.mxu0 %v588
    %2507 = vmatpush.msra.mxu0 %v586
    %2508 = vmatpush.msra.mxu0 %v584
    %2509 = vmatpush.msra.mxu0 %v582
    %2510 = vmatpush.msra.mxu0 %v580
    %2511 = vmatpush.msra.mxu0 %v578
    %2512 = vmatmul.f32.gmra.mxu0 %v46
    %v2513 = vpop.f32.mrf.mxu0
    %v2514 = vadd.f32 %v2485, %v2513
    %2515 = vmatmul.f32.gmra.mxu0 %v78
    %v2516 = vpop.f32.mrf.mxu0
    %v2517 = vadd.f32 %v2488, %v2516
    %2518 = vmatmul.f32.gmra.mxu0 %v110
    %v2519 = vpop.f32.mrf.mxu0
    %v2520 = vadd.f32 %v2491, %v2519
    %2521 = vmatmul.f32.gmra.mxu0 %v142
    %v2522 = vpop.f32.mrf.mxu0
    %v2523 = vadd.f32 %v2494, %v2522
    %2524 = vdwg.mxu0
    %2525 = vmatpush.msra.mxu0 %v640
    %2526 = vmatpush.msra.mxu0 %v638
    %2527 = vmatpush.msra.mxu0 %v636
    %2528 = vmatpush.msra.mxu0 %v634
    %2529 = vmatpush.msra.mxu0 %v632
    %2530 = vmatpush.msra.mxu0 %v630
    %2531 = vmatpush.msra.mxu0 %v628
    %2532 = vmatpush.msra.mxu0 %v626
    %2533 = vmatpush.msra.mxu0 %v624
    %2534 = vmatpush.msra.mxu0 %v622
    %2535 = vmatpush.msra.mxu0 %v620
    %2536 = vmatpush.msra.mxu0 %v618
    %2537 = vmatpush.msra.mxu0 %v616
    %2538 = vmatpush.msra.mxu0 %v614
    %2539 = vmatpush.msra.mxu0 %v612
    %2540 = vmatpush.msra.mxu0 %v610
    %2541 = vmatmul.f32.gmra.mxu0 %v47
    %v2542 = vpop.f32.mrf.mxu0
    %v2543 = vadd.f32 %v2514, %v2542
    %2544 = vmatmul.f32.gmra.mxu0 %v79
    %v2545 = vpop.f32.mrf.mxu0
    %v2546 = vadd.f32 %v2517, %v2545
    %2547 = vmatmul.f32.gmra.mxu0 %v111
    %v2548 = vpop.f32.mrf.mxu0
    %v2549 = vadd.f32 %v2520, %v2548
    %2550 = vmatmul.f32.gmra.mxu0 %v143
    %v2551 = vpop.f32.mrf.mxu0
    %v2552 = vadd.f32 %v2523, %v2551
    %2553 = vdwg.mxu0
    %2554 = vmatpush.msra.mxu0 %v672
    %2555 = vmatpush.msra.mxu0 %v670
    %2556 = vmatpush.msra.mxu0 %v668
    %2557 = vmatpush.msra.mxu0 %v666
    %2558 = vmatpush.msra.mxu0 %v664
    %2559 = vmatpush.msra.mxu0 %v662
    %2560 = vmatpush.msra.mxu0 %v660
    %2561 = vmatpush.msra.mxu0 %v658
    %2562 = vmatpush.msra.mxu0 %v656
    %2563 = vmatpush.msra.mxu0 %v654
    %2564 = vmatpush.msra.mxu0 %v652
    %2565 = vmatpush.msra.mxu0 %v650
    %2566 = vmatpush.msra.mxu0 %v648
    %2567 = vmatpush.msra.mxu0 %v646
    %2568 = vmatpush.msra.mxu0 %v644
    %2569 = vmatpush.msra.mxu0 %v642
    %2570 = vmatmul.f32.gmra.mxu0 %v48
    %v2571 = vpop.f32.mrf.mxu0
    %v2572 = vadd.f32 %v2543, %v2571
    %2573 = vmatmul.f32.gmra.mxu0 %v80
    %v2574 = vpop.f32.mrf.mxu0
    %v2575 = vadd.f32 %v2546, %v2574
    %2576 = vmatmul.f32.gmra.mxu0 %v112
    %v2577 = vpop.f32.mrf.mxu0
    %v2578 = vadd.f32 %v2549, %v2577
    %2579 = vmatmul.f32.gmra.mxu0 %v144
    %v2580 = vpop.f32.mrf.mxu0
    %v2581 = vadd.f32 %v2552, %v2580
    %2582 = vdwg.mxu0
    %2583 = vmatpush.msra.mxu0 %v704
    %2584 = vmatpush.msra.mxu0 %v702
    %2585 = vmatpush.msra.mxu0 %v700
    %2586 = vmatpush.msra.mxu0 %v698
    %2587 = vmatpush.msra.mxu0 %v696
    %2588 = vmatpush.msra.mxu0 %v694
    %2589 = vmatpush.msra.mxu0 %v692
    %2590 = vmatpush.msra.mxu0 %v690
    %2591 = vmatpush.msra.mxu0 %v688
    %2592 = vmatpush.msra.mxu0 %v686
    %2593 = vmatpush.msra.mxu0 %v684
    %2594 = vmatpush.msra.mxu0 %v682
    %2595 = vmatpush.msra.mxu0 %v680
    %2596 = vmatpush.msra.mxu0 %v678
    %2597 = vmatpush.msra.mxu0 %v676
    %2598 = vmatpush.msra.mxu0 %v674
    %2599 = vmatmul.f32.gmra.mxu0 %v49
    %v2600 = vpop.f32.mrf.mxu0
    %v2601 = vadd.f32 %v2572, %v2600
    %2602 = vmatmul.f32.gmra.mxu0 %v81
    %v2603 = vpop.f32.mrf.mxu0
    %v2604 = vadd.f32 %v2575, %v2603
    %2605 = vmatmul.f32.gmra.mxu0 %v113
    %v2606 = vpop.f32.mrf.mxu0
    %v2607 = vadd.f32 %v2578, %v2606
    %2608 = vmatmul.f32.gmra.mxu0 %v145
    %v2609 = vpop.f32.mrf.mxu0
    %v2610 = vadd.f32 %v2581, %v2609
    %2611 = vdwg.mxu0
    %2612 = vmatpush.msra.mxu0 %v736
    %2613 = vmatpush.msra.mxu0 %v734
    %2614 = vmatpush.msra.mxu0 %v732
    %2615 = vmatpush.msra.mxu0 %v730
    %2616 = vmatpush.msra.mxu0 %v728
    %2617 = vmatpush.msra.mxu0 %v726
    %2618 = vmatpush.msra.mxu0 %v724
    %2619 = vmatpush.msra.mxu0 %v722
    %2620 = vmatpush.msra.mxu0 %v720
    %2621 = vmatpush.msra.mxu0 %v718
    %2622 = vmatpush.msra.mxu0 %v716
    %2623 = vmatpush.msra.mxu0 %v714
    %2624 = vmatpush.msra.mxu0 %v712
    %2625 = vmatpush.msra.mxu0 %v710
    %2626 = vmatpush.msra.mxu0 %v708
    %2627 = vmatpush.msra.mxu0 %v706
    %2628 = vmatmul.f32.gmra.mxu0 %v50
    %v2629 = vpop.f32.mrf.mxu0
    %v2630 = vadd.f32 %v2601, %v2629
    %2631 = vmatmul.f32.gmra.mxu0 %v82
    %v2632 = vpop.f32.mrf.mxu0
    %v2633 = vadd.f32 %v2604, %v2632
    %2634 = vmatmul.f32.gmra.mxu0 %v114
    %v2635 = vpop.f32.mrf.mxu0
    %v2636 = vadd.f32 %v2607, %v2635
    %2637 = vmatmul.f32.gmra.mxu0 %v146
    %v2638 = vpop.f32.mrf.mxu0
    %v2639 = vadd.f32 %v2610, %v2638
    %2640 = vdwg.mxu0
    %2641 = vmatpush.msra.mxu0 %v768
    %2642 = vmatpush.msra.mxu0 %v766
    %2643 = vmatpush.msra.mxu0 %v764
    %2644 = vmatpush.msra.mxu0 %v762
    %2645 = vmatpush.msra.mxu0 %v760
    %2646 = vmatpush.msra.mxu0 %v758
    %2647 = vmatpush.msra.mxu0 %v756
    %2648 = vmatpush.msra.mxu0 %v754
    %2649 = vmatpush.msra.mxu0 %v752
    %2650 = vmatpush.msra.mxu0 %v750
    %2651 = vmatpush.msra.mxu0 %v748
    %2652 = vmatpush.msra.mxu0 %v746
    %2653 = vmatpush.msra.mxu0 %v744
    %2654 = vmatpush.msra.mxu0 %v742
    %2655 = vmatpush.msra.mxu0 %v740
    %2656 = vmatpush.msra.mxu0 %v738
    %2657 = vmatmul.f32.gmra.mxu0 %v51
    %v2658 = vpop.f32.mrf.mxu0
    %v2659 = vadd.f32 %v2630, %v2658
    %2660 = vmatmul.f32.gmra.mxu0 %v83
    %v2661 = vpop.f32.mrf.mxu0
    %v2662 = vadd.f32 %v2633, %v2661
    %2663 = vmatmul.f32.gmra.mxu0 %v115
    %v2664 = vpop.f32.mrf.mxu0
    %v2665 = vadd.f32 %v2636, %v2664
    %2666 = vmatmul.f32.gmra.mxu0 %v147
    %v2667 = vpop.f32.mrf.mxu0
    %v2668 = vadd.f32 %v2639, %v2667
    %2669 = vdwg.mxu0
    %2670 = vmatpush.msra.mxu0 %v800
    %2671 = vmatpush.msra.mxu0 %v798
    %2672 = vmatpush.msra.mxu0 %v796
    %2673 = vmatpush.msra.mxu0 %v794
    %2674 = vmatpush.msra.mxu0 %v792
    %2675 = vmatpush.msra.mxu0 %v790
    %2676 = vmatpush.msra.mxu0 %v788
    %2677 = vmatpush.msra.mxu0 %v786
    %2678 = vmatpush.msra.mxu0 %v784
    %2679 = vmatpush.msra.mxu0 %v782
    %2680 = vmatpush.msra.mxu0 %v780
    %2681 = vmatpush.msra.mxu0 %v778
    %2682 = vmatpush.msra.mxu0 %v776
    %2683 = vmatpush.msra.mxu0 %v774
    %2684 = vmatpush.msra.mxu0 %v772
    %2685 = vmatpush.msra.mxu0 %v770
    %2686 = vmatmul.f32.gmra.mxu0 %v52
    %v2687 = vpop.f32.mrf.mxu0
    %v2688 = vadd.f32 %v2659, %v2687
    %2689 = vmatmul.f32.gmra.mxu0 %v84
    %v2690 = vpop.f32.mrf.mxu0
    %v2691 = vadd.f32 %v2662, %v2690
    %2692 = vmatmul.f32.gmra.mxu0 %v116
    %v2693 = vpop.f32.mrf.mxu0
    %v2694 = vadd.f32 %v2665, %v2693
    %2695 = vmatmul.f32.gmra.mxu0 %v148
    %v2696 = vpop.f32.mrf.mxu0
    %v2697 = vadd.f32 %v2668, %v2696
    %2698 = vdwg.mxu0
    %2699 = vmatpush.msra.mxu0 %v832
    %2700 = vmatpush.msra.mxu0 %v830
    %2701 = vmatpush.msra.mxu0 %v828
    %2702 = vmatpush.msra.mxu0 %v826
    %2703 = vmatpush.msra.mxu0 %v824
    %2704 = vmatpush.msra.mxu0 %v822
    %2705 = vmatpush.msra.mxu0 %v820
    %2706 = vmatpush.msra.mxu0 %v818
    %2707 = vmatpush.msra.mxu0 %v816
    %2708 = vmatpush.msra.mxu0 %v814
    %2709 = vmatpush.msra.mxu0 %v812
    %2710 = vmatpush.msra.mxu0 %v810
    %2711 = vmatpush.msra.mxu0 %v808
    %2712 = vmatpush.msra.mxu0 %v806
    %2713 = vmatpush.msra.mxu0 %v804
    %2714 = vmatpush.msra.mxu0 %v802
    %2715 = vmatmul.f32.gmra.mxu0 %v53
    %v2716 = vpop.f32.mrf.mxu0
    %v2717 = vadd.f32 %v2688, %v2716
    %2718 = vmatmul.f32.gmra.mxu0 %v85
    %v2719 = vpop.f32.mrf.mxu0
    %v2720 = vadd.f32 %v2691, %v2719
    %2721 = vmatmul.f32.gmra.mxu0 %v117
    %v2722 = vpop.f32.mrf.mxu0
    %v2723 = vadd.f32 %v2694, %v2722
    %2724 = vmatmul.f32.gmra.mxu0 %v149
    %v2725 = vpop.f32.mrf.mxu0
    %v2726 = vadd.f32 %v2697, %v2725
    %2727 = vdwg.mxu0
    %2728 = vmatpush.msra.mxu0 %v864
    %2729 = vmatpush.msra.mxu0 %v862
    %2730 = vmatpush.msra.mxu0 %v860
    %2731 = vmatpush.msra.mxu0 %v858
    %2732 = vmatpush.msra.mxu0 %v856
    %2733 = vmatpush.msra.mxu0 %v854
    %2734 = vmatpush.msra.mxu0 %v852
    %2735 = vmatpush.msra.mxu0 %v850
    %2736 = vmatpush.msra.mxu0 %v848
    %2737 = vmatpush.msra.mxu0 %v846
    %2738 = vmatpush.msra.mxu0 %v844
    %2739 = vmatpush.msra.mxu0 %v842
    %2740 = vmatpush.msra.mxu0 %v840
    %2741 = vmatpush.msra.mxu0 %v838
    %2742 = vmatpush.msra.mxu0 %v836
    %2743 = vmatpush.msra.mxu0 %v834
    %2744 = vmatmul.f32.gmra.mxu0 %v54
    %v2745 = vpop.f32.mrf.mxu0
    %v2746 = vadd.f32 %v2717, %v2745
    %2747 = vmatmul.f32.gmra.mxu0 %v86
    %v2748 = vpop.f32.mrf.mxu0
    %v2749 = vadd.f32 %v2720, %v2748
    %2750 = vmatmul.f32.gmra.mxu0 %v118
    %v2751 = vpop.f32.mrf.mxu0
    %v2752 = vadd.f32 %v2723, %v2751
    %2753 = vmatmul.f32.gmra.mxu0 %v150
    %v2754 = vpop.f32.mrf.mxu0
    %v2755 = vadd.f32 %v2726, %v2754
    %2756 = vdwg.mxu0
    %2757 = vmatpush.msra.mxu0 %v896
    %2758 = vmatpush.msra.mxu0 %v894
    %2759 = vmatpush.msra.mxu0 %v892
    %2760 = vmatpush.msra.mxu0 %v890
    %2761 = vmatpush.msra.mxu0 %v888
    %2762 = vmatpush.msra.mxu0 %v886
    %2763 = vmatpush.msra.mxu0 %v884
    %2764 = vmatpush.msra.mxu0 %v882
    %2765 = vmatpush.msra.mxu0 %v880
    %2766 = vmatpush.msra.mxu0 %v878
    %2767 = vmatpush.msra.mxu0 %v876
    %2768 = vmatpush.msra.mxu0 %v874
    %2769 = vmatpush.msra.mxu0 %v872
    %2770 = vmatpush.msra.mxu0 %v870
    %2771 = vmatpush.msra.mxu0 %v868
    %2772 = vmatpush.msra.mxu0 %v866
    %2773 = vmatmul.f32.gmra.mxu0 %v55
    %v2774 = vpop.f32.mrf.mxu0
    %v2775 = vadd.f32 %v2746, %v2774
    %2776 = vmatmul.f32.gmra.mxu0 %v87
    %v2777 = vpop.f32.mrf.mxu0
    %v2778 = vadd.f32 %v2749, %v2777
    %2779 = vmatmul.f32.gmra.mxu0 %v119
    %v2780 = vpop.f32.mrf.mxu0
    %v2781 = vadd.f32 %v2752, %v2780
    %2782 = vmatmul.f32.gmra.mxu0 %v151
    %v2783 = vpop.f32.mrf.mxu0
    %v2784 = vadd.f32 %v2755, %v2783
    %2785 = vdwg.mxu0
    %2786 = vmatpush.msra.mxu0 %v928
    %2787 = vmatpush.msra.mxu0 %v926
    %2788 = vmatpush.msra.mxu0 %v924
    %2789 = vmatpush.msra.mxu0 %v922
    %2790 = vmatpush.msra.mxu0 %v920
    %2791 = vmatpush.msra.mxu0 %v918
    %2792 = vmatpush.msra.mxu0 %v916
    %2793 = vmatpush.msra.mxu0 %v914
    %2794 = vmatpush.msra.mxu0 %v912
    %2795 = vmatpush.msra.mxu0 %v910
    %2796 = vmatpush.msra.mxu0 %v908
    %2797 = vmatpush.msra.mxu0 %v906
    %2798 = vmatpush.msra.mxu0 %v904
    %2799 = vmatpush.msra.mxu0 %v902
    %2800 = vmatpush.msra.mxu0 %v900
    %2801 = vmatpush.msra.mxu0 %v898
    %2802 = vmatmul.f32.gmra.mxu0 %v56
    %v2803 = vpop.f32.mrf.mxu0
    %v2804 = vadd.f32 %v2775, %v2803
    %2805 = vmatmul.f32.gmra.mxu0 %v88
    %v2806 = vpop.f32.mrf.mxu0
    %v2807 = vadd.f32 %v2778, %v2806
    %2808 = vmatmul.f32.gmra.mxu0 %v120
    %v2809 = vpop.f32.mrf.mxu0
    %v2810 = vadd.f32 %v2781, %v2809
    %2811 = vmatmul.f32.gmra.mxu0 %v152
    %v2812 = vpop.f32.mrf.mxu0
    %v2813 = vadd.f32 %v2784, %v2812
    %2814 = vdwg.mxu0
    %2815 = vmatpush.msra.mxu0 %v960
    %2816 = vmatpush.msra.mxu0 %v958
    %2817 = vmatpush.msra.mxu0 %v956
    %2818 = vmatpush.msra.mxu0 %v954
    %2819 = vmatpush.msra.mxu0 %v952
    %2820 = vmatpush.msra.mxu0 %v950
    %2821 = vmatpush.msra.mxu0 %v948
    %2822 = vmatpush.msra.mxu0 %v946
    %2823 = vmatpush.msra.mxu0 %v944
    %2824 = vmatpush.msra.mxu0 %v942
    %2825 = vmatpush.msra.mxu0 %v940
    %2826 = vmatpush.msra.mxu0 %v938
    %2827 = vmatpush.msra.mxu0 %v936
    %2828 = vmatpush.msra.mxu0 %v934
    %2829 = vmatpush.msra.mxu0 %v932
    %2830 = vmatpush.msra.mxu0 %v930
    %2831 = vmatmul.f32.gmra.mxu0 %v57
    %v2832 = vpop.f32.mrf.mxu0
    %v2833 = vadd.f32 %v2804, %v2832
    %2834 = vmatmul.f32.gmra.mxu0 %v89
    %v2835 = vpop.f32.mrf.mxu0
    %v2836 = vadd.f32 %v2807, %v2835
    %2837 = vmatmul.f32.gmra.mxu0 %v121
    %v2838 = vpop.f32.mrf.mxu0
    %v2839 = vadd.f32 %v2810, %v2838
    %2840 = vmatmul.f32.gmra.mxu0 %v153
    %v2841 = vpop.f32.mrf.mxu0
    %v2842 = vadd.f32 %v2813, %v2841
    %2843 = vdwg.mxu0
    %2844 = vmatpush.msra.mxu0 %v992
    %2845 = vmatpush.msra.mxu0 %v990
    %2846 = vmatpush.msra.mxu0 %v988
    %2847 = vmatpush.msra.mxu0 %v986
    %2848 = vmatpush.msra.mxu0 %v984
    %2849 = vmatpush.msra.mxu0 %v982
    %2850 = vmatpush.msra.mxu0 %v980
    %2851 = vmatpush.msra.mxu0 %v978
    %2852 = vmatpush.msra.mxu0 %v976
    %2853 = vmatpush.msra.mxu0 %v974
    %2854 = vmatpush.msra.mxu0 %v972
    %2855 = vmatpush.msra.mxu0 %v970
    %2856 = vmatpush.msra.mxu0 %v968
    %2857 = vmatpush.msra.mxu0 %v966
    %2858 = vmatpush.msra.mxu0 %v964
    %2859 = vmatpush.msra.mxu0 %v962
    %2860 = vmatmul.f32.gmra.mxu0 %v58
    %v2861 = vpop.f32.mrf.mxu0
    %v2862 = vadd.f32 %v2833, %v2861
    %2863 = vmatmul.f32.gmra.mxu0 %v90
    %v2864 = vpop.f32.mrf.mxu0
    %v2865 = vadd.f32 %v2836, %v2864
    %2866 = vmatmul.f32.gmra.mxu0 %v122
    %v2867 = vpop.f32.mrf.mxu0
    %v2868 = vadd.f32 %v2839, %v2867
    %2869 = vmatmul.f32.gmra.mxu0 %v154
    %v2870 = vpop.f32.mrf.mxu0
    %v2871 = vadd.f32 %v2842, %v2870
    %2872 = vdwg.mxu0
    %2873 = vmatpush.msra.mxu0 %v1024
    %2874 = vmatpush.msra.mxu0 %v1022
    %2875 = vmatpush.msra.mxu0 %v1020
    %2876 = vmatpush.msra.mxu0 %v1018
    %2877 = vmatpush.msra.mxu0 %v1016
    %2878 = vmatpush.msra.mxu0 %v1014
    %2879 = vmatpush.msra.mxu0 %v1012
    %2880 = vmatpush.msra.mxu0 %v1010
    %2881 = vmatpush.msra.mxu0 %v1008
    %2882 = vmatpush.msra.mxu0 %v1006
    %2883 = vmatpush.msra.mxu0 %v1004
    %2884 = vmatpush.msra.mxu0 %v1002
    %2885 = vmatpush.msra.mxu0 %v1000
    %2886 = vmatpush.msra.mxu0 %v998
    %2887 = vmatpush.msra.mxu0 %v996
    %2888 = vmatpush.msra.mxu0 %v994
    %2889 = vmatmul.f32.gmra.mxu0 %v59
    %v2890 = vpop.f32.mrf.mxu0
    %v2891 = vadd.f32 %v2862, %v2890
    %2892 = vmatmul.f32.gmra.mxu0 %v91
    %v2893 = vpop.f32.mrf.mxu0
    %v2894 = vadd.f32 %v2865, %v2893
    %2895 = vmatmul.f32.gmra.mxu0 %v123
    %v2896 = vpop.f32.mrf.mxu0
    %v2897 = vadd.f32 %v2868, %v2896
    %2898 = vmatmul.f32.gmra.mxu0 %v155
    %v2899 = vpop.f32.mrf.mxu0
    %v2900 = vadd.f32 %v2871, %v2899
    %2901 = vdwg.mxu0
    %2902 = vmatpush.msra.mxu0 %v1056
    %2903 = vmatpush.msra.mxu0 %v1054
    %2904 = vmatpush.msra.mxu0 %v1052
    %2905 = vmatpush.msra.mxu0 %v1050
    %2906 = vmatpush.msra.mxu0 %v1048
    %2907 = vmatpush.msra.mxu0 %v1046
    %2908 = vmatpush.msra.mxu0 %v1044
    %2909 = vmatpush.msra.mxu0 %v1042
    %2910 = vmatpush.msra.mxu0 %v1040
    %2911 = vmatpush.msra.mxu0 %v1038
    %2912 = vmatpush.msra.mxu0 %v1036
    %2913 = vmatpush.msra.mxu0 %v1034
    %2914 = vmatpush.msra.mxu0 %v1032
    %2915 = vmatpush.msra.mxu0 %v1030
    %2916 = vmatpush.msra.mxu0 %v1028
    %2917 = vmatpush.msra.mxu0 %v1026
    %2918 = vmatmul.f32.gmra.mxu0 %v60
    %v2919 = vpop.f32.mrf.mxu0
    %v2920 = vadd.f32 %v2891, %v2919
    %2921 = vmatmul.f32.gmra.mxu0 %v92
    %v2922 = vpop.f32.mrf.mxu0
    %v2923 = vadd.f32 %v2894, %v2922
    %2924 = vmatmul.f32.gmra.mxu0 %v124
    %v2925 = vpop.f32.mrf.mxu0
    %v2926 = vadd.f32 %v2897, %v2925
    %2927 = vmatmul.f32.gmra.mxu0 %v156
    %v2928 = vpop.f32.mrf.mxu0
    %v2929 = vadd.f32 %v2900, %v2928
    %2930 = vdwg.mxu0
    %2931 = vmatpush.msra.mxu0 %v1088
    %2932 = vmatpush.msra.mxu0 %v1086
    %2933 = vmatpush.msra.mxu0 %v1084
    %2934 = vmatpush.msra.mxu0 %v1082
    %2935 = vmatpush.msra.mxu0 %v1080
    %2936 = vmatpush.msra.mxu0 %v1078
    %2937 = vmatpush.msra.mxu0 %v1076
    %2938 = vmatpush.msra.mxu0 %v1074
    %2939 = vmatpush.msra.mxu0 %v1072
    %2940 = vmatpush.msra.mxu0 %v1070
    %2941 = vmatpush.msra.mxu0 %v1068
    %2942 = vmatpush.msra.mxu0 %v1066
    %2943 = vmatpush.msra.mxu0 %v1064
    %2944 = vmatpush.msra.mxu0 %v1062
    %2945 = vmatpush.msra.mxu0 %v1060
    %2946 = vmatpush.msra.mxu0 %v1058
    %2947 = vmatmul.f32.gmra.mxu0 %v61
    %v2948 = vpop.f32.mrf.mxu0
    %v2949 = vadd.f32 %v2920, %v2948
    %2950 = vmatmul.f32.gmra.mxu0 %v93
    %v2951 = vpop.f32.mrf.mxu0
    %v2952 = vadd.f32 %v2923, %v2951
    %2953 = vmatmul.f32.gmra.mxu0 %v125
    %v2954 = vpop.f32.mrf.mxu0
    %v2955 = vadd.f32 %v2926, %v2954
    %2956 = vmatmul.f32.gmra.mxu0 %v157
    %v2957 = vpop.f32.mrf.mxu0
    %v2958 = vadd.f32 %v2929, %v2957
    %2959 = vdwg.mxu0
    %2960 = vmatpush.msra.mxu0 %v1120
    %2961 = vmatpush.msra.mxu0 %v1118
    %2962 = vmatpush.msra.mxu0 %v1116
    %2963 = vmatpush.msra.mxu0 %v1114
    %2964 = vmatpush.msra.mxu0 %v1112
    %2965 = vmatpush.msra.mxu0 %v1110
    %2966 = vmatpush.msra.mxu0 %v1108
    %2967 = vmatpush.msra.mxu0 %v1106
    %2968 = vmatpush.msra.mxu0 %v1104
    %2969 = vmatpush.msra.mxu0 %v1102
    %2970 = vmatpush.msra.mxu0 %v1100
    %2971 = vmatpush.msra.mxu0 %v1098
    %2972 = vmatpush.msra.mxu0 %v1096
    %2973 = vmatpush.msra.mxu0 %v1094
    %2974 = vmatpush.msra.mxu0 %v1092
    %2975 = vmatpush.msra.mxu0 %v1090
    %2976 = vmatmul.f32.gmra.mxu0 %v62
    %v2977 = vpop.f32.mrf.mxu0
    %v2978 = vadd.f32 %v2949, %v2977
    %2979 = vmatmul.f32.gmra.mxu0 %v94
    %v2980 = vpop.f32.mrf.mxu0
    %v2981 = vadd.f32 %v2952, %v2980
    %2982 = vmatmul.f32.gmra.mxu0 %v126
    %v2983 = vpop.f32.mrf.mxu0
    %v2984 = vadd.f32 %v2955, %v2983
    %2985 = vmatmul.f32.gmra.mxu0 %v158
    %v2986 = vpop.f32.mrf.mxu0
    %v2987 = vadd.f32 %v2958, %v2986
    %2988 = vdwg.mxu0
    %2989 = vmatpush.msra.mxu0 %v1152
    %2990 = vmatpush.msra.mxu0 %v1150
    %2991 = vmatpush.msra.mxu0 %v1148
    %2992 = vmatpush.msra.mxu0 %v1146
    %2993 = vmatpush.msra.mxu0 %v1144
    %2994 = vmatpush.msra.mxu0 %v1142
    %2995 = vmatpush.msra.mxu0 %v1140
    %2996 = vmatpush.msra.mxu0 %v1138
    %2997 = vmatpush.msra.mxu0 %v1136
    %2998 = vmatpush.msra.mxu0 %v1134
    %2999 = vmatpush.msra.mxu0 %v1132
    %3000 = vmatpush.msra.mxu0 %v1130
    %3001 = vmatpush.msra.mxu0 %v1128
    %3002 = vmatpush.msra.mxu0 %v1126
    %3003 = vmatpush.msra.mxu0 %v1124
    %3004 = vmatpush.msra.mxu0 %v1122
    %3005 = vmatmul.f32.gmra.mxu0 %v63
    %v3006 = vpop.f32.mrf.mxu0
    %v3007 = vadd.f32 %v2978, %v3006
    %3008 = vmatmul.f32.gmra.mxu0 %v95
    %v3009 = vpop.f32.mrf.mxu0
    %v3010 = vadd.f32 %v2981, %v3009
    %3011 = vmatmul.f32.gmra.mxu0 %v127
    %v3012 = vpop.f32.mrf.mxu0
    %v3013 = vadd.f32 %v2984, %v3012
    %3014 = vmatmul.f32.gmra.mxu0 %v159
    %v3015 = vpop.f32.mrf.mxu0
    %v3016 = vadd.f32 %v2987, %v3015
    %3017 = vdwg.mxu0
    %3018 = vmatpush.msra.mxu0 %v1184
    %3019 = vmatpush.msra.mxu0 %v1182
    %3020 = vmatpush.msra.mxu0 %v1180
    %3021 = vmatpush.msra.mxu0 %v1178
    %3022 = vmatpush.msra.mxu0 %v1176
    %3023 = vmatpush.msra.mxu0 %v1174
    %3024 = vmatpush.msra.mxu0 %v1172
    %3025 = vmatpush.msra.mxu0 %v1170
    %3026 = vmatpush.msra.mxu0 %v1168
    %3027 = vmatpush.msra.mxu0 %v1166
    %3028 = vmatpush.msra.mxu0 %v1164
    %3029 = vmatpush.msra.mxu0 %v1162
    %3030 = vmatpush.msra.mxu0 %v1160
    %3031 = vmatpush.msra.mxu0 %v1158
    %3032 = vmatpush.msra.mxu0 %v1156
    %3033 = vmatpush.msra.mxu0 %v1154
    %3034 = vmatmul.f32.gmra.mxu0 %v64
    %v3035 = vpop.f32.mrf.mxu0
    %v3036 = vadd.f32 %v3007, %v3035
    %3037 = vmatmul.f32.gmra.mxu0 %v96
    %v3038 = vpop.f32.mrf.mxu0
    %v3039 = vadd.f32 %v3010, %v3038
    %3040 = vmatmul.f32.gmra.mxu0 %v128
    %v3041 = vpop.f32.mrf.mxu0
    %v3042 = vadd.f32 %v3013, %v3041
    %3043 = vmatmul.f32.gmra.mxu0 %v160
    %v3044 = vpop.f32.mrf.mxu0
    %v3045 = vadd.f32 %v3016, %v3044
    %3046 = vdwg.mxu0
    %v3047 = vmax.f32 %v2108, 0.0
    %v3048 = vmax.f32 %v3036, 0.0
    %v3049 = vmax.f32 %v2111, 0.0
    %v3050 = vmax.f32 %v3039, 0.0
    %v3051 = vmax.f32 %v2114, 0.0
    %v3052 = vmax.f32 %v3042, 0.0
    %v3053 = vmax.f32 %v2117, 0.0
    %v3054 = vmax.f32 %v3045, 0.0
    %v3055 = vld [vmem:[%s3] sm:$0xff]
    %v3056 = vld [vmem:[%s3 + $0x8] sm:$0xff]
    %v3057 = vld [vmem:[%s3 + $0x10] sm:$0xff]
    %v3058 = vld [vmem:[%s3 + $0x18] sm:$0xff]
    %v3059 = vld [vmem:[%s3 + $0x20] sm:$0xff]
    %v3060 = vld [vmem:[%s3 + $0x28] sm:$0xff]
    %v3061 = vld [vmem:[%s3 + $0x30] sm:$0xff]
    %v3062 = vld [vmem:[%s3 + $0x38] sm:$0xff]
    %v3063 = vld [vmem:[%s3 + $0x40] sm:$0xff]
    %v3064 = vld [vmem:[%s3 + $0x48] sm:$0xff]
    %v3065 = vld [vmem:[%s3 + $0x50] sm:$0xff]
    %v3066 = vld [vmem:[%s3 + $0x58] sm:$0xff]
    %v3067 = vld [vmem:[%s3 + $0x60] sm:$0xff]
    %v3068 = vld [vmem:[%s3 + $0x68] sm:$0xff]
    %v3069 = vld [vmem:[%s3 + $0x70] sm:$0xff]
    %v3070 = vld [vmem:[%s3 + $0x78] sm:$0xff]
    %v3071 = vld [vmem:[%s3 + $0x80] sm:$0xff]
    %v3072 = vld [vmem:[%s3 + $0x88] sm:$0xff]
    %v3073 = vld [vmem:[%s3 + $0x90] sm:$0xff]
    %v3074 = vld [vmem:[%s3 + $0x98] sm:$0xff]
    %v3075 = vld [vmem:[%s3 + $0xa0] sm:$0xff]
    %v3076 = vld [vmem:[%s3 + $0xa8] sm:$0xff]
    %v3077 = vld [vmem:[%s3 + $0xb0] sm:$0xff]
    %v3078 = vld [vmem:[%s3 + $0xb8] sm:$0xff]
    %v3079 = vld [vmem:[%s3 + $0xc0] sm:$0xff]
    %v3080 = vld [vmem:[%s3 + $0xc8] sm:$0xff]
    %v3081 = vld [vmem:[%s3 + $0xd0] sm:$0xff]
    %v3082 = vld [vmem:[%s3 + $0xd8] sm:$0xff]
    %v3083 = vld [vmem:[%s3 + $0xe0] sm:$0xff]
    %v3084 = vld [vmem:[%s3 + $0xe8] sm:$0xff]
    %v3085 = vld [vmem:[%s3 + $0xf0] sm:$0xff]
    %v3086 = vld [vmem:[%s3 + $0xf8] sm:$0xff]
    %v3087 = vld [vmem:[%s4] sm:$0x1]
    %v3089 = vperm.slane %v3087, 0
    %3091 = vmatpush.msra.mxu0 %v3070
    %3092 = vmatpush.msra.mxu0 %v3069
    %3093 = vmatpush.msra.mxu0 %v3068
    %3094 = vmatpush.msra.mxu0 %v3067
    %3095 = vmatpush.msra.mxu0 %v3066
    %3096 = vmatpush.msra.mxu0 %v3065
    %3097 = vmatpush.msra.mxu0 %v3064
    %3098 = vmatpush.msra.mxu0 %v3063
    %3099 = vmatpush.msra.mxu0 %v3062
    %3100 = vmatpush.msra.mxu0 %v3061
    %3101 = vmatpush.msra.mxu0 %v3060
    %3102 = vmatpush.msra.mxu0 %v3059
    %3103 = vmatpush.msra.mxu0 %v3058
    %3104 = vmatpush.msra.mxu0 %v3057
    %3105 = vmatpush.msra.mxu0 %v3056
    %3106 = vmatpush.msra.mxu0 %v3055
    %3107 = vmatmul.f32.gmra.mxu0 %v3047
    %v3108 = vpop.f32.mrf.mxu0
    %v3109 = vadd.f32 %v3089, %v3108
    %3110 = vmatmul.f32.gmra.mxu0 %v3049
    %v3111 = vpop.f32.mrf.mxu0
    %v3112 = vadd.f32 %v3089, %v3111
    %3113 = vmatmul.f32.gmra.mxu0 %v3051
    %v3114 = vpop.f32.mrf.mxu0
    %v3115 = vadd.f32 %v3089, %v3114
    %3116 = vmatmul.f32.gmra.mxu0 %v3053
    %v3117 = vpop.f32.mrf.mxu0
    %v3118 = vadd.f32 %v3089, %v3117
    %3119 = vdwg.mxu0
    %3120 = vmatpush.msra.mxu0 %v3086
    %3121 = vmatpush.msra.mxu0 %v3085
    %3122 = vmatpush.msra.mxu0 %v3084
    %3123 = vmatpush.msra.mxu0 %v3083
    %3124 = vmatpush.msra.mxu0 %v3082
    %3125 = vmatpush.msra.mxu0 %v3081
    %3126 = vmatpush.msra.mxu0 %v3080
    %3127 = vmatpush.msra.mxu0 %v3079
    %3128 = vmatpush.msra.mxu0 %v3078
    %3129 = vmatpush.msra.mxu0 %v3077
    %3130 = vmatpush.msra.mxu0 %v3076
    %3131 = vmatpush.msra.mxu0 %v3075
    %3132 = vmatpush.msra.mxu0 %v3074
    %3133 = vmatpush.msra.mxu0 %v3073
    %3134 = vmatpush.msra.mxu0 %v3072
    %3135 = vmatpush.msra.mxu0 %v3071
    %3136 = vmatmul.f32.gmra.mxu0 %v3048
    %v3137 = vpop.f32.mrf.mxu0
    %v3138 = vadd.f32 %v3109, %v3137
    %3139 = vmatmul.f32.gmra.mxu0 %v3050
    %v3140 = vpop.f32.mrf.mxu0
    %v3141 = vadd.f32 %v3112, %v3140
    %3142 = vmatmul.f32.gmra.mxu0 %v3052
    %v3143 = vpop.f32.mrf.mxu0
    %v3144 = vadd.f32 %v3115, %v3143
    %3145 = vmatmul.f32.gmra.mxu0 %v3054
    %v3146 = vpop.f32.mrf.mxu0
    %v3147 = vadd.f32 %v3118, %v3146
    %3148 = vdwg.mxu0
    %v3149 = vmax.f32 %v3138, 0.0
    %v3150 = vmax.f32 %v3141, 0.0
    %v3151 = vmax.f32 %v3144, 0.0
    %v3152 = vmax.f32 %v3147, 0.0
    %v3153 = vld [vmem:[%s5] sm:$0xff]
    %v3154 = vld [vmem:[%s5 + $0x8] sm:$0xff]
    %v3155 = vld [vmem:[%s5 + $0x10] sm:$0xff]
    %v3156 = vld [vmem:[%s5 + $0x18] sm:$0xff]
    %v3157 = vld [vmem:[%s5 + $0x20] sm:$0xff]
    %v3158 = vld [vmem:[%s5 + $0x28] sm:$0xff]
    %v3159 = vld [vmem:[%s5 + $0x30] sm:$0xff]
    %v3160 = vld [vmem:[%s5 + $0x38] sm:$0xff]
    %v3161 = vld [vmem:[%s5 + $0x40] sm:$0xff]
    %v3162 = vld [vmem:[%s5 + $0x48] sm:$0xff]
    %v3163 = vld [vmem:[%s5 + $0x50] sm:$0xff]
    %v3164 = vld [vmem:[%s5 + $0x58] sm:$0xff]
    %v3165 = vld [vmem:[%s5 + $0x60] sm:$0xff]
    %v3166 = vld [vmem:[%s5 + $0x68] sm:$0xff]
    %v3167 = vld [vmem:[%s5 + $0x70] sm:$0xff]
    %v3168 = vld [vmem:[%s5 + $0x78] sm:$0xff]
    %v3170 = vrot.slane %v3149, 2
    %vm3171 = vcmask 261120
    %v3172 = vsel %vm3171, %v3170, 0
    %3174 = vmatpush.msra.mxu0 0.0
    %3175 = vmatpush.msra.mxu0 0.0
    %3176 = vmatpush.msra.mxu0 0.0
    %3177 = vmatpush.msra.mxu0 0.0
    %3178 = vmatpush.msra.mxu0 0.0
    %3179 = vmatpush.msra.mxu0 0.0
    %3180 = vmatpush.msra.mxu0 0.0
    %3181 = vmatpush.msra.mxu0 0.0
    %3182 = vmatpush.msra.mxu0 0.0
    %3183 = vmatpush.msra.mxu0 0.0
    %3184 = vmatpush.msra.mxu0 0.0
    %3185 = vmatpush.msra.mxu0 0.0
    %3186 = vmatpush.msra.mxu0 %v3167
    %3187 = vmatpush.msra.mxu0 %v3165
    %3188 = vmatpush.msra.mxu0 %v3163
    %3189 = vmatpush.msra.mxu0 %v3161
    %3190 = vmatmul.f32.gmra.mxu0 %v3172
    %v3191 = vpop.f32.mrf.mxu0
    %v3192 = vadd.f32 0.0, %v3191
    %3193 = vdwg.mxu0
    %3194 = vmatpush.msra.mxu0 0.0
    %3195 = vmatpush.msra.mxu0 0.0
    %3196 = vmatpush.msra.mxu0 0.0
    %3197 = vmatpush.msra.mxu0 0.0
    %3198 = vmatpush.msra.mxu0 0.0
    %3199 = vmatpush.msra.mxu0 0.0
    %3200 = vmatpush.msra.mxu0 0.0
    %3201 = vmatpush.msra.mxu0 0.0
    %3202 = vmatpush.msra.mxu0 0.0
    %3203 = vmatpush.msra.mxu0 0.0
    %3204 = vmatpush.msra.mxu0 0.0
    %3205 = vmatpush.msra.mxu0 0.0
    %3206 = vmatpush.msra.mxu0 %v3168
    %3207 = vmatpush.msra.mxu0 %v3166
    %3208 = vmatpush.msra.mxu0 %v3164
    %3209 = vmatpush.msra.mxu0 %v3162
    %3210 = vmatmul.f32.gmra.mxu0 %v3172
    %v3211 = vpop.f32.mrf.mxu0
    %v3212 = vadd.f32 0.0, %v3211
    %3213 = vdwg.mxu0
    %v3214 = vsel %vm3171, %v3149, 0
    %3216 = vmatpush.msra.mxu0 0.0
    %3217 = vmatpush.msra.mxu0 0.0
    %3218 = vmatpush.msra.mxu0 0.0
    %3219 = vmatpush.msra.mxu0 0.0
    %3220 = vmatpush.msra.mxu0 0.0
    %3221 = vmatpush.msra.mxu0 0.0
    %3222 = vmatpush.msra.mxu0 0.0
    %3223 = vmatpush.msra.mxu0 0.0
    %3224 = vmatpush.msra.mxu0 0.0
    %3225 = vmatpush.msra.mxu0 0.0
    %3226 = vmatpush.msra.mxu0 0.0
    %3227 = vmatpush.msra.mxu0 0.0
    %3228 = vmatpush.msra.mxu0 %v3159
    %3229 = vmatpush.msra.mxu0 %v3157
    %3230 = vmatpush.msra.mxu0 %v3155
    %3231 = vmatpush.msra.mxu0 %v3153
    %3232 = vmatmul.f32.gmra.mxu0 %v3214
    %v3233 = vpop.f32.mrf.mxu0
    %v3234 = vadd.f32 %v3192, %v3233
    %3235 = vdwg.mxu0
    %3236 = vmatpush.msra.mxu0 0.0
    %3237 = vmatpush.msra.mxu0 0.0
    %3238 = vmatpush.msra.mxu0 0.0
    %3239 = vmatpush.msra.mxu0 0.0
    %3240 = vmatpush.msra.mxu0 0.0
    %3241 = vmatpush.msra.mxu0 0.0
    %3242 = vmatpush.msra.mxu0 0.0
    %3243 = vmatpush.msra.mxu0 0.0
    %3244 = vmatpush.msra.mxu0 0.0
    %3245 = vmatpush.msra.mxu0 0.0
    %3246 = vmatpush.msra.mxu0 0.0
    %3247 = vmatpush.msra.mxu0 0.0
    %3248 = vmatpush.msra.mxu0 %v3160
    %3249 = vmatpush.msra.mxu0 %v3158
    %3250 = vmatpush.msra.mxu0 %v3156
    %3251 = vmatpush.msra.mxu0 %v3154
    %3252 = vmatmul.f32.gmra.mxu0 %v3214
    %v3253 = vpop.f32.mrf.mxu0
    %v3254 = vadd.f32 %v3212, %v3253
    %3255 = vdwg.mxu0
    %v3256 = vld [vmem:[%s5 + $0x80] sm:$0xff]
    %v3257 = vld [vmem:[%s5 + $0x88] sm:$0xff]
    %v3258 = vld [vmem:[%s5 + $0x90] sm:$0xff]
    %v3259 = vld [vmem:[%s5 + $0x98] sm:$0xff]
    %v3260 = vld [vmem:[%s5 + $0xa0] sm:$0xff]
    %v3261 = vld [vmem:[%s5 + $0xa8] sm:$0xff]
    %v3262 = vld [vmem:[%s5 + $0xb0] sm:$0xff]
    %v3263 = vld [vmem:[%s5 + $0xb8] sm:$0xff]
    %v3264 = vrot.slane %v3149, 4
    %v3265 = vsel %vm3171, %v3264, 0
    %3267 = vmatpush.msra.mxu0 0.0
    %3268 = vmatpush.msra.mxu0 0.0
    %3269 = vmatpush.msra.mxu0 0.0
    %3270 = vmatpush.msra.mxu0 0.0
    %3271 = vmatpush.msra.mxu0 0.0
    %3272 = vmatpush.msra.mxu0 0.0
    %3273 = vmatpush.msra.mxu0 0.0
    %3274 = vmatpush.msra.mxu0 0.0
    %3275 = vmatpush.msra.mxu0 0.0
    %3276 = vmatpush.msra.mxu0 0.0
    %3277 = vmatpush.msra.mxu0 0.0
    %3278 = vmatpush.msra.mxu0 0.0
    %3279 = vmatpush.msra.mxu0 %v3262
    %3280 = vmatpush.msra.mxu0 %v3260
    %3281 = vmatpush.msra.mxu0 %v3258
    %3282 = vmatpush.msra.mxu0 %v3256
    %3283 = vmatmul.f32.gmra.mxu0 %v3265
    %v3284 = vpop.f32.mrf.mxu0
    %v3285 = vadd.f32 0.0, %v3284
    %3286 = vdwg.mxu0
    %3287 = vmatpush.msra.mxu0 0.0
    %3288 = vmatpush.msra.mxu0 0.0
    %3289 = vmatpush.msra.mxu0 0.0
    %3290 = vmatpush.msra.mxu0 0.0
    %3291 = vmatpush.msra.mxu0 0.0
    %3292 = vmatpush.msra.mxu0 0.0
    %3293 = vmatpush.msra.mxu0 0.0
    %3294 = vmatpush.msra.mxu0 0.0
    %3295 = vmatpush.msra.mxu0 0.0
    %3296 = vmatpush.msra.mxu0 0.0
    %3297 = vmatpush.msra.mxu0 0.0
    %3298 = vmatpush.msra.mxu0 0.0
    %3299 = vmatpush.msra.mxu0 %v3263
    %3300 = vmatpush.msra.mxu0 %v3261
    %3301 = vmatpush.msra.mxu0 %v3259
    %3302 = vmatpush.msra.mxu0 %v3257
    %3303 = vmatmul.f32.gmra.mxu0 %v3265
    %v3304 = vpop.f32.mrf.mxu0
    %v3305 = vadd.f32 0.0, %v3304
    %3306 = vdwg.mxu0
    %v3307 = vadd.f32 %v3234, %v3285
    %v3308 = vadd.f32 %v3254, %v3305
    %v3309 = vld [vmem:[%s5 + $0xc0] sm:$0xff]
    %v3310 = vld [vmem:[%s5 + $0xc8] sm:$0xff]
    %v3311 = vld [vmem:[%s5 + $0xd0] sm:$0xff]
    %v3312 = vld [vmem:[%s5 + $0xd8] sm:$0xff]
    %v3313 = vld [vmem:[%s5 + $0xe0] sm:$0xff]
    %v3314 = vld [vmem:[%s5 + $0xe8] sm:$0xff]
    %v3315 = vld [vmem:[%s5 + $0xf0] sm:$0xff]
    %v3316 = vld [vmem:[%s5 + $0xf8] sm:$0xff]
    %v3317 = vrot.slane %v3149, 6
    %v3318 = vsel %vm3171, %v3317, 0
    %3320 = vmatpush.msra.mxu0 0.0
    %3321 = vmatpush.msra.mxu0 0.0
    %3322 = vmatpush.msra.mxu0 0.0
    %3323 = vmatpush.msra.mxu0 0.0
    %3324 = vmatpush.msra.mxu0 0.0
    %3325 = vmatpush.msra.mxu0 0.0
    %3326 = vmatpush.msra.mxu0 0.0
    %3327 = vmatpush.msra.mxu0 0.0
    %3328 = vmatpush.msra.mxu0 0.0
    %3329 = vmatpush.msra.mxu0 0.0
    %3330 = vmatpush.msra.mxu0 0.0
    %3331 = vmatpush.msra.mxu0 0.0
    %3332 = vmatpush.msra.mxu0 %v3315
    %3333 = vmatpush.msra.mxu0 %v3313
    %3334 = vmatpush.msra.mxu0 %v3311
    %3335 = vmatpush.msra.mxu0 %v3309
    %3336 = vmatmul.f32.gmra.mxu0 %v3318
    %v3337 = vpop.f32.mrf.mxu0
    %v3338 = vadd.f32 0.0, %v3337
    %3339 = vdwg.mxu0
    %3340 = vmatpush.msra.mxu0 0.0
    %3341 = vmatpush.msra.mxu0 0.0
    %3342 = vmatpush.msra.mxu0 0.0
    %3343 = vmatpush.msra.mxu0 0.0
    %3344 = vmatpush.msra.mxu0 0.0
    %3345 = vmatpush.msra.mxu0 0.0
    %3346 = vmatpush.msra.mxu0 0.0
    %3347 = vmatpush.msra.mxu0 0.0
    %3348 = vmatpush.msra.mxu0 0.0
    %3349 = vmatpush.msra.mxu0 0.0
    %3350 = vmatpush.msra.mxu0 0.0
    %3351 = vmatpush.msra.mxu0 0.0
    %3352 = vmatpush.msra.mxu0 %v3316
    %3353 = vmatpush.msra.mxu0 %v3314
    %3354 = vmatpush.msra.mxu0 %v3312
    %3355 = vmatpush.msra.mxu0 %v3310
    %3356 = vmatmul.f32.gmra.mxu0 %v3318
    %v3357 = vpop.f32.mrf.mxu0
    %v3358 = vadd.f32 0.0, %v3357
    %3359 = vdwg.mxu0
    %v3360 = vadd.f32 %v3307, %v3338
    %v3361 = vadd.f32 %v3308, %v3358
    %v3362 = vld [vmem:[%s5 + $0x100] sm:$0xff]
    %v3363 = vld [vmem:[%s5 + $0x108] sm:$0xff]
    %v3364 = vld [vmem:[%s5 + $0x110] sm:$0xff]
    %v3365 = vld [vmem:[%s5 + $0x118] sm:$0xff]
    %v3366 = vld [vmem:[%s5 + $0x120] sm:$0xff]
    %v3367 = vld [vmem:[%s5 + $0x128] sm:$0xff]
    %v3368 = vld [vmem:[%s5 + $0x130] sm:$0xff]
    %v3369 = vld [vmem:[%s5 + $0x138] sm:$0xff]
    %v3371 = vsel %vm3171, %v3150, 0
    %3373 = vmatpush.msra.mxu0 0.0
    %3374 = vmatpush.msra.mxu0 0.0
    %3375 = vmatpush.msra.mxu0 0.0
    %3376 = vmatpush.msra.mxu0 0.0
    %3377 = vmatpush.msra.mxu0 0.0
    %3378 = vmatpush.msra.mxu0 0.0
    %3379 = vmatpush.msra.mxu0 0.0
    %3380 = vmatpush.msra.mxu0 0.0
    %3381 = vmatpush.msra.mxu0 0.0
    %3382 = vmatpush.msra.mxu0 0.0
    %3383 = vmatpush.msra.mxu0 0.0
    %3384 = vmatpush.msra.mxu0 0.0
    %3385 = vmatpush.msra.mxu0 %v3368
    %3386 = vmatpush.msra.mxu0 %v3366
    %3387 = vmatpush.msra.mxu0 %v3364
    %3388 = vmatpush.msra.mxu0 %v3362
    %3389 = vmatmul.f32.gmra.mxu0 %v3371
    %v3390 = vpop.f32.mrf.mxu0
    %v3391 = vadd.f32 0.0, %v3390
    %3392 = vdwg.mxu0
    %3393 = vmatpush.msra.mxu0 0.0
    %3394 = vmatpush.msra.mxu0 0.0
    %3395 = vmatpush.msra.mxu0 0.0
    %3396 = vmatpush.msra.mxu0 0.0
    %3397 = vmatpush.msra.mxu0 0.0
    %3398 = vmatpush.msra.mxu0 0.0
    %3399 = vmatpush.msra.mxu0 0.0
    %3400 = vmatpush.msra.mxu0 0.0
    %3401 = vmatpush.msra.mxu0 0.0
    %3402 = vmatpush.msra.mxu0 0.0
    %3403 = vmatpush.msra.mxu0 0.0
    %3404 = vmatpush.msra.mxu0 0.0
    %3405 = vmatpush.msra.mxu0 %v3369
    %3406 = vmatpush.msra.mxu0 %v3367
    %3407 = vmatpush.msra.mxu0 %v3365
    %3408 = vmatpush.msra.mxu0 %v3363
    %3409 = vmatmul.f32.gmra.mxu0 %v3371
    %v3410 = vpop.f32.mrf.mxu0
    %v3411 = vadd.f32 0.0, %v3410
    %3412 = vdwg.mxu0
    %v3413 = vadd.f32 %v3360, %v3391
    %v3414 = vadd.f32 %v3361, %v3411
    %v3415 = vld [vmem:[%s5 + $0x140] sm:$0xff]
    %v3416 = vld [vmem:[%s5 + $0x148] sm:$0xff]
    %v3417 = vld [vmem:[%s5 + $0x150] sm:$0xff]
    %v3418 = vld [vmem:[%s5 + $0x158] sm:$0xff]
    %v3419 = vld [vmem:[%s5 + $0x160] sm:$0xff]
    %v3420 = vld [vmem:[%s5 + $0x168] sm:$0xff]
    %v3421 = vld [vmem:[%s5 + $0x170] sm:$0xff]
    %v3422 = vld [vmem:[%s5 + $0x178] sm:$0xff]
    %v3423 = vrot.slane %v3150, 2
    %v3424 = vsel %vm3171, %v3423, 0
    %3426 = vmatpush.msra.mxu0 0.0
    %3427 = vmatpush.msra.mxu0 0.0
    %3428 = vmatpush.msra.mxu0 0.0
    %3429 = vmatpush.msra.mxu0 0.0
    %3430 = vmatpush.msra.mxu0 0.0
    %3431 = vmatpush.msra.mxu0 0.0
    %3432 = vmatpush.msra.mxu0 0.0
    %3433 = vmatpush.msra.mxu0 0.0
    %3434 = vmatpush.msra.mxu0 0.0
    %3435 = vmatpush.msra.mxu0 0.0
    %3436 = vmatpush.msra.mxu0 0.0
    %3437 = vmatpush.msra.mxu0 0.0
    %3438 = vmatpush.msra.mxu0 %v3421
    %3439 = vmatpush.msra.mxu0 %v3419
    %3440 = vmatpush.msra.mxu0 %v3417
    %3441 = vmatpush.msra.mxu0 %v3415
    %3442 = vmatmul.f32.gmra.mxu0 %v3424
    %v3443 = vpop.f32.mrf.mxu0
    %v3444 = vadd.f32 0.0, %v3443
    %3445 = vdwg.mxu0
    %3446 = vmatpush.msra.mxu0 0.0
    %3447 = vmatpush.msra.mxu0 0.0
    %3448 = vmatpush.msra.mxu0 0.0
    %3449 = vmatpush.msra.mxu0 0.0
    %3450 = vmatpush.msra.mxu0 0.0
    %3451 = vmatpush.msra.mxu0 0.0
    %3452 = vmatpush.msra.mxu0 0.0
    %3453 = vmatpush.msra.mxu0 0.0
    %3454 = vmatpush.msra.mxu0 0.0
    %3455 = vmatpush.msra.mxu0 0.0
    %3456 = vmatpush.msra.mxu0 0.0
    %3457 = vmatpush.msra.mxu0 0.0
    %3458 = vmatpush.msra.mxu0 %v3422
    %3459 = vmatpush.msra.mxu0 %v3420
    %3460 = vmatpush.msra.mxu0 %v3418
    %3461 = vmatpush.msra.mxu0 %v3416
    %3462 = vmatmul.f32.gmra.mxu0 %v3424
    %v3463 = vpop.f32.mrf.mxu0
    %v3464 = vadd.f32 0.0, %v3463
    %3465 = vdwg.mxu0
    %v3466 = vadd.f32 %v3413, %v3444
    %v3467 = vadd.f32 %v3414, %v3464
    %v3468 = vld [vmem:[%s5 + $0x180] sm:$0xff]
    %v3469 = vld [vmem:[%s5 + $0x188] sm:$0xff]
    %v3470 = vld [vmem:[%s5 + $0x190] sm:$0xff]
    %v3471 = vld [vmem:[%s5 + $0x198] sm:$0xff]
    %v3472 = vld [vmem:[%s5 + $0x1a0] sm:$0xff]
    %v3473 = vld [vmem:[%s5 + $0x1a8] sm:$0xff]
    %v3474 = vld [vmem:[%s5 + $0x1b0] sm:$0xff]
    %v3475 = vld [vmem:[%s5 + $0x1b8] sm:$0xff]
    %v3476 = vrot.slane %v3150, 4
    %v3477 = vsel %vm3171, %v3476, 0
    %3479 = vmatpush.msra.mxu0 0.0
    %3480 = vmatpush.msra.mxu0 0.0
    %3481 = vmatpush.msra.mxu0 0.0
    %3482 = vmatpush.msra.mxu0 0.0
    %3483 = vmatpush.msra.mxu0 0.0
    %3484 = vmatpush.msra.mxu0 0.0
    %3485 = vmatpush.msra.mxu0 0.0
    %3486 = vmatpush.msra.mxu0 0.0
    %3487 = vmatpush.msra.mxu0 0.0
    %3488 = vmatpush.msra.mxu0 0.0
    %3489 = vmatpush.msra.mxu0 0.0
    %3490 = vmatpush.msra.mxu0 0.0
    %3491 = vmatpush.msra.mxu0 %v3474
    %3492 = vmatpush.msra.mxu0 %v3472
    %3493 = vmatpush.msra.mxu0 %v3470
    %3494 = vmatpush.msra.mxu0 %v3468
    %3495 = vmatmul.f32.gmra.mxu0 %v3477
    %v3496 = vpop.f32.mrf.mxu0
    %v3497 = vadd.f32 0.0, %v3496
    %3498 = vdwg.mxu0
    %3499 = vmatpush.msra.mxu0 0.0
    %3500 = vmatpush.msra.mxu0 0.0
    %3501 = vmatpush.msra.mxu0 0.0
    %3502 = vmatpush.msra.mxu0 0.0
    %3503 = vmatpush.msra.mxu0 0.0
    %3504 = vmatpush.msra.mxu0 0.0
    %3505 = vmatpush.msra.mxu0 0.0
    %3506 = vmatpush.msra.mxu0 0.0
    %3507 = vmatpush.msra.mxu0 0.0
    %3508 = vmatpush.msra.mxu0 0.0
    %3509 = vmatpush.msra.mxu0 0.0
    %3510 = vmatpush.msra.mxu0 0.0
    %3511 = vmatpush.msra.mxu0 %v3475
    %3512 = vmatpush.msra.mxu0 %v3473
    %3513 = vmatpush.msra.mxu0 %v3471
    %3514 = vmatpush.msra.mxu0 %v3469
    %3515 = vmatmul.f32.gmra.mxu0 %v3477
    %v3516 = vpop.f32.mrf.mxu0
    %v3517 = vadd.f32 0.0, %v3516
    %3518 = vdwg.mxu0
    %v3519 = vadd.f32 %v3466, %v3497
    %v3520 = vadd.f32 %v3467, %v3517
    %v3521 = vld [vmem:[%s5 + $0x1c0] sm:$0xff]
    %v3522 = vld [vmem:[%s5 + $0x1c8] sm:$0xff]
    %v3523 = vld [vmem:[%s5 + $0x1d0] sm:$0xff]
    %v3524 = vld [vmem:[%s5 + $0x1d8] sm:$0xff]
    %v3525 = vld [vmem:[%s5 + $0x1e0] sm:$0xff]
    %v3526 = vld [vmem:[%s5 + $0x1e8] sm:$0xff]
    %v3527 = vld [vmem:[%s5 + $0x1f0] sm:$0xff]
    %v3528 = vld [vmem:[%s5 + $0x1f8] sm:$0xff]
    %v3529 = vrot.slane %v3150, 6
    %v3530 = vsel %vm3171, %v3529, 0
    %3532 = vmatpush.msra.mxu0 0.0
    %3533 = vmatpush.msra.mxu0 0.0
    %3534 = vmatpush.msra.mxu0 0.0
    %3535 = vmatpush.msra.mxu0 0.0
    %3536 = vmatpush.msra.mxu0 0.0
    %3537 = vmatpush.msra.mxu0 0.0
    %3538 = vmatpush.msra.mxu0 0.0
    %3539 = vmatpush.msra.mxu0 0.0
    %3540 = vmatpush.msra.mxu0 0.0
    %3541 = vmatpush.msra.mxu0 0.0
    %3542 = vmatpush.msra.mxu0 0.0
    %3543 = vmatpush.msra.mxu0 0.0
    %3544 = vmatpush.msra.mxu0 %v3527
    %3545 = vmatpush.msra.mxu0 %v3525
    %3546 = vmatpush.msra.mxu0 %v3523
    %3547 = vmatpush.msra.mxu0 %v3521
    %3548 = vmatmul.f32.gmra.mxu0 %v3530
    %v3549 = vpop.f32.mrf.mxu0
    %v3550 = vadd.f32 0.0, %v3549
    %3551 = vdwg.mxu0
    %3552 = vmatpush.msra.mxu0 0.0
    %3553 = vmatpush.msra.mxu0 0.0
    %3554 = vmatpush.msra.mxu0 0.0
    %3555 = vmatpush.msra.mxu0 0.0
    %3556 = vmatpush.msra.mxu0 0.0
    %3557 = vmatpush.msra.mxu0 0.0
    %3558 = vmatpush.msra.mxu0 0.0
    %3559 = vmatpush.msra.mxu0 0.0
    %3560 = vmatpush.msra.mxu0 0.0
    %3561 = vmatpush.msra.mxu0 0.0
    %3562 = vmatpush.msra.mxu0 0.0
    %3563 = vmatpush.msra.mxu0 0.0
    %3564 = vmatpush.msra.mxu0 %v3528
    %3565 = vmatpush.msra.mxu0 %v3526
    %3566 = vmatpush.msra.mxu0 %v3524
    %3567 = vmatpush.msra.mxu0 %v3522
    %3568 = vmatmul.f32.gmra.mxu0 %v3530
    %v3569 = vpop.f32.mrf.mxu0
    %v3570 = vadd.f32 0.0, %v3569
    %3571 = vdwg.mxu0
    %v3572 = vadd.f32 %v3519, %v3550
    %v3573 = vadd.f32 %v3520, %v3570
    %v3574 = vld [vmem:[%s5 + $0x200] sm:$0xff]
    %v3575 = vld [vmem:[%s5 + $0x208] sm:$0xff]
    %v3576 = vld [vmem:[%s5 + $0x210] sm:$0xff]
    %v3577 = vld [vmem:[%s5 + $0x218] sm:$0xff]
    %v3578 = vld [vmem:[%s5 + $0x220] sm:$0xff]
    %v3579 = vld [vmem:[%s5 + $0x228] sm:$0xff]
    %v3580 = vld [vmem:[%s5 + $0x230] sm:$0xff]
    %v3581 = vld [vmem:[%s5 + $0x238] sm:$0xff]
    %v3583 = vsel %vm3171, %v3151, 0
    %3585 = vmatpush.msra.mxu0 0.0
    %3586 = vmatpush.msra.mxu0 0.0
    %3587 = vmatpush.msra.mxu0 0.0
    %3588 = vmatpush.msra.mxu0 0.0
    %3589 = vmatpush.msra.mxu0 0.0
    %3590 = vmatpush.msra.mxu0 0.0
    %3591 = vmatpush.msra.mxu0 0.0
    %3592 = vmatpush.msra.mxu0 0.0
    %3593 = vmatpush.msra.mxu0 0.0
    %3594 = vmatpush.msra.mxu0 0.0
    %3595 = vmatpush.msra.mxu0 0.0
    %3596 = vmatpush.msra.mxu0 0.0
    %3597 = vmatpush.msra.mxu0 %v3580
    %3598 = vmatpush.msra.mxu0 %v3578
    %3599 = vmatpush.msra.mxu0 %v3576
    %3600 = vmatpush.msra.mxu0 %v3574
    %3601 = vmatmul.f32.gmra.mxu0 %v3583
    %v3602 = vpop.f32.mrf.mxu0
    %v3603 = vadd.f32 0.0, %v3602
    %3604 = vdwg.mxu0
    %3605 = vmatpush.msra.mxu0 0.0
    %3606 = vmatpush.msra.mxu0 0.0
    %3607 = vmatpush.msra.mxu0 0.0
    %3608 = vmatpush.msra.mxu0 0.0
    %3609 = vmatpush.msra.mxu0 0.0
    %3610 = vmatpush.msra.mxu0 0.0
    %3611 = vmatpush.msra.mxu0 0.0
    %3612 = vmatpush.msra.mxu0 0.0
    %3613 = vmatpush.msra.mxu0 0.0
    %3614 = vmatpush.msra.mxu0 0.0
    %3615 = vmatpush.msra.mxu0 0.0
    %3616 = vmatpush.msra.mxu0 0.0
    %3617 = vmatpush.msra.mxu0 %v3581
    %3618 = vmatpush.msra.mxu0 %v3579
    %3619 = vmatpush.msra.mxu0 %v3577
    %3620 = vmatpush.msra.mxu0 %v3575
    %3621 = vmatmul.f32.gmra.mxu0 %v3583
    %v3622 = vpop.f32.mrf.mxu0
    %v3623 = vadd.f32 0.0, %v3622
    %3624 = vdwg.mxu0
    %v3625 = vadd.f32 %v3572, %v3603
    %v3626 = vadd.f32 %v3573, %v3623
    %v3627 = vld [vmem:[%s5 + $0x240] sm:$0xff]
    %v3628 = vld [vmem:[%s5 + $0x248] sm:$0xff]
    %v3629 = vld [vmem:[%s5 + $0x250] sm:$0xff]
    %v3630 = vld [vmem:[%s5 + $0x258] sm:$0xff]
    %v3631 = vld [vmem:[%s5 + $0x260] sm:$0xff]
    %v3632 = vld [vmem:[%s5 + $0x268] sm:$0xff]
    %v3633 = vld [vmem:[%s5 + $0x270] sm:$0xff]
    %v3634 = vld [vmem:[%s5 + $0x278] sm:$0xff]
    %v3635 = vrot.slane %v3151, 2
    %v3636 = vsel %vm3171, %v3635, 0
    %3638 = vmatpush.msra.mxu0 0.0
    %3639 = vmatpush.msra.mxu0 0.0
    %3640 = vmatpush.msra.mxu0 0.0
    %3641 = vmatpush.msra.mxu0 0.0
    %3642 = vmatpush.msra.mxu0 0.0
    %3643 = vmatpush.msra.mxu0 0.0
    %3644 = vmatpush.msra.mxu0 0.0
    %3645 = vmatpush.msra.mxu0 0.0
    %3646 = vmatpush.msra.mxu0 0.0
    %3647 = vmatpush.msra.mxu0 0.0
    %3648 = vmatpush.msra.mxu0 0.0
    %3649 = vmatpush.msra.mxu0 0.0
    %3650 = vmatpush.msra.mxu0 %v3633
    %3651 = vmatpush.msra.mxu0 %v3631
    %3652 = vmatpush.msra.mxu0 %v3629
    %3653 = vmatpush.msra.mxu0 %v3627
    %3654 = vmatmul.f32.gmra.mxu0 %v3636
    %v3655 = vpop.f32.mrf.mxu0
    %v3656 = vadd.f32 0.0, %v3655
    %3657 = vdwg.mxu0
    %3658 = vmatpush.msra.mxu0 0.0
    %3659 = vmatpush.msra.mxu0 0.0
    %3660 = vmatpush.msra.mxu0 0.0
    %3661 = vmatpush.msra.mxu0 0.0
    %3662 = vmatpush.msra.mxu0 0.0
    %3663 = vmatpush.msra.mxu0 0.0
    %3664 = vmatpush.msra.mxu0 0.0
    %3665 = vmatpush.msra.mxu0 0.0
    %3666 = vmatpush.msra.mxu0 0.0
    %3667 = vmatpush.msra.mxu0 0.0
    %3668 = vmatpush.msra.mxu0 0.0
    %3669 = vmatpush.msra.mxu0 0.0
    %3670 = vmatpush.msra.mxu0 %v3634
    %3671 = vmatpush.msra.mxu0 %v3632
    %3672 = vmatpush.msra.mxu0 %v3630
    %3673 = vmatpush.msra.mxu0 %v3628
    %3674 = vmatmul.f32.gmra.mxu0 %v3636
    %v3675 = vpop.f32.mrf.mxu0
    %v3676 = vadd.f32 0.0, %v3675
    %3677 = vdwg.mxu0
    %v3678 = vadd.f32 %v3625, %v3656
    %v3679 = vadd.f32 %v3626, %v3676
    %v3680 = vld [vmem:[%s5 + $0x280] sm:$0xff]
    %v3681 = vld [vmem:[%s5 + $0x288] sm:$0xff]
    %v3682 = vld [vmem:[%s5 + $0x290] sm:$0xff]
    %v3683 = vld [vmem:[%s5 + $0x298] sm:$0xff]
    %v3684 = vld [vmem:[%s5 + $0x2a0] sm:$0xff]
    %v3685 = vld [vmem:[%s5 + $0x2a8] sm:$0xff]
    %v3686 = vld [vmem:[%s5 + $0x2b0] sm:$0xff]
    %v3687 = vld [vmem:[%s5 + $0x2b8] sm:$0xff]
    %v3688 = vrot.slane %v3151, 4
    %v3689 = vsel %vm3171, %v3688, 0
    %3691 = vmatpush.msra.mxu0 0.0
    %3692 = vmatpush.msra.mxu0 0.0
    %3693 = vmatpush.msra.mxu0 0.0
    %3694 = vmatpush.msra.mxu0 0.0
    %3695 = vmatpush.msra.mxu0 0.0
    %3696 = vmatpush.msra.mxu0 0.0
    %3697 = vmatpush.msra.mxu0 0.0
    %3698 = vmatpush.msra.mxu0 0.0
    %3699 = vmatpush.msra.mxu0 0.0
    %3700 = vmatpush.msra.mxu0 0.0
    %3701 = vmatpush.msra.mxu0 0.0
    %3702 = vmatpush.msra.mxu0 0.0
    %3703 = vmatpush.msra.mxu0 %v3686
    %3704 = vmatpush.msra.mxu0 %v3684
    %3705 = vmatpush.msra.mxu0 %v3682
    %3706 = vmatpush.msra.mxu0 %v3680
    %3707 = vmatmul.f32.gmra.mxu0 %v3689
    %v3708 = vpop.f32.mrf.mxu0
    %v3709 = vadd.f32 0.0, %v3708
    %3710 = vdwg.mxu0
    %3711 = vmatpush.msra.mxu0 0.0
    %3712 = vmatpush.msra.mxu0 0.0
    %3713 = vmatpush.msra.mxu0 0.0
    %3714 = vmatpush.msra.mxu0 0.0
    %3715 = vmatpush.msra.mxu0 0.0
    %3716 = vmatpush.msra.mxu0 0.0
    %3717 = vmatpush.msra.mxu0 0.0
    %3718 = vmatpush.msra.mxu0 0.0
    %3719 = vmatpush.msra.mxu0 0.0
    %3720 = vmatpush.msra.mxu0 0.0
    %3721 = vmatpush.msra.mxu0 0.0
    %3722 = vmatpush.msra.mxu0 0.0
    %3723 = vmatpush.msra.mxu0 %v3687
    %3724 = vmatpush.msra.mxu0 %v3685
    %3725 = vmatpush.msra.mxu0 %v3683
    %3726 = vmatpush.msra.mxu0 %v3681
    %3727 = vmatmul.f32.gmra.mxu0 %v3689
    %v3728 = vpop.f32.mrf.mxu0
    %v3729 = vadd.f32 0.0, %v3728
    %3730 = vdwg.mxu0
    %v3731 = vadd.f32 %v3678, %v3709
    %v3732 = vadd.f32 %v3679, %v3729
    %v3733 = vld [vmem:[%s5 + $0x2c0] sm:$0xff]
    %v3734 = vld [vmem:[%s5 + $0x2c8] sm:$0xff]
    %v3735 = vld [vmem:[%s5 + $0x2d0] sm:$0xff]
    %v3736 = vld [vmem:[%s5 + $0x2d8] sm:$0xff]
    %v3737 = vld [vmem:[%s5 + $0x2e0] sm:$0xff]
    %v3738 = vld [vmem:[%s5 + $0x2e8] sm:$0xff]
    %v3739 = vld [vmem:[%s5 + $0x2f0] sm:$0xff]
    %v3740 = vld [vmem:[%s5 + $0x2f8] sm:$0xff]
    %v3741 = vrot.slane %v3151, 6
    %v3742 = vsel %vm3171, %v3741, 0
    %3744 = vmatpush.msra.mxu0 0.0
    %3745 = vmatpush.msra.mxu0 0.0
    %3746 = vmatpush.msra.mxu0 0.0
    %3747 = vmatpush.msra.mxu0 0.0
    %3748 = vmatpush.msra.mxu0 0.0
    %3749 = vmatpush.msra.mxu0 0.0
    %3750 = vmatpush.msra.mxu0 0.0
    %3751 = vmatpush.msra.mxu0 0.0
    %3752 = vmatpush.msra.mxu0 0.0
    %3753 = vmatpush.msra.mxu0 0.0
    %3754 = vmatpush.msra.mxu0 0.0
    %3755 = vmatpush.msra.mxu0 0.0
    %3756 = vmatpush.msra.mxu0 %v3739
    %3757 = vmatpush.msra.mxu0 %v3737
    %3758 = vmatpush.msra.mxu0 %v3735
    %3759 = vmatpush.msra.mxu0 %v3733
    %3760 = vmatmul.f32.gmra.mxu0 %v3742
    %v3761 = vpop.f32.mrf.mxu0
    %v3762 = vadd.f32 0.0, %v3761
    %3763 = vdwg.mxu0
    %3764 = vmatpush.msra.mxu0 0.0
    %3765 = vmatpush.msra.mxu0 0.0
    %3766 = vmatpush.msra.mxu0 0.0
    %3767 = vmatpush.msra.mxu0 0.0
    %3768 = vmatpush.msra.mxu0 0.0
    %3769 = vmatpush.msra.mxu0 0.0
    %3770 = vmatpush.msra.mxu0 0.0
    %3771 = vmatpush.msra.mxu0 0.0
    %3772 = vmatpush.msra.mxu0 0.0
    %3773 = vmatpush.msra.mxu0 0.0
    %3774 = vmatpush.msra.mxu0 0.0
    %3775 = vmatpush.msra.mxu0 0.0
    %3776 = vmatpush.msra.mxu0 %v3740
    %3777 = vmatpush.msra.mxu0 %v3738
    %3778 = vmatpush.msra.mxu0 %v3736
    %3779 = vmatpush.msra.mxu0 %v3734
    %3780 = vmatmul.f32.gmra.mxu0 %v3742
    %v3781 = vpop.f32.mrf.mxu0
    %v3782 = vadd.f32 0.0, %v3781
    %3783 = vdwg.mxu0
    %v3784 = vadd.f32 %v3731, %v3762
    %v3785 = vadd.f32 %v3732, %v3782
    %v3786 = vld [vmem:[%s5 + $0x300] sm:$0xff]
    %v3787 = vld [vmem:[%s5 + $0x308] sm:$0xff]
    %v3788 = vld [vmem:[%s5 + $0x310] sm:$0xff]
    %v3789 = vld [vmem:[%s5 + $0x318] sm:$0xff]
    %v3790 = vld [vmem:[%s5 + $0x320] sm:$0xff]
    %v3791 = vld [vmem:[%s5 + $0x328] sm:$0xff]
    %v3792 = vld [vmem:[%s5 + $0x330] sm:$0xff]
    %v3793 = vld [vmem:[%s5 + $0x338] sm:$0xff]
    %v3795 = vsel %vm3171, %v3152, 0
    %3797 = vmatpush.msra.mxu0 0.0
    %3798 = vmatpush.msra.mxu0 0.0
    %3799 = vmatpush.msra.mxu0 0.0
    %3800 = vmatpush.msra.mxu0 0.0
    %3801 = vmatpush.msra.mxu0 0.0
    %3802 = vmatpush.msra.mxu0 0.0
    %3803 = vmatpush.msra.mxu0 0.0
    %3804 = vmatpush.msra.mxu0 0.0
    %3805 = vmatpush.msra.mxu0 0.0
    %3806 = vmatpush.msra.mxu0 0.0
    %3807 = vmatpush.msra.mxu0 0.0
    %3808 = vmatpush.msra.mxu0 0.0
    %3809 = vmatpush.msra.mxu0 %v3792
    %3810 = vmatpush.msra.mxu0 %v3790
    %3811 = vmatpush.msra.mxu0 %v3788
    %3812 = vmatpush.msra.mxu0 %v3786
    %3813 = vmatmul.f32.gmra.mxu0 %v3795
    %v3814 = vpop.f32.mrf.mxu0
    %v3815 = vadd.f32 0.0, %v3814
    %3816 = vdwg.mxu0
    %3817 = vmatpush.msra.mxu0 0.0
    %3818 = vmatpush.msra.mxu0 0.0
    %3819 = vmatpush.msra.mxu0 0.0
    %3820 = vmatpush.msra.mxu0 0.0
    %3821 = vmatpush.msra.mxu0 0.0
    %3822 = vmatpush.msra.mxu0 0.0
    %3823 = vmatpush.msra.mxu0 0.0
    %3824 = vmatpush.msra.mxu0 0.0
    %3825 = vmatpush.msra.mxu0 0.0
    %3826 = vmatpush.msra.mxu0 0.0
    %3827 = vmatpush.msra.mxu0 0.0
    %3828 = vmatpush.msra.mxu0 0.0
    %3829 = vmatpush.msra.mxu0 %v3793
    %3830 = vmatpush.msra.mxu0 %v3791
    %3831 = vmatpush.msra.mxu0 %v3789
    %3832 = vmatpush.msra.mxu0 %v3787
    %3833 = vmatmul.f32.gmra.mxu0 %v3795
    %v3834 = vpop.f32.mrf.mxu0
    %v3835 = vadd.f32 0.0, %v3834
    %3836 = vdwg.mxu0
    %v3837 = vadd.f32 %v3784, %v3815
    %v3838 = vadd.f32 %v3785, %v3835
    %v3839 = vld [vmem:[%s5 + $0x340] sm:$0xff]
    %v3840 = vld [vmem:[%s5 + $0x348] sm:$0xff]
    %v3841 = vld [vmem:[%s5 + $0x350] sm:$0xff]
    %v3842 = vld [vmem:[%s5 + $0x358] sm:$0xff]
    %v3843 = vld [vmem:[%s5 + $0x360] sm:$0xff]
    %v3844 = vld [vmem:[%s5 + $0x368] sm:$0xff]
    %v3845 = vld [vmem:[%s5 + $0x370] sm:$0xff]
    %v3846 = vld [vmem:[%s5 + $0x378] sm:$0xff]
    %v3847 = vrot.slane %v3152, 2
    %v3848 = vsel %vm3171, %v3847, 0
    %3850 = vmatpush.msra.mxu0 0.0
    %3851 = vmatpush.msra.mxu0 0.0
    %3852 = vmatpush.msra.mxu0 0.0
    %3853 = vmatpush.msra.mxu0 0.0
    %3854 = vmatpush.msra.mxu0 0.0
    %3855 = vmatpush.msra.mxu0 0.0
    %3856 = vmatpush.msra.mxu0 0.0
    %3857 = vmatpush.msra.mxu0 0.0
    %3858 = vmatpush.msra.mxu0 0.0
    %3859 = vmatpush.msra.mxu0 0.0
    %3860 = vmatpush.msra.mxu0 0.0
    %3861 = vmatpush.msra.mxu0 0.0
    %3862 = vmatpush.msra.mxu0 %v3845
    %3863 = vmatpush.msra.mxu0 %v3843
    %3864 = vmatpush.msra.mxu0 %v3841
    %3865 = vmatpush.msra.mxu0 %v3839
    %3866 = vmatmul.f32.gmra.mxu0 %v3848
    %v3867 = vpop.f32.mrf.mxu0
    %v3868 = vadd.f32 0.0, %v3867
    %3869 = vdwg.mxu0
    %3870 = vmatpush.msra.mxu0 0.0
    %3871 = vmatpush.msra.mxu0 0.0
    %3872 = vmatpush.msra.mxu0 0.0
    %3873 = vmatpush.msra.mxu0 0.0
    %3874 = vmatpush.msra.mxu0 0.0
    %3875 = vmatpush.msra.mxu0 0.0
    %3876 = vmatpush.msra.mxu0 0.0
    %3877 = vmatpush.msra.mxu0 0.0
    %3878 = vmatpush.msra.mxu0 0.0
    %3879 = vmatpush.msra.mxu0 0.0
    %3880 = vmatpush.msra.mxu0 0.0
    %3881 = vmatpush.msra.mxu0 0.0
    %3882 = vmatpush.msra.mxu0 %v3846
    %3883 = vmatpush.msra.mxu0 %v3844
    %3884 = vmatpush.msra.mxu0 %v3842
    %3885 = vmatpush.msra.mxu0 %v3840
    %3886 = vmatmul.f32.gmra.mxu0 %v3848
    %v3887 = vpop.f32.mrf.mxu0
    %v3888 = vadd.f32 0.0, %v3887
    %3889 = vdwg.mxu0
    %v3890 = vadd.f32 %v3837, %v3868
    %v3891 = vadd.f32 %v3838, %v3888
    %v3892 = vld [vmem:[%s5 + $0x380] sm:$0xff]
    %v3893 = vld [vmem:[%s5 + $0x388] sm:$0xff]
    %v3894 = vld [vmem:[%s5 + $0x390] sm:$0xff]
    %v3895 = vld [vmem:[%s5 + $0x398] sm:$0xff]
    %v3896 = vld [vmem:[%s5 + $0x3a0] sm:$0xff]
    %v3897 = vld [vmem:[%s5 + $0x3a8] sm:$0xff]
    %v3898 = vld [vmem:[%s5 + $0x3b0] sm:$0xff]
    %v3899 = vld [vmem:[%s5 + $0x3b8] sm:$0xff]
    %v3900 = vrot.slane %v3152, 4
    %v3901 = vsel %vm3171, %v3900, 0
    %3903 = vmatpush.msra.mxu0 0.0
    %3904 = vmatpush.msra.mxu0 0.0
    %3905 = vmatpush.msra.mxu0 0.0
    %3906 = vmatpush.msra.mxu0 0.0
    %3907 = vmatpush.msra.mxu0 0.0
    %3908 = vmatpush.msra.mxu0 0.0
    %3909 = vmatpush.msra.mxu0 0.0
    %3910 = vmatpush.msra.mxu0 0.0
    %3911 = vmatpush.msra.mxu0 0.0
    %3912 = vmatpush.msra.mxu0 0.0
    %3913 = vmatpush.msra.mxu0 0.0
    %3914 = vmatpush.msra.mxu0 0.0
    %3915 = vmatpush.msra.mxu0 %v3898
    %3916 = vmatpush.msra.mxu0 %v3896
    %3917 = vmatpush.msra.mxu0 %v3894
    %3918 = vmatpush.msra.mxu0 %v3892
    %3919 = vmatmul.f32.gmra.mxu0 %v3901
    %v3920 = vpop.f32.mrf.mxu0
    %v3921 = vadd.f32 0.0, %v3920
    %3922 = vdwg.mxu0
    %3923 = vmatpush.msra.mxu0 0.0
    %3924 = vmatpush.msra.mxu0 0.0
    %3925 = vmatpush.msra.mxu0 0.0
    %3926 = vmatpush.msra.mxu0 0.0
    %3927 = vmatpush.msra.mxu0 0.0
    %3928 = vmatpush.msra.mxu0 0.0
    %3929 = vmatpush.msra.mxu0 0.0
    %3930 = vmatpush.msra.mxu0 0.0
    %3931 = vmatpush.msra.mxu0 0.0
    %3932 = vmatpush.msra.mxu0 0.0
    %3933 = vmatpush.msra.mxu0 0.0
    %3934 = vmatpush.msra.mxu0 0.0
    %3935 = vmatpush.msra.mxu0 %v3899
    %3936 = vmatpush.msra.mxu0 %v3897
    %3937 = vmatpush.msra.mxu0 %v3895
    %3938 = vmatpush.msra.mxu0 %v3893
    %3939 = vmatmul.f32.gmra.mxu0 %v3901
    %v3940 = vpop.f32.mrf.mxu0
    %v3941 = vadd.f32 0.0, %v3940
    %3942 = vdwg.mxu0
    %v3943 = vadd.f32 %v3890, %v3921
    %v3944 = vadd.f32 %v3891, %v3941
    %v3945 = vld [vmem:[%s5 + $0x3c0] sm:$0xff]
    %v3946 = vld [vmem:[%s5 + $0x3c8] sm:$0xff]
    %v3947 = vld [vmem:[%s5 + $0x3d0] sm:$0xff]
    %v3948 = vld [vmem:[%s5 + $0x3d8] sm:$0xff]
    %v3949 = vld [vmem:[%s5 + $0x3e0] sm:$0xff]
    %v3950 = vld [vmem:[%s5 + $0x3e8] sm:$0xff]
    %v3951 = vld [vmem:[%s5 + $0x3f0] sm:$0xff]
    %v3952 = vld [vmem:[%s5 + $0x3f8] sm:$0xff]
    %v3953 = vrot.slane %v3152, 6
    %v3954 = vsel %vm3171, %v3953, 0
    %3956 = vmatpush.msra.mxu0 0.0
    %3957 = vmatpush.msra.mxu0 0.0
    %3958 = vmatpush.msra.mxu0 0.0
    %3959 = vmatpush.msra.mxu0 0.0
    %3960 = vmatpush.msra.mxu0 0.0
    %3961 = vmatpush.msra.mxu0 0.0
    %3962 = vmatpush.msra.mxu0 0.0
    %3963 = vmatpush.msra.mxu0 0.0
    %3964 = vmatpush.msra.mxu0 0.0
    %3965 = vmatpush.msra.mxu0 0.0
    %3966 = vmatpush.msra.mxu0 0.0
    %3967 = vmatpush.msra.mxu0 0.0
    %3968 = vmatpush.msra.mxu0 %v3951
    %3969 = vmatpush.msra.mxu0 %v3949
    %3970 = vmatpush.msra.mxu0 %v3947
    %3971 = vmatpush.msra.mxu0 %v3945
    %3972 = vmatmul.f32.gmra.mxu0 %v3954
    %v3973 = vpop.f32.mrf.mxu0
    %v3974 = vadd.f32 0.0, %v3973
    %3975 = vdwg.mxu0
    %3976 = vmatpush.msra.mxu0 0.0
    %3977 = vmatpush.msra.mxu0 0.0
    %3978 = vmatpush.msra.mxu0 0.0
    %3979 = vmatpush.msra.mxu0 0.0
    %3980 = vmatpush.msra.mxu0 0.0
    %3981 = vmatpush.msra.mxu0 0.0
    %3982 = vmatpush.msra.mxu0 0.0
    %3983 = vmatpush.msra.mxu0 0.0
    %3984 = vmatpush.msra.mxu0 0.0
    %3985 = vmatpush.msra.mxu0 0.0
    %3986 = vmatpush.msra.mxu0 0.0
    %3987 = vmatpush.msra.mxu0 0.0
    %3988 = vmatpush.msra.mxu0 %v3952
    %3989 = vmatpush.msra.mxu0 %v3950
    %3990 = vmatpush.msra.mxu0 %v3948
    %3991 = vmatpush.msra.mxu0 %v3946
    %3992 = vmatmul.f32.gmra.mxu0 %v3954
    %v3993 = vpop.f32.mrf.mxu0
    %v3994 = vadd.f32 0.0, %v3993
    %3995 = vdwg.mxu0
    %v3996 = vadd.f32 %v3943, %v3974
    %v3997 = vadd.f32 %v3944, %v3994
    %v3998 = vld [vmem:[%s6] sm:$0x3]
    %v4000 = vperm.slane %v3998, 0
    %v4001 = vperm.slane %v3998, 1
    %v4004 = vadd.f32 %v3996, %v4000
    %v4005 = vadd.f32 %v3997, %v4001
    %v4006 = vmax.f32 %v4004, 0.0
    %v4007 = vmax.f32 %v4005, 0.0
    %v4008 = vld [vmem:[%s7] sm:$0xff]
    %v4009 = vld [vmem:[%s7 + $0x8] sm:$0xff]
    %v4010 = vld [vmem:[%s7 + $0x10] sm:$0xff]
    %v4011 = vld [vmem:[%s7 + $0x18] sm:$0xff]
    %v4012 = vld [vmem:[%s7 + $0x20] sm:$0xff]
    %v4013 = vld [vmem:[%s7 + $0x28] sm:$0xff]
    %v4014 = vld [vmem:[%s7 + $0x30] sm:$0xff]
    %v4015 = vld [vmem:[%s7 + $0x38] sm:$0xff]
    %v4016 = vld [vmem:[%s7 + $0x40] sm:$0xff]
    %v4017 = vld [vmem:[%s7 + $0x48] sm:$0xff]
    %v4018 = vld [vmem:[%s7 + $0x50] sm:$0xff]
    %v4019 = vld [vmem:[%s7 + $0x58] sm:$0xff]
    %v4020 = vld [vmem:[%s7 + $0x60] sm:$0xff]
    %v4021 = vld [vmem:[%s7 + $0x68] sm:$0xff]
    %v4022 = vld [vmem:[%s7 + $0x70] sm:$0xff]
    %v4023 = vld [vmem:[%s7 + $0x78] sm:$0xff]
    %v4024 = vld [vmem:[%s7 + $0x80] sm:$0xff]
    %v4025 = vld [vmem:[%s7 + $0x88] sm:$0xff]
    %v4026 = vld [vmem:[%s7 + $0x90] sm:$0xff]
    %v4027 = vld [vmem:[%s7 + $0x98] sm:$0xff]
    %v4028 = vld [vmem:[%s7 + $0xa0] sm:$0xff]
    %v4029 = vld [vmem:[%s7 + $0xa8] sm:$0xff]
    %v4030 = vld [vmem:[%s7 + $0xb0] sm:$0xff]
    %v4031 = vld [vmem:[%s7 + $0xb8] sm:$0xff]
    %v4032 = vld [vmem:[%s7 + $0xc0] sm:$0xff]
    %v4033 = vld [vmem:[%s7 + $0xc8] sm:$0xff]
    %v4034 = vld [vmem:[%s7 + $0xd0] sm:$0xff]
    %v4035 = vld [vmem:[%s7 + $0xd8] sm:$0xff]
    %v4036 = vld [vmem:[%s7 + $0xe0] sm:$0xff]
    %v4037 = vld [vmem:[%s7 + $0xe8] sm:$0xff]
    %v4038 = vld [vmem:[%s7 + $0xf0] sm:$0xff]
    %v4039 = vld [vmem:[%s7 + $0xf8] sm:$0xff]
    %v4040 = vld [vmem:[%s8] sm:$0x1]
    %v4042 = vperm.slane %v4040, 0
    %4044 = vmatpush.msra.mxu0 %v4023
    %4045 = vmatpush.msra.mxu0 %v4022
    %4046 = vmatpush.msra.mxu0 %v4021
    %4047 = vmatpush.msra.mxu0 %v4020
    %4048 = vmatpush.msra.mxu0 %v4019
    %4049 = vmatpush.msra.mxu0 %v4018
    %4050 = vmatpush.msra.mxu0 %v4017
    %4051 = vmatpush.msra.mxu0 %v4016
    %4052 = vmatpush.msra.mxu0 %v4015
    %4053 = vmatpush.msra.mxu0 %v4014
    %4054 = vmatpush.msra.mxu0 %v4013
    %4055 = vmatpush.msra.mxu0 %v4012
    %4056 = vmatpush.msra.mxu0 %v4011
    %4057 = vmatpush.msra.mxu0 %v4010
    %4058 = vmatpush.msra.mxu0 %v4009
    %4059 = vmatpush.msra.mxu0 %v4008
    %4060 = vmatmul.f32.gmra.mxu0 %v4006
    %v4061 = vpop.f32.mrf.mxu0
    %v4062 = vadd.f32 %v4042, %v4061
    %4063 = vdwg.mxu0
    %4064 = vmatpush.msra.mxu0 %v4039
    %4065 = vmatpush.msra.mxu0 %v4038
    %4066 = vmatpush.msra.mxu0 %v4037
    %4067 = vmatpush.msra.mxu0 %v4036
    %4068 = vmatpush.msra.mxu0 %v4035
    %4069 = vmatpush.msra.mxu0 %v4034
    %4070 = vmatpush.msra.mxu0 %v4033
    %4071 = vmatpush.msra.mxu0 %v4032
    %4072 = vmatpush.msra.mxu0 %v4031
    %4073 = vmatpush.msra.mxu0 %v4030
    %4074 = vmatpush.msra.mxu0 %v4029
    %4075 = vmatpush.msra.mxu0 %v4028
    %4076 = vmatpush.msra.mxu0 %v4027
    %4077 = vmatpush.msra.mxu0 %v4026
    %4078 = vmatpush.msra.mxu0 %v4025
    %4079 = vmatpush.msra.mxu0 %v4024
    %4080 = vmatmul.f32.gmra.mxu0 %v4007
    %v4081 = vpop.f32.mrf.mxu0
    %v4082 = vadd.f32 %v4062, %v4081
    %4083 = vdwg.mxu0
    %4084 = vst [vmem:[#allocation2] sm:$0x3] %v4082
    // Predicated region
    $region38: #{net_forward.1} parent=1 // pred_check
      _
    $region39: #{net_forward.1} parent=1 // pred_check_branch
      %4086 = sbr.rel (0) target = $region41
    $region40: #{net_forward.1} parent=1 // pred_region
      %4088 = vsyncadd [#allocation3], 0
      %s4090 = sshll.u32 [#allocation2], 4
      %s4091 = int_to_ptr.vmem [resolvable:$true] %s4090
      %s4092 = sshll.u32 %s9, 4
      %s4093 = int_to_ptr.hbm [resolvable:$true] %s4092
      %4095 = dma.vmem_to_hbm [thread:$0]  %s4091, 32, %s4093, [#allocation3]
    $region41: #{net_forward.1} parent=1 // pred_fallthru
      _
    // Predicated region
    $region42: #{net_forward.1} parent=1 // pred_check
      _
    $region43: #{net_forward.1} parent=1 // pred_check_branch
      %4097 = sbr.rel (0) target = $region45
    $region44: #{net_forward.1} parent=1 // pred_region
      %4099 = dma.done [#allocation3], 32
    $region45: #{net_forward.1} parent=1 // pred_fallthru
      _
    %4100 = vsyncpa [#allocation3], 1

</llo_original>
